<compile_context>
chip_gen: v7x
topology: tpu7x:2x2x1
jax: 0.10.0
libtpu: 0.0.40
codegen_flags: <defaults>
</compile_context>

<pallas_src>
import functools

import jax
import jax.numpy as jnp
from jax import lax
from jax.experimental import pallas as pl
from jax.experimental.pallas import tpu as pltpu


def _round_up(x, m):
    return (x + m - 1) // m * m


# ---------------------------------------------------------------------------
# Fused kernel: full GRU stack (all layers, both directions, all timesteps).
# All arrays are 2D, t-major / b-minor rows: row = t * B_pad + b.
# ---------------------------------------------------------------------------
def _text_gru_kernel(mask_ref, xp0_ref, wih_ref, whh_ref, bih_ref, bhh_ref,
                     out_ref, hsum_ref, q_ref, gi_ref, ostep_ref, *,
                     layers, hidden, seq_len, batch_rows, in0_width):
    T = seq_len
    H = hidden
    B = batch_rows
    H2, H4 = 2 * H, 4 * H

    h_sum = jnp.zeros((B, H), jnp.float32)

    for l in range(layers):                      # static unroll over layers
        # ---- Phase A: input-to-hidden gates for ALL timesteps (one big matmul) ----
        if l == 0:
            xin = xp0_ref[...]                   # (T*B, IP0) paired [x(t) | x(T-1-t)]
            kw = in0_width
        else:
            # Paired input from the previous layer's step-ordered outputs:
            # q[t] = [ostep[t] | ostep[T-1-t]]  (row permutation is folded into W_ih).
            def build_q(s, carry):
                row = pl.multiple_of(s * B, 8)
                rrow = pl.multiple_of((T - 1 - s) * B, 8)
                a = ostep_ref[pl.ds(row, B), :]      # [o_f(s)     | o_r(T-1-s)]
                b = ostep_ref[pl.ds(rrow, B), :]     # [o_f(T-1-s) | o_r(s)    ]
                q_ref[pl.ds(row, B), :] = jnp.concatenate([a, b], axis=-1)
                return carry
            lax.fori_loop(0, T, build_q, 0)
            xin = q_ref[...]                     # (T*B, 4H)
            kw = H4

        wih_l = wih_ref[l, :kw, :]               # static slice: only live contraction rows
        gi_ref[...] = (jnp.dot(xin, wih_l, preferred_element_type=jnp.float32)
                       + bih_ref[l])             # (T*B, 6H), gate-major fused layout

        # ---- Phase B: fused bidirectional recurrence (only h @ W_hh on the chain) ----
        def step(s, h):                          # h: (B, 2H) = [h_fwd | h_rev]
            row = pl.multiple_of(s * B, 8)
            gi_s = gi_ref[pl.ds(row, B), :]      # (B, 6H)
            m = mask_ref[pl.ds(row, B), :] != 0.0    # (B, 2H) bool, pre-broadcast mask
            gh = (jnp.dot(h, whh_ref[l], preferred_element_type=jnp.float32)
                  + bhh_ref[l])                  # (B, 6H)
            rz = jax.nn.sigmoid(gi_s[:, :H4] + gh[:, :H4])   # one EUP pass (r,z both dirs)
            r = rz[:, :H2]
            z = rz[:, H2:]
            n = jnp.tanh(gi_s[:, H4:] + r * gh[:, H4:])
            hc = (1.0 - z) * n + z * h
            h_new = jnp.where(m, hc, h)          # freeze finished sequences
            ostep_ref[pl.ds(row, B), :] = jnp.where(m, h_new, 0.0)  # zero padded outputs
            return h_new

        h_fin = lax.fori_loop(0, T, step, jnp.zeros((B, H2), jnp.float32),
                              unroll=min(T, 8))
        h_sum = h_sum + h_fin[:, :H] + h_fin[:, H:]      # hidden.sum(dim=0)

        # ---- Last layer: one lane-dense store of the whole output ----
        if l == layers - 1:
            pieces = []
            for t in range(T):
                a = ostep_ref[t * B:(t + 1) * B, :]          # [o_f(t)     | o_r(T-1-t)]
                b = ostep_ref[(T - 1 - t) * B:(T - t) * B, :]  # [o_f(T-1-t) | o_r(t)]
                pieces.append(a[:, :H])                      # fwd output at time t
                pieces.append(b[:, H:])                      # rev output at time t
            out_ref[...] = jnp.concatenate(pieces, axis=-1)  # (B, T*2H), 512 lanes

    hsum_ref[...] = h_sum


# ---------------------------------------------------------------------------
# TextEncoder.forward
# ---------------------------------------------------------------------------
def text_encoder_forward(params, tokens, input_lengths):
    """tokens: (B, T) int32; input_lengths: (B,) int32, sorted descending, max == T.
    Returns (outputs (B, T, 2H), hidden_sum (B, H))."""
    B, T = tokens.shape
    H = params['hidden']
    L = params['layers']
    assert params['bidirectional']
    E = params['embedding'].shape[1]
    IP0 = _round_up(2 * E, 8)
    B_pad = _round_up(B, 8)

    # Frozen embedding lookup (glue gather, not the hot path).
    emb = jnp.take(params['embedding'], tokens, axis=0).astype(jnp.float32)   # (B, T, E)
    x_tm = jnp.transpose(emb, (1, 0, 2))                                      # (T, B, E)
    x_tm = jnp.pad(x_tm, ((0, 0), (0, B_pad - B), (0, 0)))                    # (T, B_pad, E)
    # Paired layer-0 input: [x(t) | x(T-1-t)] so fwd/rev gi come from one matmul.
    xp0 = jnp.concatenate([x_tm, x_tm[::-1]], axis=-1)                        # (T, B_pad, 2E)
    if IP0 > 2 * E:
        xp0 = jnp.pad(xp0, ((0, 0), (0, 0), (0, IP0 - 2 * E)))
    xp0 = xp0.reshape(T * B_pad, IP0)

    lengths = jnp.pad(input_lengths.astype(jnp.int32), (0, B_pad - B))
    m_t = (jnp.arange(T, dtype=jnp.int32)[:, None] < lengths[None, :]).astype(jnp.float32)
    m_f = jnp.broadcast_to(m_t[:, :, None], (T, B_pad, H))          # fwd lanes: mask(t)
    m_r = jnp.broadcast_to(m_t[::-1, :, None], (T, B_pad, H))       # rev lanes: mask(T-1-t)
    mask = jnp.concatenate([m_f, m_r], axis=-1).reshape(T * B_pad, 2 * H)

    kernel = functools.partial(_text_gru_kernel, layers=L, hidden=H, seq_len=T,
                               batch_rows=B_pad, in0_width=IP0)

    out2d, hsum = pl.pallas_call(
        kernel,
        out_shape=(jax.ShapeDtypeStruct((B_pad, T * 2 * H), jnp.float32),
                   jax.ShapeDtypeStruct((B_pad, H), jnp.float32)),
        grid=(1,),
        in_specs=[
            pl.BlockSpec((T * B_pad, 2 * H), lambda i: (0, 0)),              # fused mask
            pl.BlockSpec((T * B_pad, IP0), lambda i: (0, 0)),                # paired x
            pl.BlockSpec(params['wih_all'].shape, lambda i: (0, 0, 0)),      # fused W_ih
            pl.BlockSpec(params['whh_all'].shape, lambda i: (0, 0, 0)),      # block-diag W_hh
            pl.BlockSpec(params['bih_all'].shape, lambda i: (0, 0, 0)),      # fused b_ih
            pl.BlockSpec(params['bhh_all'].shape, lambda i: (0, 0, 0)),      # fused b_hh
        ],
        out_specs=(pl.BlockSpec((B_pad, T * 2 * H), lambda i: (0, 0)),
                   pl.BlockSpec((B_pad, H), lambda i: (0, 0))),
        scratch_shapes=[
            pltpu.VMEM((T * B_pad, 4 * H), jnp.float32),   # paired input q (layers >= 1)
            pltpu.VMEM((T * B_pad, 6 * H), jnp.float32),   # gi for all timesteps
            pltpu.VMEM((T * B_pad, 2 * H), jnp.float32),   # step-ordered per-layer outputs
        ],
        compiler_params=pltpu.CompilerParams(
            dimension_semantics=("arbitrary",),
            vmem_limit_bytes=32 * 1024 * 1024),
    )(mask, xp0, params['wih_all'], params['whh_all'],
      params['bih_all'], params['bhh_all'])

    outputs = out2d[:B].reshape(B, T, 2 * H)    # per t: [fwd_H | rev_H] (PyTorch order)
    hidden_sum = hsum[:B]
    return outputs, hidden_sum


# ---------------------------------------------------------------------------
# Parameter construction (synthetic, no checkpoint loading).
# Kernel-side weights are pre-fused at init time:
#   fused column layout (6H): [r_f, r_r, z_f, z_r, n_f, n_r]
#   W_hh: (2H, 6H) block-diagonal over directions
#   W_ih: rows arranged for the paired input [x(t) | x(T-1-t)] (layer 0)
#         or [o_f(t), o_r(T-1-t), o_f(T-1-t), o_r(t)] (layers >= 1).
# ---------------------------------------------------------------------------
def _place_dir(w, d, H):
    """Map (rows, 3H) [r|z|n] to (rows, 6H) gate-major fused cols for direction d."""
    wr, wz, wn = w[:, :H], w[:, H:2 * H], w[:, 2 * H:]
    zero = jnp.zeros_like(wr)
    cols = [wr, zero, wz, zero, wn, zero] if d == 0 else [zero, wr, zero, wz, zero, wn]
    return jnp.concatenate(cols, axis=-1)


def init_params(key, vocab, emb_dim, hidden, layers, bidirectional):
    assert bidirectional
    H, E = hidden, emb_dim
    IP0 = _round_up(2 * E, 8)
    R_max = max(IP0, 4 * H)
    keys = jax.random.split(key, 1 + layers * 2 * 4)
    scale = 1.0 / float(H) ** 0.5

    raw = []
    wih_l, whh_l, bih_l, bhh_l = [], [], [], []
    k = 1
    for l in range(layers):
        in_size = E if l == 0 else 2 * H
        per_dir = []
        for d in range(2):
            wih = scale * jax.random.normal(keys[k], (in_size, 3 * H), jnp.float32); k += 1
            whh = scale * jax.random.normal(keys[k], (H, 3 * H), jnp.float32); k += 1
            bih = scale * jax.random.normal(keys[k], (1, 3 * H), jnp.float32); k += 1
            bhh = scale * jax.random.normal(keys[k], (1, 3 * H), jnp.float32); k += 1
            per_dir.append((wih, whh, bih, bhh))
        raw.append(per_dir)
        (wf, hf, bif, bhf), (wr, hr, bir, bhr) = per_dir

        whh_fused = jnp.concatenate([_place_dir(hf, 0, H), _place_dir(hr, 1, H)], axis=0)
        bih_fused = _place_dir(bif, 0, H) + _place_dir(bir, 1, H)
        bhh_fused = _place_dir(bhf, 0, H) + _place_dir(bhr, 1, H)
        if l == 0:
            wih_fused = jnp.concatenate([_place_dir(wf, 0, H),        # rows x(t)
                                         _place_dir(wr, 1, H)], axis=0)  # rows x(T-1-t)
        else:
            wih_fused = jnp.concatenate([
                _place_dir(wf[:H], 0, H),     # rows multiply o_f(t)
                _place_dir(wr[H:], 1, H),     # rows multiply o_r(T-1-t)
                _place_dir(wr[:H], 1, H),     # rows multiply o_f(T-1-t)
                _place_dir(wf[H:], 0, H),     # rows multiply o_r(t)
            ], axis=0)
        wih_fused = jnp.pad(wih_fused, ((0, R_max - wih_fused.shape[0]), (0, 0)))

        wih_l.append(wih_fused); whh_l.append(whh_fused)
        bih_l.append(bih_fused); bhh_l.append(bhh_fused)

    return {
        'embedding': 0.1 * jax.random.normal(keys[0], (vocab, E), jnp.float32),
        'hidden': H, 'layers': layers, 'bidirectional': True,
        'wih_all': jnp.stack(wih_l),   # (L, R_max, 6H)
        'whh_all': jnp.stack(whh_l),   # (L, 2H, 6H)
        'bih_all': jnp.stack(bih_l),   # (L, 1, 6H)
        'bhh_all': jnp.stack(bhh_l),   # (L, 1, 6H)
        'raw': raw,                    # unfused per-(layer, direction) weights (reference)
    }


# ---------------------------------------------------------------------------
# Pure-JAX reference (same packed-sequence GRU semantics) for a parity check.
# ---------------------------------------------------------------------------
def _reference_forward(params, tokens, input_lengths):
    H, L = params['hidden'], params['layers']
    emb = jnp.take(params['embedding'], tokens, axis=0).astype(jnp.float32)   # (B, T, E)
    B, T, _ = emb.shape
    mask = (jnp.arange(T)[None, :] < input_lengths[:, None]).astype(jnp.float32)
    hp = jax.lax.Precision.HIGHEST
    x = emb
    finals = []
    for l in range(L):
        outs = []
        for d in range(2):
            wih, whh, bih, bhh = params['raw'][l][d]
            xs = x if d == 0 else x[:, ::-1]
            ms = mask if d == 0 else mask[:, ::-1]
            xs_t = jnp.swapaxes(xs, 0, 1)
            ms_t = jnp.swapaxes(ms, 0, 1)[:, :, None]

            def cell(h, inp, wih=wih, whh=whh, bih=bih, bhh=bhh):
                x_t, m_t = inp
                gi = jnp.dot(x_t, wih, precision=hp) + bih
                gh = jnp.dot(h, whh, precision=hp) + bhh
                r = jax.nn.sigmoid(gi[:, :H] + gh[:, :H])
                z = jax.nn.sigmoid(gi[:, H:2 * H] + gh[:, H:2 * H])
                n = jnp.tanh(gi[:, 2 * H:] + r * gh[:, 2 * H:])
                hc = (1.0 - z) * n + z * h
                h_new = m_t * hc + (1.0 - m_t) * h
                return h_new, m_t * h_new

            hT, os_t = lax.scan(cell, jnp.zeros((B, H), jnp.float32), (xs_t, ms_t))
            os = jnp.swapaxes(os_t, 0, 1)
            if d == 1:
                os = os[:, ::-1]
            outs.append(os)
            finals.append(hT)
        x = jnp.concatenate(outs, axis=-1)
    return x, sum(finals)


if __name__ == "__main__":
    # config: layers=2, hidden=32, bidirectional=True, embedding dim=16, vocab=50
    VOCAB, EMB, HIDDEN, LAYERS, BIDIR = 50, 16, 32, 2, True
    B, T = 4, 8

    root = jax.random.PRNGKey(0)
    k_params, k_tok = jax.random.split(root)
    params = init_params(k_params, VOCAB, EMB, HIDDEN, LAYERS, BIDIR)

    tokens = jax.random.randint(k_tok, (B, T), 0, VOCAB, dtype=jnp.int32)
    # enforce_sorted=True semantics: lengths sorted descending, max length == T
    input_lengths = jnp.array([8, 7, 5, 3], dtype=jnp.int32)

    outputs, hidden_sum = text_encoder_forward(params, tokens, input_lengths)
    outputs = jax.block_until_ready(outputs)
    hidden_sum = jax.block_until_ready(hidden_sum)

    assert outputs.shape == (B, T, 2 * HIDDEN), outputs.shape
    assert hidden_sum.shape == (B, HIDDEN), hidden_sum.shape
    assert bool(jnp.all(jnp.isfinite(outputs))) and bool(jnp.all(jnp.isfinite(hidden_sum)))

    # Padded output positions must be exactly zero (pad_packed_sequence semantics).
    t_idx = jnp.arange(T)[None, :, None]
    pad_mask = t_idx >= input_lengths[:, None, None]
    assert bool(jnp.all(jnp.where(pad_mask, outputs, 0.0) == 0.0))

    # Numerical parity with the pure-JAX reference of the same GRU.
    ref_out, ref_hs = _reference_forward(params, tokens, input_lengths)
    assert bool(jnp.allclose(outputs, ref_out, atol=2e-2, rtol=2e-2)), \
        float(jnp.max(jnp.abs(outputs - ref_out)))
    assert bool(jnp.allclose(hidden_sum, ref_hs, atol=2e-2, rtol=2e-2)), \
        float(jnp.max(jnp.abs(hidden_sum - ref_hs)))

    print("KERNEL_OK")
</pallas_src>

<mosaic_0001>
module attributes {stable_mosaic.version = 11 : i64} {
  func.func @_text_gru_kernel(%arg0: i32, %arg1: memref<64x64xf32, #tpu.memory_space<vmem>>, %arg2: memref<64x32xf32, #tpu.memory_space<vmem>>, %arg3: memref<2x128x192xf32, #tpu.memory_space<vmem>>, %arg4: memref<2x64x192xf32, #tpu.memory_space<vmem>>, %arg5: memref<2x1x192xf32, #tpu.memory_space<vmem>>, %arg6: memref<2x1x192xf32, #tpu.memory_space<vmem>>, %arg7: memref<8x512xf32, #tpu.memory_space<vmem>>, %arg8: memref<8x32xf32, #tpu.memory_space<vmem>>, %arg9: memref<64x128xf32, #tpu.memory_space<vmem>>, %arg10: memref<64x192xf32, #tpu.memory_space<vmem>>, %arg11: memref<64x64xf32, #tpu.memory_space<vmem>>) attributes {dimension_semantics = [#tpu.dimension_semantics<arbitrary>], iteration_bounds = array<i64: 1>, scalar_prefetch = 0 : i64, scratch_operands = 3 : i64, tpu.core_type = #tpu.core_type<tc>, window_params = [{pipeline_mode = #tpu.pipeline_mode<synchronous>, transform_indices = @transform_0, window_bounds = array<i64: 64, 64>}, {pipeline_mode = #tpu.pipeline_mode<synchronous>, transform_indices = @transform_1, window_bounds = array<i64: 64, 32>}, {pipeline_mode = #tpu.pipeline_mode<synchronous>, transform_indices = @transform_2, window_bounds = array<i64: 2, 128, 192>}, {pipeline_mode = #tpu.pipeline_mode<synchronous>, transform_indices = @transform_3, window_bounds = array<i64: 2, 64, 192>}, {pipeline_mode = #tpu.pipeline_mode<synchronous>, transform_indices = @transform_4, window_bounds = array<i64: 2, 1, 192>}, {pipeline_mode = #tpu.pipeline_mode<synchronous>, transform_indices = @transform_5, window_bounds = array<i64: 2, 1, 192>}, {pipeline_mode = #tpu.pipeline_mode<synchronous>, transform_indices = @transform_6, window_bounds = array<i64: 8, 512>}, {pipeline_mode = #tpu.pipeline_mode<synchronous>, transform_indices = @transform_7, window_bounds = array<i64: 8, 32>}]} {
    %cst = arith.constant 0.000000e+00 : f32
    %0 = vector.broadcast %cst : f32 to vector<8x32xf32>
    %c0 = arith.constant 0 : index
    %c0_0 = arith.constant 0 : index
    %1 = vector.load %arg2[%c0, %c0_0] : memref<64x32xf32, #tpu.memory_space<vmem>>, vector<64x32xf32>
    %c0_1 = arith.constant 0 : index
    %c0_2 = arith.constant 0 : index
    %c0_3 = arith.constant 0 : index
    %2 = vector.load %arg3[%c0_1, %c0_2, %c0_3] : memref<2x128x192xf32, #tpu.memory_space<vmem>>, vector<1x32x192xf32>
    %3 = vector.shape_cast %2 : vector<1x32x192xf32> to vector<32x192xf32>
    %cst_4 = arith.constant dense<0.000000e+00> : vector<64x192xf32>
    %4 = tpu.matmul %1, %3, %cst_4 {dimension_numbers = #tpu.dot_dimension_numbers<[1], [0], [0], [1], [0, 0, 1, 1], [], []>} : vector<64x32xf32>, vector<32x192xf32>, vector<64x192xf32> -> vector<64x192xf32>
    %c0_5 = arith.constant 0 : index
    %c0_6 = arith.constant 0 : index
    %c0_7 = arith.constant 0 : index
    %5 = vector.load %arg5[%c0_5, %c0_6, %c0_7] : memref<2x1x192xf32, #tpu.memory_space<vmem>>, vector<1x1x192xf32>
    %6 = vector.shape_cast %5 : vector<1x1x192xf32> to vector<1x192xf32>
    %7 = vector.broadcast %6 : vector<1x192xf32> to vector<64x192xf32>
    %8 = arith.addf %4, %7 : vector<64x192xf32>
    %c0_8 = arith.constant 0 : index
    %c0_9 = arith.constant 0 : index
    %9 = vector.load %arg10[%c0_8, %c0_9] : memref<64x192xf32, #tpu.memory_space<vmem>>, vector<64x192xf32>
    tpu.vector_store %arg10[%c0_8, %c0_9], %8 {strides = array<i32>} : memref<64x192xf32, #tpu.memory_space<vmem>>, vector<64x192xf32>,
    %cst_10 = arith.constant 0.000000e+00 : f32
    %10 = vector.broadcast %cst_10 : f32 to vector<8x64xf32>
    %c0_i32 = arith.constant 0 : i32
    %c8_i32 = arith.constant 8 : i32
    %11 = arith.muli %c0_i32, %c8_i32 : i32
    %12 = tpu.assume_multiple %11, 8 : i32
    %13 = arith.index_cast %12 : i32 to index
    %c0_11 = arith.constant 0 : index
    %14 = vector.load %arg10[%13, %c0_11] : memref<64x192xf32, #tpu.memory_space<vmem>>, vector<8x192xf32>
    %15 = arith.index_cast %12 : i32 to index
    %c0_12 = arith.constant 0 : index
    %16 = vector.load %arg1[%15, %c0_12] : memref<64x64xf32, #tpu.memory_space<vmem>>, vector<8x64xf32>
    %cst_13 = arith.constant 0.000000e+00 : f32
    %17 = vector.broadcast %cst_13 : f32 to vector<8x64xf32>
    %18 = arith.cmpf one, %16, %17 : vector<8x64xf32>
    %c0_14 = arith.constant 0 : index
    %c0_15 = arith.constant 0 : index
    %c0_16 = arith.constant 0 : index
    %19 = vector.load %arg4[%c0_14, %c0_15, %c0_16] : memref<2x64x192xf32, #tpu.memory_space<vmem>>, vector<1x64x192xf32>
    %20 = vector.shape_cast %19 : vector<1x64x192xf32> to vector<64x192xf32>
    %cst_17 = arith.constant dense<0.000000e+00> : vector<8x192xf32>
    %21 = tpu.matmul %10, %20, %cst_17 {dimension_numbers = #tpu.dot_dimension_numbers<[1], [0], [0], [1], [0, 0, 1, 1], [], []>} : vector<8x64xf32>, vector<64x192xf32>, vector<8x192xf32> -> vector<8x192xf32>
    %c0_18 = arith.constant 0 : index
    %c0_19 = arith.constant 0 : index
    %c0_20 = arith.constant 0 : index
    %22 = vector.load %arg6[%c0_18, %c0_19, %c0_20] : memref<2x1x192xf32, #tpu.memory_space<vmem>>, vector<1x1x192xf32>
    %23 = vector.shape_cast %22 : vector<1x1x192xf32> to vector<1x192xf32>
    %24 = vector.broadcast %23 : vector<1x192xf32> to vector<8x192xf32>
    %25 = arith.addf %21, %24 : vector<8x192xf32>
    %26 = vector.extract_strided_slice %14 {offsets = [0, 0], sizes = [8, 128], strides = [1, 1]} : vector<8x192xf32> to vector<8x128xf32>
    %27 = vector.extract_strided_slice %25 {offsets = [0, 0], sizes = [8, 128], strides = [1, 1]} : vector<8x192xf32> to vector<8x128xf32>
    %28 = arith.addf %26, %27 : vector<8x128xf32>
    %29 = arith.negf %28 : vector<8x128xf32>
    %30 = math.exp %29 : vector<8x128xf32>
    %cst_21 = arith.constant 1.000000e+00 : f32
    %31 = vector.broadcast %cst_21 : f32 to vector<8x128xf32>
    %32 = arith.addf %31, %30 : vector<8x128xf32>
    %33 = arith.divf %31, %32 : vector<8x128xf32>
    %34 = vector.extract_strided_slice %33 {offsets = [0, 0], sizes = [8, 64], strides = [1, 1]} : vector<8x128xf32> to vector<8x64xf32>
    %35 = vector.extract_strided_slice %33 {offsets = [0, 64], sizes = [8, 64], strides = [1, 1]} : vector<8x128xf32> to vector<8x64xf32>
    %36 = vector.extract_strided_slice %14 {offsets = [0, 128], sizes = [8, 64], strides = [1, 1]} : vector<8x192xf32> to vector<8x64xf32>
    %37 = vector.extract_strided_slice %25 {offsets = [0, 128], sizes = [8, 64], strides = [1, 1]} : vector<8x192xf32> to vector<8x64xf32>
    %38 = arith.mulf %34, %37 : vector<8x64xf32>
    %39 = arith.addf %36, %38 : vector<8x64xf32>
    %40 = math.tanh %39 : vector<8x64xf32>
    %cst_22 = arith.constant 1.000000e+00 : f32
    %41 = vector.broadcast %cst_22 : f32 to vector<8x64xf32>
    %42 = arith.subf %41, %35 : vector<8x64xf32>
    %43 = arith.mulf %42, %40 : vector<8x64xf32>
    %44 = arith.mulf %35, %10 : vector<8x64xf32>
    %45 = arith.addf %43, %44 : vector<8x64xf32>
    %46 = arith.select %18, %45, %10 : vector<8x64xi1>, vector<8x64xf32>
    %cst_23 = arith.constant 0.000000e+00 : f32
    %47 = vector.broadcast %cst_23 : f32 to vector<8x64xf32>
    %48 = arith.select %18, %46, %47 : vector<8x64xi1>, vector<8x64xf32>
    %49 = arith.index_cast %12 : i32 to index
    %c0_24 = arith.constant 0 : index
    %50 = vector.load %arg11[%49, %c0_24] : memref<64x64xf32, #tpu.memory_space<vmem>>, vector<8x64xf32>
    tpu.vector_store %arg11[%49, %c0_24], %48 {strides = array<i32>} : memref<64x64xf32, #tpu.memory_space<vmem>>, vector<8x64xf32>,
    %c1_i32 = arith.constant 1 : i32
    %c8_i32_25 = arith.constant 8 : i32
    %51 = arith.muli %c1_i32, %c8_i32_25 : i32
    %52 = tpu.assume_multiple %51, 8 : i32
    %53 = arith.index_cast %52 : i32 to index
    %c0_26 = arith.constant 0 : index
    %54 = vector.load %arg10[%53, %c0_26] : memref<64x192xf32, #tpu.memory_space<vmem>>, vector<8x192xf32>
    %55 = arith.index_cast %52 : i32 to index
    %c0_27 = arith.constant 0 : index
    %56 = vector.load %arg1[%55, %c0_27] : memref<64x64xf32, #tpu.memory_space<vmem>>, vector<8x64xf32>
    %cst_28 = arith.constant 0.000000e+00 : f32
    %57 = vector.broadcast %cst_28 : f32 to vector<8x64xf32>
    %58 = arith.cmpf one, %56, %57 : vector<8x64xf32>
    %c0_29 = arith.constant 0 : index
    %c0_30 = arith.constant 0 : index
    %c0_31 = arith.constant 0 : index
    %59 = vector.load %arg4[%c0_29, %c0_30, %c0_31] : memref<2x64x192xf32, #tpu.memory_space<vmem>>, vector<1x64x192xf32>
    %60 = vector.shape_cast %59 : vector<1x64x192xf32> to vector<64x192xf32>
    %cst_32 = arith.constant dense<0.000000e+00> : vector<8x192xf32>
    %61 = tpu.matmul %46, %60, %cst_32 {dimension_numbers = #tpu.dot_dimension_numbers<[1], [0], [0], [1], [0, 0, 1, 1], [], []>} : vector<8x64xf32>, vector<64x192xf32>, vector<8x192xf32> -> vector<8x192xf32>
    %c0_33 = arith.constant 0 : index
    %c0_34 = arith.constant 0 : index
    %c0_35 = arith.constant 0 : index
    %62 = vector.load %arg6[%c0_33, %c0_34, %c0_35] : memref<2x1x192xf32, #tpu.memory_space<vmem>>, vector<1x1x192xf32>
    %63 = vector.shape_cast %62 : vector<1x1x192xf32> to vector<1x192xf32>
    %64 = vector.broadcast %63 : vector<1x192xf32> to vector<8x192xf32>
    %65 = arith.addf %61, %64 : vector<8x192xf32>
    %66 = vector.extract_strided_slice %54 {offsets = [0, 0], sizes = [8, 128], strides = [1, 1]} : vector<8x192xf32> to vector<8x128xf32>
    %67 = vector.extract_strided_slice %65 {offsets = [0, 0], sizes = [8, 128], strides = [1, 1]} : vector<8x192xf32> to vector<8x128xf32>
    %68 = arith.addf %66, %67 : vector<8x128xf32>
    %69 = arith.negf %68 : vector<8x128xf32>
    %70 = math.exp %69 : vector<8x128xf32>
    %cst_36 = arith.constant 1.000000e+00 : f32
    %71 = vector.broadcast %cst_36 : f32 to vector<8x128xf32>
    %72 = arith.addf %71, %70 : vector<8x128xf32>
    %73 = arith.divf %71, %72 : vector<8x128xf32>
    %74 = vector.extract_strided_slice %73 {offsets = [0, 0], sizes = [8, 64], strides = [1, 1]} : vector<8x128xf32> to vector<8x64xf32>
    %75 = vector.extract_strided_slice %73 {offsets = [0, 64], sizes = [8, 64], strides = [1, 1]} : vector<8x128xf32> to vector<8x64xf32>
    %76 = vector.extract_strided_slice %54 {offsets = [0, 128], sizes = [8, 64], strides = [1, 1]} : vector<8x192xf32> to vector<8x64xf32>
    %77 = vector.extract_strided_slice %65 {offsets = [0, 128], sizes = [8, 64], strides = [1, 1]} : vector<8x192xf32> to vector<8x64xf32>
    %78 = arith.mulf %74, %77 : vector<8x64xf32>
    %79 = arith.addf %76, %78 : vector<8x64xf32>
    %80 = math.tanh %79 : vector<8x64xf32>
    %cst_37 = arith.constant 1.000000e+00 : f32
    %81 = vector.broadcast %cst_37 : f32 to vector<8x64xf32>
    %82 = arith.subf %81, %75 : vector<8x64xf32>
    %83 = arith.mulf %82, %80 : vector<8x64xf32>
    %84 = arith.mulf %75, %46 : vector<8x64xf32>
    %85 = arith.addf %83, %84 : vector<8x64xf32>
    %86 = arith.select %58, %85, %46 : vector<8x64xi1>, vector<8x64xf32>
    %cst_38 = arith.constant 0.000000e+00 : f32
    %87 = vector.broadcast %cst_38 : f32 to vector<8x64xf32>
    %88 = arith.select %58, %86, %87 : vector<8x64xi1>, vector<8x64xf32>
    %89 = arith.index_cast %52 : i32 to index
    %c0_39 = arith.constant 0 : index
    %90 = vector.load %arg11[%89, %c0_39] : memref<64x64xf32, #tpu.memory_space<vmem>>, vector<8x64xf32>
    tpu.vector_store %arg11[%89, %c0_39], %88 {strides = array<i32>} : memref<64x64xf32, #tpu.memory_space<vmem>>, vector<8x64xf32>,
    %c2_i32 = arith.constant 2 : i32
    %c8_i32_40 = arith.constant 8 : i32
    %91 = arith.muli %c2_i32, %c8_i32_40 : i32
    %92 = tpu.assume_multiple %91, 8 : i32
    %93 = arith.index_cast %92 : i32 to index
    %c0_41 = arith.constant 0 : index
    %94 = vector.load %arg10[%93, %c0_41] : memref<64x192xf32, #tpu.memory_space<vmem>>, vector<8x192xf32>
    %95 = arith.index_cast %92 : i32 to index
    %c0_42 = arith.constant 0 : index
    %96 = vector.load %arg1[%95, %c0_42] : memref<64x64xf32, #tpu.memory_space<vmem>>, vector<8x64xf32>
    %cst_43 = arith.constant 0.000000e+00 : f32
    %97 = vector.broadcast %cst_43 : f32 to vector<8x64xf32>
    %98 = arith.cmpf one, %96, %97 : vector<8x64xf32>
    %c0_44 = arith.constant 0 : index
    %c0_45 = arith.constant 0 : index
    %c0_46 = arith.constant 0 : index
    %99 = vector.load %arg4[%c0_44, %c0_45, %c0_46] : memref<2x64x192xf32, #tpu.memory_space<vmem>>, vector<1x64x192xf32>
    %100 = vector.shape_cast %99 : vector<1x64x192xf32> to vector<64x192xf32>
    %cst_47 = arith.constant dense<0.000000e+00> : vector<8x192xf32>
    %101 = tpu.matmul %86, %100, %cst_47 {dimension_numbers = #tpu.dot_dimension_numbers<[1], [0], [0], [1], [0, 0, 1, 1], [], []>} : vector<8x64xf32>, vector<64x192xf32>, vector<8x192xf32> -> vector<8x192xf32>
    %c0_48 = arith.constant 0 : index
    %c0_49 = arith.constant 0 : index
    %c0_50 = arith.constant 0 : index
    %102 = vector.load %arg6[%c0_48, %c0_49, %c0_50] : memref<2x1x192xf32, #tpu.memory_space<vmem>>, vector<1x1x192xf32>
    %103 = vector.shape_cast %102 : vector<1x1x192xf32> to vector<1x192xf32>
    %104 = vector.broadcast %103 : vector<1x192xf32> to vector<8x192xf32>
    %105 = arith.addf %101, %104 : vector<8x192xf32>
    %106 = vector.extract_strided_slice %94 {offsets = [0, 0], sizes = [8, 128], strides = [1, 1]} : vector<8x192xf32> to vector<8x128xf32>
    %107 = vector.extract_strided_slice %105 {offsets = [0, 0], sizes = [8, 128], strides = [1, 1]} : vector<8x192xf32> to vector<8x128xf32>
    %108 = arith.addf %106, %107 : vector<8x128xf32>
    %109 = arith.negf %108 : vector<8x128xf32>
    %110 = math.exp %109 : vector<8x128xf32>
    %cst_51 = arith.constant 1.000000e+00 : f32
    %111 = vector.broadcast %cst_51 : f32 to vector<8x128xf32>
    %112 = arith.addf %111, %110 : vector<8x128xf32>
    %113 = arith.divf %111, %112 : vector<8x128xf32>
    %114 = vector.extract_strided_slice %113 {offsets = [0, 0], sizes = [8, 64], strides = [1, 1]} : vector<8x128xf32> to vector<8x64xf32>
    %115 = vector.extract_strided_slice %113 {offsets = [0, 64], sizes = [8, 64], strides = [1, 1]} : vector<8x128xf32> to vector<8x64xf32>
    %116 = vector.extract_strided_slice %94 {offsets = [0, 128], sizes = [8, 64], strides = [1, 1]} : vector<8x192xf32> to vector<8x64xf32>
    %117 = vector.extract_strided_slice %105 {offsets = [0, 128], sizes = [8, 64], strides = [1, 1]} : vector<8x192xf32> to vector<8x64xf32>
    %118 = arith.mulf %114, %117 : vector<8x64xf32>
    %119 = arith.addf %116, %118 : vector<8x64xf32>
    %120 = math.tanh %119 : vector<8x64xf32>
    %cst_52 = arith.constant 1.000000e+00 : f32
    %121 = vector.broadcast %cst_52 : f32 to vector<8x64xf32>
    %122 = arith.subf %121, %115 : vector<8x64xf32>
    %123 = arith.mulf %122, %120 : vector<8x64xf32>
    %124 = arith.mulf %115, %86 : vector<8x64xf32>
    %125 = arith.addf %123, %124 : vector<8x64xf32>
    %126 = arith.select %98, %125, %86 : vector<8x64xi1>, vector<8x64xf32>
    %cst_53 = arith.constant 0.000000e+00 : f32
    %127 = vector.broadcast %cst_53 : f32 to vector<8x64xf32>
    %128 = arith.select %98, %126, %127 : vector<8x64xi1>, vector<8x64xf32>
    %129 = arith.index_cast %92 : i32 to index
    %c0_54 = arith.constant 0 : index
    %130 = vector.load %arg11[%129, %c0_54] : memref<64x64xf32, #tpu.memory_space<vmem>>, vector<8x64xf32>
    tpu.vector_store %arg11[%129, %c0_54], %128 {strides = array<i32>} : memref<64x64xf32, #tpu.memory_space<vmem>>, vector<8x64xf32>,
    %c3_i32 = arith.constant 3 : i32
    %c8_i32_55 = arith.constant 8 : i32
    %131 = arith.muli %c3_i32, %c8_i32_55 : i32
    %132 = tpu.assume_multiple %131, 8 : i32
    %133 = arith.index_cast %132 : i32 to index
    %c0_56 = arith.constant 0 : index
    %134 = vector.load %arg10[%133, %c0_56] : memref<64x192xf32, #tpu.memory_space<vmem>>, vector<8x192xf32>
    %135 = arith.index_cast %132 : i32 to index
    %c0_57 = arith.constant 0 : index
    %136 = vector.load %arg1[%135, %c0_57] : memref<64x64xf32, #tpu.memory_space<vmem>>, vector<8x64xf32>
    %cst_58 = arith.constant 0.000000e+00 : f32
    %137 = vector.broadcast %cst_58 : f32 to vector<8x64xf32>
    %138 = arith.cmpf one, %136, %137 : vector<8x64xf32>
    %c0_59 = arith.constant 0 : index
    %c0_60 = arith.constant 0 : index
    %c0_61 = arith.constant 0 : index
    %139 = vector.load %arg4[%c0_59, %c0_60, %c0_61] : memref<2x64x192xf32, #tpu.memory_space<vmem>>, vector<1x64x192xf32>
    %140 = vector.shape_cast %139 : vector<1x64x192xf32> to vector<64x192xf32>
    %cst_62 = arith.constant dense<0.000000e+00> : vector<8x192xf32>
    %141 = tpu.matmul %126, %140, %cst_62 {dimension_numbers = #tpu.dot_dimension_numbers<[1], [0], [0], [1], [0, 0, 1, 1], [], []>} : vector<8x64xf32>, vector<64x192xf32>, vector<8x192xf32> -> vector<8x192xf32>
    %c0_63 = arith.constant 0 : index
    %c0_64 = arith.constant 0 : index
    %c0_65 = arith.constant 0 : index
    %142 = vector.load %arg6[%c0_63, %c0_64, %c0_65] : memref<2x1x192xf32, #tpu.memory_space<vmem>>, vector<1x1x192xf32>
    %143 = vector.shape_cast %142 : vector<1x1x192xf32> to vector<1x192xf32>
    %144 = vector.broadcast %143 : vector<1x192xf32> to vector<8x192xf32>
    %145 = arith.addf %141, %144 : vector<8x192xf32>
    %146 = vector.extract_strided_slice %134 {offsets = [0, 0], sizes = [8, 128], strides = [1, 1]} : vector<8x192xf32> to vector<8x128xf32>
    %147 = vector.extract_strided_slice %145 {offsets = [0, 0], sizes = [8, 128], strides = [1, 1]} : vector<8x192xf32> to vector<8x128xf32>
    %148 = arith.addf %146, %147 : vector<8x128xf32>
    %149 = arith.negf %148 : vector<8x128xf32>
    %150 = math.exp %149 : vector<8x128xf32>
    %cst_66 = arith.constant 1.000000e+00 : f32
    %151 = vector.broadcast %cst_66 : f32 to vector<8x128xf32>
    %152 = arith.addf %151, %150 : vector<8x128xf32>
    %153 = arith.divf %151, %152 : vector<8x128xf32>
    %154 = vector.extract_strided_slice %153 {offsets = [0, 0], sizes = [8, 64], strides = [1, 1]} : vector<8x128xf32> to vector<8x64xf32>
    %155 = vector.extract_strided_slice %153 {offsets = [0, 64], sizes = [8, 64], strides = [1, 1]} : vector<8x128xf32> to vector<8x64xf32>
    %156 = vector.extract_strided_slice %134 {offsets = [0, 128], sizes = [8, 64], strides = [1, 1]} : vector<8x192xf32> to vector<8x64xf32>
    %157 = vector.extract_strided_slice %145 {offsets = [0, 128], sizes = [8, 64], strides = [1, 1]} : vector<8x192xf32> to vector<8x64xf32>
    %158 = arith.mulf %154, %157 : vector<8x64xf32>
    %159 = arith.addf %156, %158 : vector<8x64xf32>
    %160 = math.tanh %159 : vector<8x64xf32>
    %cst_67 = arith.constant 1.000000e+00 : f32
    %161 = vector.broadcast %cst_67 : f32 to vector<8x64xf32>
    %162 = arith.subf %161, %155 : vector<8x64xf32>
    %163 = arith.mulf %162, %160 : vector<8x64xf32>
    %164 = arith.mulf %155, %126 : vector<8x64xf32>
    %165 = arith.addf %163, %164 : vector<8x64xf32>
    %166 = arith.select %138, %165, %126 : vector<8x64xi1>, vector<8x64xf32>
    %cst_68 = arith.constant 0.000000e+00 : f32
    %167 = vector.broadcast %cst_68 : f32 to vector<8x64xf32>
    %168 = arith.select %138, %166, %167 : vector<8x64xi1>, vector<8x64xf32>
    %169 = arith.index_cast %132 : i32 to index
    %c0_69 = arith.constant 0 : index
    %170 = vector.load %arg11[%169, %c0_69] : memref<64x64xf32, #tpu.memory_space<vmem>>, vector<8x64xf32>
    tpu.vector_store %arg11[%169, %c0_69], %168 {strides = array<i32>} : memref<64x64xf32, #tpu.memory_space<vmem>>, vector<8x64xf32>,
    %c4_i32 = arith.constant 4 : i32
    %c8_i32_70 = arith.constant 8 : i32
    %171 = arith.muli %c4_i32, %c8_i32_70 : i32
    %172 = tpu.assume_multiple %171, 8 : i32
    %173 = arith.index_cast %172 : i32 to index
    %c0_71 = arith.constant 0 : index
    %174 = vector.load %arg10[%173, %c0_71] : memref<64x192xf32, #tpu.memory_space<vmem>>, vector<8x192xf32>
    %175 = arith.index_cast %172 : i32 to index
    %c0_72 = arith.constant 0 : index
    %176 = vector.load %arg1[%175, %c0_72] : memref<64x64xf32, #tpu.memory_space<vmem>>, vector<8x64xf32>
    %cst_73 = arith.constant 0.000000e+00 : f32
    %177 = vector.broadcast %cst_73 : f32 to vector<8x64xf32>
    %178 = arith.cmpf one, %176, %177 : vector<8x64xf32>
    %c0_74 = arith.constant 0 : index
    %c0_75 = arith.constant 0 : index
    %c0_76 = arith.constant 0 : index
    %179 = vector.load %arg4[%c0_74, %c0_75, %c0_76] : memref<2x64x192xf32, #tpu.memory_space<vmem>>, vector<1x64x192xf32>
    %180 = vector.shape_cast %179 : vector<1x64x192xf32> to vector<64x192xf32>
    %cst_77 = arith.constant dense<0.000000e+00> : vector<8x192xf32>
    %181 = tpu.matmul %166, %180, %cst_77 {dimension_numbers = #tpu.dot_dimension_numbers<[1], [0], [0], [1], [0, 0, 1, 1], [], []>} : vector<8x64xf32>, vector<64x192xf32>, vector<8x192xf32> -> vector<8x192xf32>
    %c0_78 = arith.constant 0 : index
    %c0_79 = arith.constant 0 : index
    %c0_80 = arith.constant 0 : index
    %182 = vector.load %arg6[%c0_78, %c0_79, %c0_80] : memref<2x1x192xf32, #tpu.memory_space<vmem>>, vector<1x1x192xf32>
    %183 = vector.shape_cast %182 : vector<1x1x192xf32> to vector<1x192xf32>
    %184 = vector.broadcast %183 : vector<1x192xf32> to vector<8x192xf32>
    %185 = arith.addf %181, %184 : vector<8x192xf32>
    %186 = vector.extract_strided_slice %174 {offsets = [0, 0], sizes = [8, 128], strides = [1, 1]} : vector<8x192xf32> to vector<8x128xf32>
    %187 = vector.extract_strided_slice %185 {offsets = [0, 0], sizes = [8, 128], strides = [1, 1]} : vector<8x192xf32> to vector<8x128xf32>
    %188 = arith.addf %186, %187 : vector<8x128xf32>
    %189 = arith.negf %188 : vector<8x128xf32>
    %190 = math.exp %189 : vector<8x128xf32>
    %cst_81 = arith.constant 1.000000e+00 : f32
    %191 = vector.broadcast %cst_81 : f32 to vector<8x128xf32>
    %192 = arith.addf %191, %190 : vector<8x128xf32>
    %193 = arith.divf %191, %192 : vector<8x128xf32>
    %194 = vector.extract_strided_slice %193 {offsets = [0, 0], sizes = [8, 64], strides = [1, 1]} : vector<8x128xf32> to vector<8x64xf32>
    %195 = vector.extract_strided_slice %193 {offsets = [0, 64], sizes = [8, 64], strides = [1, 1]} : vector<8x128xf32> to vector<8x64xf32>
    %196 = vector.extract_strided_slice %174 {offsets = [0, 128], sizes = [8, 64], strides = [1, 1]} : vector<8x192xf32> to vector<8x64xf32>
    %197 = vector.extract_strided_slice %185 {offsets = [0, 128], sizes = [8, 64], strides = [1, 1]} : vector<8x192xf32> to vector<8x64xf32>
    %198 = arith.mulf %194, %197 : vector<8x64xf32>
    %199 = arith.addf %196, %198 : vector<8x64xf32>
    %200 = math.tanh %199 : vector<8x64xf32>
    %cst_82 = arith.constant 1.000000e+00 : f32
    %201 = vector.broadcast %cst_82 : f32 to vector<8x64xf32>
    %202 = arith.subf %201, %195 : vector<8x64xf32>
    %203 = arith.mulf %202, %200 : vector<8x64xf32>
    %204 = arith.mulf %195, %166 : vector<8x64xf32>
    %205 = arith.addf %203, %204 : vector<8x64xf32>
    %206 = arith.select %178, %205, %166 : vector<8x64xi1>, vector<8x64xf32>
    %cst_83 = arith.constant 0.000000e+00 : f32
    %207 = vector.broadcast %cst_83 : f32 to vector<8x64xf32>
    %208 = arith.select %178, %206, %207 : vector<8x64xi1>, vector<8x64xf32>
    %209 = arith.index_cast %172 : i32 to index
    %c0_84 = arith.constant 0 : index
    %210 = vector.load %arg11[%209, %c0_84] : memref<64x64xf32, #tpu.memory_space<vmem>>, vector<8x64xf32>
    tpu.vector_store %arg11[%209, %c0_84], %208 {strides = array<i32>} : memref<64x64xf32, #tpu.memory_space<vmem>>, vector<8x64xf32>,
    %c5_i32 = arith.constant 5 : i32
    %c8_i32_85 = arith.constant 8 : i32
    %211 = arith.muli %c5_i32, %c8_i32_85 : i32
    %212 = tpu.assume_multiple %211, 8 : i32
    %213 = arith.index_cast %212 : i32 to index
    %c0_86 = arith.constant 0 : index
    %214 = vector.load %arg10[%213, %c0_86] : memref<64x192xf32, #tpu.memory_space<vmem>>, vector<8x192xf32>
    %215 = arith.index_cast %212 : i32 to index
    %c0_87 = arith.constant 0 : index
    %216 = vector.load %arg1[%215, %c0_87] : memref<64x64xf32, #tpu.memory_space<vmem>>, vector<8x64xf32>
    %cst_88 = arith.constant 0.000000e+00 : f32
    %217 = vector.broadcast %cst_88 : f32 to vector<8x64xf32>
    %218 = arith.cmpf one, %216, %217 : vector<8x64xf32>
    %c0_89 = arith.constant 0 : index
    %c0_90 = arith.constant 0 : index
    %c0_91 = arith.constant 0 : index
    %219 = vector.load %arg4[%c0_89, %c0_90, %c0_91] : memref<2x64x192xf32, #tpu.memory_space<vmem>>, vector<1x64x192xf32>
    %220 = vector.shape_cast %219 : vector<1x64x192xf32> to vector<64x192xf32>
    %cst_92 = arith.constant dense<0.000000e+00> : vector<8x192xf32>
    %221 = tpu.matmul %206, %220, %cst_92 {dimension_numbers = #tpu.dot_dimension_numbers<[1], [0], [0], [1], [0, 0, 1, 1], [], []>} : vector<8x64xf32>, vector<64x192xf32>, vector<8x192xf32> -> vector<8x192xf32>
    %c0_93 = arith.constant 0 : index
    %c0_94 = arith.constant 0 : index
    %c0_95 = arith.constant 0 : index
    %222 = vector.load %arg6[%c0_93, %c0_94, %c0_95] : memref<2x1x192xf32, #tpu.memory_space<vmem>>, vector<1x1x192xf32>
    %223 = vector.shape_cast %222 : vector<1x1x192xf32> to vector<1x192xf32>
    %224 = vector.broadcast %223 : vector<1x192xf32> to vector<8x192xf32>
    %225 = arith.addf %221, %224 : vector<8x192xf32>
    %226 = vector.extract_strided_slice %214 {offsets = [0, 0], sizes = [8, 128], strides = [1, 1]} : vector<8x192xf32> to vector<8x128xf32>
    %227 = vector.extract_strided_slice %225 {offsets = [0, 0], sizes = [8, 128], strides = [1, 1]} : vector<8x192xf32> to vector<8x128xf32>
    %228 = arith.addf %226, %227 : vector<8x128xf32>
    %229 = arith.negf %228 : vector<8x128xf32>
    %230 = math.exp %229 : vector<8x128xf32>
    %cst_96 = arith.constant 1.000000e+00 : f32
    %231 = vector.broadcast %cst_96 : f32 to vector<8x128xf32>
    %232 = arith.addf %231, %230 : vector<8x128xf32>
    %233 = arith.divf %231, %232 : vector<8x128xf32>
    %234 = vector.extract_strided_slice %233 {offsets = [0, 0], sizes = [8, 64], strides = [1, 1]} : vector<8x128xf32> to vector<8x64xf32>
    %235 = vector.extract_strided_slice %233 {offsets = [0, 64], sizes = [8, 64], strides = [1, 1]} : vector<8x128xf32> to vector<8x64xf32>
    %236 = vector.extract_strided_slice %214 {offsets = [0, 128], sizes = [8, 64], strides = [1, 1]} : vector<8x192xf32> to vector<8x64xf32>
    %237 = vector.extract_strided_slice %225 {offsets = [0, 128], sizes = [8, 64], strides = [1, 1]} : vector<8x192xf32> to vector<8x64xf32>
    %238 = arith.mulf %234, %237 : vector<8x64xf32>
    %239 = arith.addf %236, %238 : vector<8x64xf32>
    %240 = math.tanh %239 : vector<8x64xf32>
    %cst_97 = arith.constant 1.000000e+00 : f32
    %241 = vector.broadcast %cst_97 : f32 to vector<8x64xf32>
    %242 = arith.subf %241, %235 : vector<8x64xf32>
    %243 = arith.mulf %242, %240 : vector<8x64xf32>
    %244 = arith.mulf %235, %206 : vector<8x64xf32>
    %245 = arith.addf %243, %244 : vector<8x64xf32>
    %246 = arith.select %218, %245, %206 : vector<8x64xi1>, vector<8x64xf32>
    %cst_98 = arith.constant 0.000000e+00 : f32
    %247 = vector.broadcast %cst_98 : f32 to vector<8x64xf32>
    %248 = arith.select %218, %246, %247 : vector<8x64xi1>, vector<8x64xf32>
    %249 = arith.index_cast %212 : i32 to index
    %c0_99 = arith.constant 0 : index
    %250 = vector.load %arg11[%249, %c0_99] : memref<64x64xf32, #tpu.memory_space<vmem>>, vector<8x64xf32>
    tpu.vector_store %arg11[%249, %c0_99], %248 {strides = array<i32>} : memref<64x64xf32, #tpu.memory_space<vmem>>, vector<8x64xf32>,
    %c6_i32 = arith.constant 6 : i32
    %c8_i32_100 = arith.constant 8 : i32
    %251 = arith.muli %c6_i32, %c8_i32_100 : i32
    %252 = tpu.assume_multiple %251, 8 : i32
    %253 = arith.index_cast %252 : i32 to index
    %c0_101 = arith.constant 0 : index
    %254 = vector.load %arg10[%253, %c0_101] : memref<64x192xf32, #tpu.memory_space<vmem>>, vector<8x192xf32>
    %255 = arith.index_cast %252 : i32 to index
    %c0_102 = arith.constant 0 : index
    %256 = vector.load %arg1[%255, %c0_102] : memref<64x64xf32, #tpu.memory_space<vmem>>, vector<8x64xf32>
    %cst_103 = arith.constant 0.000000e+00 : f32
    %257 = vector.broadcast %cst_103 : f32 to vector<8x64xf32>
    %258 = arith.cmpf one, %256, %257 : vector<8x64xf32>
    %c0_104 = arith.constant 0 : index
    %c0_105 = arith.constant 0 : index
    %c0_106 = arith.constant 0 : index
    %259 = vector.load %arg4[%c0_104, %c0_105, %c0_106] : memref<2x64x192xf32, #tpu.memory_space<vmem>>, vector<1x64x192xf32>
    %260 = vector.shape_cast %259 : vector<1x64x192xf32> to vector<64x192xf32>
    %cst_107 = arith.constant dense<0.000000e+00> : vector<8x192xf32>
    %261 = tpu.matmul %246, %260, %cst_107 {dimension_numbers = #tpu.dot_dimension_numbers<[1], [0], [0], [1], [0, 0, 1, 1], [], []>} : vector<8x64xf32>, vector<64x192xf32>, vector<8x192xf32> -> vector<8x192xf32>
    %c0_108 = arith.constant 0 : index
    %c0_109 = arith.constant 0 : index
    %c0_110 = arith.constant 0 : index
    %262 = vector.load %arg6[%c0_108, %c0_109, %c0_110] : memref<2x1x192xf32, #tpu.memory_space<vmem>>, vector<1x1x192xf32>
    %263 = vector.shape_cast %262 : vector<1x1x192xf32> to vector<1x192xf32>
    %264 = vector.broadcast %263 : vector<1x192xf32> to vector<8x192xf32>
    %265 = arith.addf %261, %264 : vector<8x192xf32>
    %266 = vector.extract_strided_slice %254 {offsets = [0, 0], sizes = [8, 128], strides = [1, 1]} : vector<8x192xf32> to vector<8x128xf32>
    %267 = vector.extract_strided_slice %265 {offsets = [0, 0], sizes = [8, 128], strides = [1, 1]} : vector<8x192xf32> to vector<8x128xf32>
    %268 = arith.addf %266, %267 : vector<8x128xf32>
    %269 = arith.negf %268 : vector<8x128xf32>
    %270 = math.exp %269 : vector<8x128xf32>
    %cst_111 = arith.constant 1.000000e+00 : f32
    %271 = vector.broadcast %cst_111 : f32 to vector<8x128xf32>
    %272 = arith.addf %271, %270 : vector<8x128xf32>
    %273 = arith.divf %271, %272 : vector<8x128xf32>
    %274 = vector.extract_strided_slice %273 {offsets = [0, 0], sizes = [8, 64], strides = [1, 1]} : vector<8x128xf32> to vector<8x64xf32>
    %275 = vector.extract_strided_slice %273 {offsets = [0, 64], sizes = [8, 64], strides = [1, 1]} : vector<8x128xf32> to vector<8x64xf32>
    %276 = vector.extract_strided_slice %254 {offsets = [0, 128], sizes = [8, 64], strides = [1, 1]} : vector<8x192xf32> to vector<8x64xf32>
    %277 = vector.extract_strided_slice %265 {offsets = [0, 128], sizes = [8, 64], strides = [1, 1]} : vector<8x192xf32> to vector<8x64xf32>
    %278 = arith.mulf %274, %277 : vector<8x64xf32>
    %279 = arith.addf %276, %278 : vector<8x64xf32>
    %280 = math.tanh %279 : vector<8x64xf32>
    %cst_112 = arith.constant 1.000000e+00 : f32
    %281 = vector.broadcast %cst_112 : f32 to vector<8x64xf32>
    %282 = arith.subf %281, %275 : vector<8x64xf32>
    %283 = arith.mulf %282, %280 : vector<8x64xf32>
    %284 = arith.mulf %275, %246 : vector<8x64xf32>
    %285 = arith.addf %283, %284 : vector<8x64xf32>
    %286 = arith.select %258, %285, %246 : vector<8x64xi1>, vector<8x64xf32>
    %cst_113 = arith.constant 0.000000e+00 : f32
    %287 = vector.broadcast %cst_113 : f32 to vector<8x64xf32>
    %288 = arith.select %258, %286, %287 : vector<8x64xi1>, vector<8x64xf32>
    %289 = arith.index_cast %252 : i32 to index
    %c0_114 = arith.constant 0 : index
    %290 = vector.load %arg11[%289, %c0_114] : memref<64x64xf32, #tpu.memory_space<vmem>>, vector<8x64xf32>
    tpu.vector_store %arg11[%289, %c0_114], %288 {strides = array<i32>} : memref<64x64xf32, #tpu.memory_space<vmem>>, vector<8x64xf32>,
    %c7_i32 = arith.constant 7 : i32
    %c8_i32_115 = arith.constant 8 : i32
    %291 = arith.muli %c7_i32, %c8_i32_115 : i32
    %292 = tpu.assume_multiple %291, 8 : i32
    %293 = arith.index_cast %292 : i32 to index
    %c0_116 = arith.constant 0 : index
    %294 = vector.load %arg10[%293, %c0_116] : memref<64x192xf32, #tpu.memory_space<vmem>>, vector<8x192xf32>
    %295 = arith.index_cast %292 : i32 to index
    %c0_117 = arith.constant 0 : index
    %296 = vector.load %arg1[%295, %c0_117] : memref<64x64xf32, #tpu.memory_space<vmem>>, vector<8x64xf32>
    %cst_118 = arith.constant 0.000000e+00 : f32
    %297 = vector.broadcast %cst_118 : f32 to vector<8x64xf32>
    %298 = arith.cmpf one, %296, %297 : vector<8x64xf32>
    %c0_119 = arith.constant 0 : index
    %c0_120 = arith.constant 0 : index
    %c0_121 = arith.constant 0 : index
    %299 = vector.load %arg4[%c0_119, %c0_120, %c0_121] : memref<2x64x192xf32, #tpu.memory_space<vmem>>, vector<1x64x192xf32>
    %300 = vector.shape_cast %299 : vector<1x64x192xf32> to vector<64x192xf32>
    %cst_122 = arith.constant dense<0.000000e+00> : vector<8x192xf32>
    %301 = tpu.matmul %286, %300, %cst_122 {dimension_numbers = #tpu.dot_dimension_numbers<[1], [0], [0], [1], [0, 0, 1, 1], [], []>} : vector<8x64xf32>, vector<64x192xf32>, vector<8x192xf32> -> vector<8x192xf32>
    %c0_123 = arith.constant 0 : index
    %c0_124 = arith.constant 0 : index
    %c0_125 = arith.constant 0 : index
    %302 = vector.load %arg6[%c0_123, %c0_124, %c0_125] : memref<2x1x192xf32, #tpu.memory_space<vmem>>, vector<1x1x192xf32>
    %303 = vector.shape_cast %302 : vector<1x1x192xf32> to vector<1x192xf32>
    %304 = vector.broadcast %303 : vector<1x192xf32> to vector<8x192xf32>
    %305 = arith.addf %301, %304 : vector<8x192xf32>
    %306 = vector.extract_strided_slice %294 {offsets = [0, 0], sizes = [8, 128], strides = [1, 1]} : vector<8x192xf32> to vector<8x128xf32>
    %307 = vector.extract_strided_slice %305 {offsets = [0, 0], sizes = [8, 128], strides = [1, 1]} : vector<8x192xf32> to vector<8x128xf32>
    %308 = arith.addf %306, %307 : vector<8x128xf32>
    %309 = arith.negf %308 : vector<8x128xf32>
    %310 = math.exp %309 : vector<8x128xf32>
    %cst_126 = arith.constant 1.000000e+00 : f32
    %311 = vector.broadcast %cst_126 : f32 to vector<8x128xf32>
    %312 = arith.addf %311, %310 : vector<8x128xf32>
    %313 = arith.divf %311, %312 : vector<8x128xf32>
    %314 = vector.extract_strided_slice %313 {offsets = [0, 0], sizes = [8, 64], strides = [1, 1]} : vector<8x128xf32> to vector<8x64xf32>
    %315 = vector.extract_strided_slice %313 {offsets = [0, 64], sizes = [8, 64], strides = [1, 1]} : vector<8x128xf32> to vector<8x64xf32>
    %316 = vector.extract_strided_slice %294 {offsets = [0, 128], sizes = [8, 64], strides = [1, 1]} : vector<8x192xf32> to vector<8x64xf32>
    %317 = vector.extract_strided_slice %305 {offsets = [0, 128], sizes = [8, 64], strides = [1, 1]} : vector<8x192xf32> to vector<8x64xf32>
    %318 = arith.mulf %314, %317 : vector<8x64xf32>
    %319 = arith.addf %316, %318 : vector<8x64xf32>
    %320 = math.tanh %319 : vector<8x64xf32>
    %cst_127 = arith.constant 1.000000e+00 : f32
    %321 = vector.broadcast %cst_127 : f32 to vector<8x64xf32>
    %322 = arith.subf %321, %315 : vector<8x64xf32>
    %323 = arith.mulf %322, %320 : vector<8x64xf32>
    %324 = arith.mulf %315, %286 : vector<8x64xf32>
    %325 = arith.addf %323, %324 : vector<8x64xf32>
    %326 = arith.select %298, %325, %286 : vector<8x64xi1>, vector<8x64xf32>
    %cst_128 = arith.constant 0.000000e+00 : f32
    %327 = vector.broadcast %cst_128 : f32 to vector<8x64xf32>
    %328 = arith.select %298, %326, %327 : vector<8x64xi1>, vector<8x64xf32>
    %329 = arith.index_cast %292 : i32 to index
    %c0_129 = arith.constant 0 : index
    %330 = vector.load %arg11[%329, %c0_129] : memref<64x64xf32, #tpu.memory_space<vmem>>, vector<8x64xf32>
    tpu.vector_store %arg11[%329, %c0_129], %328 {strides = array<i32>} : memref<64x64xf32, #tpu.memory_space<vmem>>, vector<8x64xf32>,
    %c8_i32_130 = arith.constant 8 : i32
    %331 = vector.extract_strided_slice %326 {offsets = [0, 0], sizes = [8, 32], strides = [1, 1]} : vector<8x64xf32> to vector<8x32xf32>
    %332 = arith.addf %0, %331 : vector<8x32xf32>
    %333 = vector.extract_strided_slice %326 {offsets = [0, 32], sizes = [8, 32], strides = [1, 1]} : vector<8x64xf32> to vector<8x32xf32>
    %334 = arith.addf %332, %333 : vector<8x32xf32>
    %c0_i32_131 = arith.constant 0 : i32
    %c8_i32_132 = arith.constant 8 : i32
    %335 = arith.addi %c0_i32_131, %c8_i32_132 : i32
    %c1_i32_133 = arith.constant 1 : i32
    scf.for %arg12 = %c0_i32_131 to %335 step %c1_i32_133  : i32 {
      %c8_i32_304 = arith.constant 8 : i32
      %705 = arith.muli %arg12, %c8_i32_304 : i32
      %706 = tpu.assume_multiple %705, 8 : i32
      %c7_i32_305 = arith.constant 7 : i32
      %707 = arith.subi %c7_i32_305, %arg12 : i32
      %c8_i32_306 = arith.constant 8 : i32
      %708 = arith.muli %707, %c8_i32_306 : i32
      %709 = tpu.assume_multiple %708, 8 : i32
      %710 = arith.index_cast %706 : i32 to index
      %c0_307 = arith.constant 0 : index
      %711 = vector.load %arg11[%710, %c0_307] : memref<64x64xf32, #tpu.memory_space<vmem>>, vector<8x64xf32>
      %712 = arith.index_cast %709 : i32 to index
      %c0_308 = arith.constant 0 : index
      %713 = vector.load %arg11[%712, %c0_308] : memref<64x64xf32, #tpu.memory_space<vmem>>, vector<8x64xf32>
      %714 = tpu.concatenate %711, %713 in 1 : vector<8x64xf32>, vector<8x64xf32> -> vector<8x128xf32>
      %715 = arith.index_cast %706 : i32 to index
      %c0_309 = arith.constant 0 : index
      %716 = vector.load %arg9[%715, %c0_309] : memref<64x128xf32, #tpu.memory_space<vmem>>, vector<8x128xf32>
      tpu.vector_store %arg9[%715, %c0_309], %714 {strides = array<i32>} : memref<64x128xf32, #tpu.memory_space<vmem>>, vector<8x128xf32>,
    }
    %c8_i32_134 = arith.constant 8 : i32
    %c0_135 = arith.constant 0 : index
    %c0_136 = arith.constant 0 : index
    %336 = vector.load %arg9[%c0_135, %c0_136] : memref<64x128xf32, #tpu.memory_space<vmem>>, vector<64x128xf32>
    %c1 = arith.constant 1 : index
    %c0_137 = arith.constant 0 : index
    %c0_138 = arith.constant 0 : index
    %337 = vector.load %arg3[%c1, %c0_137, %c0_138] : memref<2x128x192xf32, #tpu.memory_space<vmem>>, vector<1x128x192xf32>
    %338 = vector.shape_cast %337 : vector<1x128x192xf32> to vector<128x192xf32>
    %cst_139 = arith.constant dense<0.000000e+00> : vector<64x192xf32>
    %339 = tpu.matmul %336, %338, %cst_139 {dimension_numbers = #tpu.dot_dimension_numbers<[1], [0], [0], [1], [0, 0, 1, 1], [], []>} : vector<64x128xf32>, vector<128x192xf32>, vector<64x192xf32> -> vector<64x192xf32>
    %c1_140 = arith.constant 1 : index
    %c0_141 = arith.constant 0 : index
    %c0_142 = arith.constant 0 : index
    %340 = vector.load %arg5[%c1_140, %c0_141, %c0_142] : memref<2x1x192xf32, #tpu.memory_space<vmem>>, vector<1x1x192xf32>
    %341 = vector.shape_cast %340 : vector<1x1x192xf32> to vector<1x192xf32>
    %342 = vector.broadcast %341 : vector<1x192xf32> to vector<64x192xf32>
    %343 = arith.addf %339, %342 : vector<64x192xf32>
    %c0_143 = arith.constant 0 : index
    %c0_144 = arith.constant 0 : index
    %344 = vector.load %arg10[%c0_143, %c0_144] : memref<64x192xf32, #tpu.memory_space<vmem>>, vector<64x192xf32>
    tpu.vector_store %arg10[%c0_143, %c0_144], %343 {strides = array<i32>} : memref<64x192xf32, #tpu.memory_space<vmem>>, vector<64x192xf32>,
    %cst_145 = arith.constant 0.000000e+00 : f32
    %345 = vector.broadcast %cst_145 : f32 to vector<8x64xf32>
    %c0_i32_146 = arith.constant 0 : i32
    %c8_i32_147 = arith.constant 8 : i32
    %346 = arith.muli %c0_i32_146, %c8_i32_147 : i32
    %347 = tpu.assume_multiple %346, 8 : i32
    %348 = arith.index_cast %347 : i32 to index
    %c0_148 = arith.constant 0 : index
    %349 = vector.load %arg10[%348, %c0_148] : memref<64x192xf32, #tpu.memory_space<vmem>>, vector<8x192xf32>
    %350 = arith.index_cast %347 : i32 to index
    %c0_149 = arith.constant 0 : index
    %351 = vector.load %arg1[%350, %c0_149] : memref<64x64xf32, #tpu.memory_space<vmem>>, vector<8x64xf32>
    %cst_150 = arith.constant 0.000000e+00 : f32
    %352 = vector.broadcast %cst_150 : f32 to vector<8x64xf32>
    %353 = arith.cmpf one, %351, %352 : vector<8x64xf32>
    %c1_151 = arith.constant 1 : index
    %c0_152 = arith.constant 0 : index
    %c0_153 = arith.constant 0 : index
    %354 = vector.load %arg4[%c1_151, %c0_152, %c0_153] : memref<2x64x192xf32, #tpu.memory_space<vmem>>, vector<1x64x192xf32>
    %355 = vector.shape_cast %354 : vector<1x64x192xf32> to vector<64x192xf32>
    %cst_154 = arith.constant dense<0.000000e+00> : vector<8x192xf32>
    %356 = tpu.matmul %345, %355, %cst_154 {dimension_numbers = #tpu.dot_dimension_numbers<[1], [0], [0], [1], [0, 0, 1, 1], [], []>} : vector<8x64xf32>, vector<64x192xf32>, vector<8x192xf32> -> vector<8x192xf32>
    %c1_155 = arith.constant 1 : index
    %c0_156 = arith.constant 0 : index
    %c0_157 = arith.constant 0 : index
    %357 = vector.load %arg6[%c1_155, %c0_156, %c0_157] : memref<2x1x192xf32, #tpu.memory_space<vmem>>, vector<1x1x192xf32>
    %358 = vector.shape_cast %357 : vector<1x1x192xf32> to vector<1x192xf32>
    %359 = vector.broadcast %358 : vector<1x192xf32> to vector<8x192xf32>
    %360 = arith.addf %356, %359 : vector<8x192xf32>
    %361 = vector.extract_strided_slice %349 {offsets = [0, 0], sizes = [8, 128], strides = [1, 1]} : vector<8x192xf32> to vector<8x128xf32>
    %362 = vector.extract_strided_slice %360 {offsets = [0, 0], sizes = [8, 128], strides = [1, 1]} : vector<8x192xf32> to vector<8x128xf32>
    %363 = arith.addf %361, %362 : vector<8x128xf32>
    %364 = arith.negf %363 : vector<8x128xf32>
    %365 = math.exp %364 : vector<8x128xf32>
    %cst_158 = arith.constant 1.000000e+00 : f32
    %366 = vector.broadcast %cst_158 : f32 to vector<8x128xf32>
    %367 = arith.addf %366, %365 : vector<8x128xf32>
    %368 = arith.divf %366, %367 : vector<8x128xf32>
    %369 = vector.extract_strided_slice %368 {offsets = [0, 0], sizes = [8, 64], strides = [1, 1]} : vector<8x128xf32> to vector<8x64xf32>
    %370 = vector.extract_strided_slice %368 {offsets = [0, 64], sizes = [8, 64], strides = [1, 1]} : vector<8x128xf32> to vector<8x64xf32>
    %371 = vector.extract_strided_slice %349 {offsets = [0, 128], sizes = [8, 64], strides = [1, 1]} : vector<8x192xf32> to vector<8x64xf32>
    %372 = vector.extract_strided_slice %360 {offsets = [0, 128], sizes = [8, 64], strides = [1, 1]} : vector<8x192xf32> to vector<8x64xf32>
    %373 = arith.mulf %369, %372 : vector<8x64xf32>
    %374 = arith.addf %371, %373 : vector<8x64xf32>
    %375 = math.tanh %374 : vector<8x64xf32>
    %cst_159 = arith.constant 1.000000e+00 : f32
    %376 = vector.broadcast %cst_159 : f32 to vector<8x64xf32>
    %377 = arith.subf %376, %370 : vector<8x64xf32>
    %378 = arith.mulf %377, %375 : vector<8x64xf32>
    %379 = arith.mulf %370, %345 : vector<8x64xf32>
    %380 = arith.addf %378, %379 : vector<8x64xf32>
    %381 = arith.select %353, %380, %345 : vector<8x64xi1>, vector<8x64xf32>
    %cst_160 = arith.constant 0.000000e+00 : f32
    %382 = vector.broadcast %cst_160 : f32 to vector<8x64xf32>
    %383 = arith.select %353, %381, %382 : vector<8x64xi1>, vector<8x64xf32>
    %384 = arith.index_cast %347 : i32 to index
    %c0_161 = arith.constant 0 : index
    %385 = vector.load %arg11[%384, %c0_161] : memref<64x64xf32, #tpu.memory_space<vmem>>, vector<8x64xf32>
    tpu.vector_store %arg11[%384, %c0_161], %383 {strides = array<i32>} : memref<64x64xf32, #tpu.memory_space<vmem>>, vector<8x64xf32>,
    %c1_i32_162 = arith.constant 1 : i32
    %c8_i32_163 = arith.constant 8 : i32
    %386 = arith.muli %c1_i32_162, %c8_i32_163 : i32
    %387 = tpu.assume_multiple %386, 8 : i32
    %388 = arith.index_cast %387 : i32 to index
    %c0_164 = arith.constant 0 : index
    %389 = vector.load %arg10[%388, %c0_164] : memref<64x192xf32, #tpu.memory_space<vmem>>, vector<8x192xf32>
    %390 = arith.index_cast %387 : i32 to index
    %c0_165 = arith.constant 0 : index
    %391 = vector.load %arg1[%390, %c0_165] : memref<64x64xf32, #tpu.memory_space<vmem>>, vector<8x64xf32>
    %cst_166 = arith.constant 0.000000e+00 : f32
    %392 = vector.broadcast %cst_166 : f32 to vector<8x64xf32>
    %393 = arith.cmpf one, %391, %392 : vector<8x64xf32>
    %c1_167 = arith.constant 1 : index
    %c0_168 = arith.constant 0 : index
    %c0_169 = arith.constant 0 : index
    %394 = vector.load %arg4[%c1_167, %c0_168, %c0_169] : memref<2x64x192xf32, #tpu.memory_space<vmem>>, vector<1x64x192xf32>
    %395 = vector.shape_cast %394 : vector<1x64x192xf32> to vector<64x192xf32>
    %cst_170 = arith.constant dense<0.000000e+00> : vector<8x192xf32>
    %396 = tpu.matmul %381, %395, %cst_170 {dimension_numbers = #tpu.dot_dimension_numbers<[1], [0], [0], [1], [0, 0, 1, 1], [], []>} : vector<8x64xf32>, vector<64x192xf32>, vector<8x192xf32> -> vector<8x192xf32>
    %c1_171 = arith.constant 1 : index
    %c0_172 = arith.constant 0 : index
    %c0_173 = arith.constant 0 : index
    %397 = vector.load %arg6[%c1_171, %c0_172, %c0_173] : memref<2x1x192xf32, #tpu.memory_space<vmem>>, vector<1x1x192xf32>
    %398 = vector.shape_cast %397 : vector<1x1x192xf32> to vector<1x192xf32>
    %399 = vector.broadcast %398 : vector<1x192xf32> to vector<8x192xf32>
    %400 = arith.addf %396, %399 : vector<8x192xf32>
    %401 = vector.extract_strided_slice %389 {offsets = [0, 0], sizes = [8, 128], strides = [1, 1]} : vector<8x192xf32> to vector<8x128xf32>
    %402 = vector.extract_strided_slice %400 {offsets = [0, 0], sizes = [8, 128], strides = [1, 1]} : vector<8x192xf32> to vector<8x128xf32>
    %403 = arith.addf %401, %402 : vector<8x128xf32>
    %404 = arith.negf %403 : vector<8x128xf32>
    %405 = math.exp %404 : vector<8x128xf32>
    %cst_174 = arith.constant 1.000000e+00 : f32
    %406 = vector.broadcast %cst_174 : f32 to vector<8x128xf32>
    %407 = arith.addf %406, %405 : vector<8x128xf32>
    %408 = arith.divf %406, %407 : vector<8x128xf32>
    %409 = vector.extract_strided_slice %408 {offsets = [0, 0], sizes = [8, 64], strides = [1, 1]} : vector<8x128xf32> to vector<8x64xf32>
    %410 = vector.extract_strided_slice %408 {offsets = [0, 64], sizes = [8, 64], strides = [1, 1]} : vector<8x128xf32> to vector<8x64xf32>
    %411 = vector.extract_strided_slice %389 {offsets = [0, 128], sizes = [8, 64], strides = [1, 1]} : vector<8x192xf32> to vector<8x64xf32>
    %412 = vector.extract_strided_slice %400 {offsets = [0, 128], sizes = [8, 64], strides = [1, 1]} : vector<8x192xf32> to vector<8x64xf32>
    %413 = arith.mulf %409, %412 : vector<8x64xf32>
    %414 = arith.addf %411, %413 : vector<8x64xf32>
    %415 = math.tanh %414 : vector<8x64xf32>
    %cst_175 = arith.constant 1.000000e+00 : f32
    %416 = vector.broadcast %cst_175 : f32 to vector<8x64xf32>
    %417 = arith.subf %416, %410 : vector<8x64xf32>
    %418 = arith.mulf %417, %415 : vector<8x64xf32>
    %419 = arith.mulf %410, %381 : vector<8x64xf32>
    %420 = arith.addf %418, %419 : vector<8x64xf32>
    %421 = arith.select %393, %420, %381 : vector<8x64xi1>, vector<8x64xf32>
    %cst_176 = arith.constant 0.000000e+00 : f32
    %422 = vector.broadcast %cst_176 : f32 to vector<8x64xf32>
    %423 = arith.select %393, %421, %422 : vector<8x64xi1>, vector<8x64xf32>
    %424 = arith.index_cast %387 : i32 to index
    %c0_177 = arith.constant 0 : index
    %425 = vector.load %arg11[%424, %c0_177] : memref<64x64xf32, #tpu.memory_space<vmem>>, vector<8x64xf32>
    tpu.vector_store %arg11[%424, %c0_177], %423 {strides = array<i32>} : memref<64x64xf32, #tpu.memory_space<vmem>>, vector<8x64xf32>,
    %c2_i32_178 = arith.constant 2 : i32
    %c8_i32_179 = arith.constant 8 : i32
    %426 = arith.muli %c2_i32_178, %c8_i32_179 : i32
    %427 = tpu.assume_multiple %426, 8 : i32
    %428 = arith.index_cast %427 : i32 to index
    %c0_180 = arith.constant 0 : index
    %429 = vector.load %arg10[%428, %c0_180] : memref<64x192xf32, #tpu.memory_space<vmem>>, vector<8x192xf32>
    %430 = arith.index_cast %427 : i32 to index
    %c0_181 = arith.constant 0 : index
    %431 = vector.load %arg1[%430, %c0_181] : memref<64x64xf32, #tpu.memory_space<vmem>>, vector<8x64xf32>
    %cst_182 = arith.constant 0.000000e+00 : f32
    %432 = vector.broadcast %cst_182 : f32 to vector<8x64xf32>
    %433 = arith.cmpf one, %431, %432 : vector<8x64xf32>
    %c1_183 = arith.constant 1 : index
    %c0_184 = arith.constant 0 : index
    %c0_185 = arith.constant 0 : index
    %434 = vector.load %arg4[%c1_183, %c0_184, %c0_185] : memref<2x64x192xf32, #tpu.memory_space<vmem>>, vector<1x64x192xf32>
    %435 = vector.shape_cast %434 : vector<1x64x192xf32> to vector<64x192xf32>
    %cst_186 = arith.constant dense<0.000000e+00> : vector<8x192xf32>
    %436 = tpu.matmul %421, %435, %cst_186 {dimension_numbers = #tpu.dot_dimension_numbers<[1], [0], [0], [1], [0, 0, 1, 1], [], []>} : vector<8x64xf32>, vector<64x192xf32>, vector<8x192xf32> -> vector<8x192xf32>
    %c1_187 = arith.constant 1 : index
    %c0_188 = arith.constant 0 : index
    %c0_189 = arith.constant 0 : index
    %437 = vector.load %arg6[%c1_187, %c0_188, %c0_189] : memref<2x1x192xf32, #tpu.memory_space<vmem>>, vector<1x1x192xf32>
    %438 = vector.shape_cast %437 : vector<1x1x192xf32> to vector<1x192xf32>
    %439 = vector.broadcast %438 : vector<1x192xf32> to vector<8x192xf32>
    %440 = arith.addf %436, %439 : vector<8x192xf32>
    %441 = vector.extract_strided_slice %429 {offsets = [0, 0], sizes = [8, 128], strides = [1, 1]} : vector<8x192xf32> to vector<8x128xf32>
    %442 = vector.extract_strided_slice %440 {offsets = [0, 0], sizes = [8, 128], strides = [1, 1]} : vector<8x192xf32> to vector<8x128xf32>
    %443 = arith.addf %441, %442 : vector<8x128xf32>
    %444 = arith.negf %443 : vector<8x128xf32>
    %445 = math.exp %444 : vector<8x128xf32>
    %cst_190 = arith.constant 1.000000e+00 : f32
    %446 = vector.broadcast %cst_190 : f32 to vector<8x128xf32>
    %447 = arith.addf %446, %445 : vector<8x128xf32>
    %448 = arith.divf %446, %447 : vector<8x128xf32>
    %449 = vector.extract_strided_slice %448 {offsets = [0, 0], sizes = [8, 64], strides = [1, 1]} : vector<8x128xf32> to vector<8x64xf32>
    %450 = vector.extract_strided_slice %448 {offsets = [0, 64], sizes = [8, 64], strides = [1, 1]} : vector<8x128xf32> to vector<8x64xf32>
    %451 = vector.extract_strided_slice %429 {offsets = [0, 128], sizes = [8, 64], strides = [1, 1]} : vector<8x192xf32> to vector<8x64xf32>
    %452 = vector.extract_strided_slice %440 {offsets = [0, 128], sizes = [8, 64], strides = [1, 1]} : vector<8x192xf32> to vector<8x64xf32>
    %453 = arith.mulf %449, %452 : vector<8x64xf32>
    %454 = arith.addf %451, %453 : vector<8x64xf32>
    %455 = math.tanh %454 : vector<8x64xf32>
    %cst_191 = arith.constant 1.000000e+00 : f32
    %456 = vector.broadcast %cst_191 : f32 to vector<8x64xf32>
    %457 = arith.subf %456, %450 : vector<8x64xf32>
    %458 = arith.mulf %457, %455 : vector<8x64xf32>
    %459 = arith.mulf %450, %421 : vector<8x64xf32>
    %460 = arith.addf %458, %459 : vector<8x64xf32>
    %461 = arith.select %433, %460, %421 : vector<8x64xi1>, vector<8x64xf32>
    %cst_192 = arith.constant 0.000000e+00 : f32
    %462 = vector.broadcast %cst_192 : f32 to vector<8x64xf32>
    %463 = arith.select %433, %461, %462 : vector<8x64xi1>, vector<8x64xf32>
    %464 = arith.index_cast %427 : i32 to index
    %c0_193 = arith.constant 0 : index
    %465 = vector.load %arg11[%464, %c0_193] : memref<64x64xf32, #tpu.memory_space<vmem>>, vector<8x64xf32>
    tpu.vector_store %arg11[%464, %c0_193], %463 {strides = array<i32>} : memref<64x64xf32, #tpu.memory_space<vmem>>, vector<8x64xf32>,
    %c3_i32_194 = arith.constant 3 : i32
    %c8_i32_195 = arith.constant 8 : i32
    %466 = arith.muli %c3_i32_194, %c8_i32_195 : i32
    %467 = tpu.assume_multiple %466, 8 : i32
    %468 = arith.index_cast %467 : i32 to index
    %c0_196 = arith.constant 0 : index
    %469 = vector.load %arg10[%468, %c0_196] : memref<64x192xf32, #tpu.memory_space<vmem>>, vector<8x192xf32>
    %470 = arith.index_cast %467 : i32 to index
    %c0_197 = arith.constant 0 : index
    %471 = vector.load %arg1[%470, %c0_197] : memref<64x64xf32, #tpu.memory_space<vmem>>, vector<8x64xf32>
    %cst_198 = arith.constant 0.000000e+00 : f32
    %472 = vector.broadcast %cst_198 : f32 to vector<8x64xf32>
    %473 = arith.cmpf one, %471, %472 : vector<8x64xf32>
    %c1_199 = arith.constant 1 : index
    %c0_200 = arith.constant 0 : index
    %c0_201 = arith.constant 0 : index
    %474 = vector.load %arg4[%c1_199, %c0_200, %c0_201] : memref<2x64x192xf32, #tpu.memory_space<vmem>>, vector<1x64x192xf32>
    %475 = vector.shape_cast %474 : vector<1x64x192xf32> to vector<64x192xf32>
    %cst_202 = arith.constant dense<0.000000e+00> : vector<8x192xf32>
    %476 = tpu.matmul %461, %475, %cst_202 {dimension_numbers = #tpu.dot_dimension_numbers<[1], [0], [0], [1], [0, 0, 1, 1], [], []>} : vector<8x64xf32>, vector<64x192xf32>, vector<8x192xf32> -> vector<8x192xf32>
    %c1_203 = arith.constant 1 : index
    %c0_204 = arith.constant 0 : index
    %c0_205 = arith.constant 0 : index
    %477 = vector.load %arg6[%c1_203, %c0_204, %c0_205] : memref<2x1x192xf32, #tpu.memory_space<vmem>>, vector<1x1x192xf32>
    %478 = vector.shape_cast %477 : vector<1x1x192xf32> to vector<1x192xf32>
    %479 = vector.broadcast %478 : vector<1x192xf32> to vector<8x192xf32>
    %480 = arith.addf %476, %479 : vector<8x192xf32>
    %481 = vector.extract_strided_slice %469 {offsets = [0, 0], sizes = [8, 128], strides = [1, 1]} : vector<8x192xf32> to vector<8x128xf32>
    %482 = vector.extract_strided_slice %480 {offsets = [0, 0], sizes = [8, 128], strides = [1, 1]} : vector<8x192xf32> to vector<8x128xf32>
    %483 = arith.addf %481, %482 : vector<8x128xf32>
    %484 = arith.negf %483 : vector<8x128xf32>
    %485 = math.exp %484 : vector<8x128xf32>
    %cst_206 = arith.constant 1.000000e+00 : f32
    %486 = vector.broadcast %cst_206 : f32 to vector<8x128xf32>
    %487 = arith.addf %486, %485 : vector<8x128xf32>
    %488 = arith.divf %486, %487 : vector<8x128xf32>
    %489 = vector.extract_strided_slice %488 {offsets = [0, 0], sizes = [8, 64], strides = [1, 1]} : vector<8x128xf32> to vector<8x64xf32>
    %490 = vector.extract_strided_slice %488 {offsets = [0, 64], sizes = [8, 64], strides = [1, 1]} : vector<8x128xf32> to vector<8x64xf32>
    %491 = vector.extract_strided_slice %469 {offsets = [0, 128], sizes = [8, 64], strides = [1, 1]} : vector<8x192xf32> to vector<8x64xf32>
    %492 = vector.extract_strided_slice %480 {offsets = [0, 128], sizes = [8, 64], strides = [1, 1]} : vector<8x192xf32> to vector<8x64xf32>
    %493 = arith.mulf %489, %492 : vector<8x64xf32>
    %494 = arith.addf %491, %493 : vector<8x64xf32>
    %495 = math.tanh %494 : vector<8x64xf32>
    %cst_207 = arith.constant 1.000000e+00 : f32
    %496 = vector.broadcast %cst_207 : f32 to vector<8x64xf32>
    %497 = arith.subf %496, %490 : vector<8x64xf32>
    %498 = arith.mulf %497, %495 : vector<8x64xf32>
    %499 = arith.mulf %490, %461 : vector<8x64xf32>
    %500 = arith.addf %498, %499 : vector<8x64xf32>
    %501 = arith.select %473, %500, %461 : vector<8x64xi1>, vector<8x64xf32>
    %cst_208 = arith.constant 0.000000e+00 : f32
    %502 = vector.broadcast %cst_208 : f32 to vector<8x64xf32>
    %503 = arith.select %473, %501, %502 : vector<8x64xi1>, vector<8x64xf32>
    %504 = arith.index_cast %467 : i32 to index
    %c0_209 = arith.constant 0 : index
    %505 = vector.load %arg11[%504, %c0_209] : memref<64x64xf32, #tpu.memory_space<vmem>>, vector<8x64xf32>
    tpu.vector_store %arg11[%504, %c0_209], %503 {strides = array<i32>} : memref<64x64xf32, #tpu.memory_space<vmem>>, vector<8x64xf32>,
    %c4_i32_210 = arith.constant 4 : i32
    %c8_i32_211 = arith.constant 8 : i32
    %506 = arith.muli %c4_i32_210, %c8_i32_211 : i32
    %507 = tpu.assume_multiple %506, 8 : i32
    %508 = arith.index_cast %507 : i32 to index
    %c0_212 = arith.constant 0 : index
    %509 = vector.load %arg10[%508, %c0_212] : memref<64x192xf32, #tpu.memory_space<vmem>>, vector<8x192xf32>
    %510 = arith.index_cast %507 : i32 to index
    %c0_213 = arith.constant 0 : index
    %511 = vector.load %arg1[%510, %c0_213] : memref<64x64xf32, #tpu.memory_space<vmem>>, vector<8x64xf32>
    %cst_214 = arith.constant 0.000000e+00 : f32
    %512 = vector.broadcast %cst_214 : f32 to vector<8x64xf32>
    %513 = arith.cmpf one, %511, %512 : vector<8x64xf32>
    %c1_215 = arith.constant 1 : index
    %c0_216 = arith.constant 0 : index
    %c0_217 = arith.constant 0 : index
    %514 = vector.load %arg4[%c1_215, %c0_216, %c0_217] : memref<2x64x192xf32, #tpu.memory_space<vmem>>, vector<1x64x192xf32>
    %515 = vector.shape_cast %514 : vector<1x64x192xf32> to vector<64x192xf32>
    %cst_218 = arith.constant dense<0.000000e+00> : vector<8x192xf32>
    %516 = tpu.matmul %501, %515, %cst_218 {dimension_numbers = #tpu.dot_dimension_numbers<[1], [0], [0], [1], [0, 0, 1, 1], [], []>} : vector<8x64xf32>, vector<64x192xf32>, vector<8x192xf32> -> vector<8x192xf32>
    %c1_219 = arith.constant 1 : index
    %c0_220 = arith.constant 0 : index
    %c0_221 = arith.constant 0 : index
    %517 = vector.load %arg6[%c1_219, %c0_220, %c0_221] : memref<2x1x192xf32, #tpu.memory_space<vmem>>, vector<1x1x192xf32>
    %518 = vector.shape_cast %517 : vector<1x1x192xf32> to vector<1x192xf32>
    %519 = vector.broadcast %518 : vector<1x192xf32> to vector<8x192xf32>
    %520 = arith.addf %516, %519 : vector<8x192xf32>
    %521 = vector.extract_strided_slice %509 {offsets = [0, 0], sizes = [8, 128], strides = [1, 1]} : vector<8x192xf32> to vector<8x128xf32>
    %522 = vector.extract_strided_slice %520 {offsets = [0, 0], sizes = [8, 128], strides = [1, 1]} : vector<8x192xf32> to vector<8x128xf32>
    %523 = arith.addf %521, %522 : vector<8x128xf32>
    %524 = arith.negf %523 : vector<8x128xf32>
    %525 = math.exp %524 : vector<8x128xf32>
    %cst_222 = arith.constant 1.000000e+00 : f32
    %526 = vector.broadcast %cst_222 : f32 to vector<8x128xf32>
    %527 = arith.addf %526, %525 : vector<8x128xf32>
    %528 = arith.divf %526, %527 : vector<8x128xf32>
    %529 = vector.extract_strided_slice %528 {offsets = [0, 0], sizes = [8, 64], strides = [1, 1]} : vector<8x128xf32> to vector<8x64xf32>
    %530 = vector.extract_strided_slice %528 {offsets = [0, 64], sizes = [8, 64], strides = [1, 1]} : vector<8x128xf32> to vector<8x64xf32>
    %531 = vector.extract_strided_slice %509 {offsets = [0, 128], sizes = [8, 64], strides = [1, 1]} : vector<8x192xf32> to vector<8x64xf32>
    %532 = vector.extract_strided_slice %520 {offsets = [0, 128], sizes = [8, 64], strides = [1, 1]} : vector<8x192xf32> to vector<8x64xf32>
    %533 = arith.mulf %529, %532 : vector<8x64xf32>
    %534 = arith.addf %531, %533 : vector<8x64xf32>
    %535 = math.tanh %534 : vector<8x64xf32>
    %cst_223 = arith.constant 1.000000e+00 : f32
    %536 = vector.broadcast %cst_223 : f32 to vector<8x64xf32>
    %537 = arith.subf %536, %530 : vector<8x64xf32>
    %538 = arith.mulf %537, %535 : vector<8x64xf32>
    %539 = arith.mulf %530, %501 : vector<8x64xf32>
    %540 = arith.addf %538, %539 : vector<8x64xf32>
    %541 = arith.select %513, %540, %501 : vector<8x64xi1>, vector<8x64xf32>
    %cst_224 = arith.constant 0.000000e+00 : f32
    %542 = vector.broadcast %cst_224 : f32 to vector<8x64xf32>
    %543 = arith.select %513, %541, %542 : vector<8x64xi1>, vector<8x64xf32>
    %544 = arith.index_cast %507 : i32 to index
    %c0_225 = arith.constant 0 : index
    %545 = vector.load %arg11[%544, %c0_225] : memref<64x64xf32, #tpu.memory_space<vmem>>, vector<8x64xf32>
    tpu.vector_store %arg11[%544, %c0_225], %543 {strides = array<i32>} : memref<64x64xf32, #tpu.memory_space<vmem>>, vector<8x64xf32>,
    %c5_i32_226 = arith.constant 5 : i32
    %c8_i32_227 = arith.constant 8 : i32
    %546 = arith.muli %c5_i32_226, %c8_i32_227 : i32
    %547 = tpu.assume_multiple %546, 8 : i32
    %548 = arith.index_cast %547 : i32 to index
    %c0_228 = arith.constant 0 : index
    %549 = vector.load %arg10[%548, %c0_228] : memref<64x192xf32, #tpu.memory_space<vmem>>, vector<8x192xf32>
    %550 = arith.index_cast %547 : i32 to index
    %c0_229 = arith.constant 0 : index
    %551 = vector.load %arg1[%550, %c0_229] : memref<64x64xf32, #tpu.memory_space<vmem>>, vector<8x64xf32>
    %cst_230 = arith.constant 0.000000e+00 : f32
    %552 = vector.broadcast %cst_230 : f32 to vector<8x64xf32>
    %553 = arith.cmpf one, %551, %552 : vector<8x64xf32>
    %c1_231 = arith.constant 1 : index
    %c0_232 = arith.constant 0 : index
    %c0_233 = arith.constant 0 : index
    %554 = vector.load %arg4[%c1_231, %c0_232, %c0_233] : memref<2x64x192xf32, #tpu.memory_space<vmem>>, vector<1x64x192xf32>
    %555 = vector.shape_cast %554 : vector<1x64x192xf32> to vector<64x192xf32>
    %cst_234 = arith.constant dense<0.000000e+00> : vector<8x192xf32>
    %556 = tpu.matmul %541, %555, %cst_234 {dimension_numbers = #tpu.dot_dimension_numbers<[1], [0], [0], [1], [0, 0, 1, 1], [], []>} : vector<8x64xf32>, vector<64x192xf32>, vector<8x192xf32> -> vector<8x192xf32>
    %c1_235 = arith.constant 1 : index
    %c0_236 = arith.constant 0 : index
    %c0_237 = arith.constant 0 : index
    %557 = vector.load %arg6[%c1_235, %c0_236, %c0_237] : memref<2x1x192xf32, #tpu.memory_space<vmem>>, vector<1x1x192xf32>
    %558 = vector.shape_cast %557 : vector<1x1x192xf32> to vector<1x192xf32>
    %559 = vector.broadcast %558 : vector<1x192xf32> to vector<8x192xf32>
    %560 = arith.addf %556, %559 : vector<8x192xf32>
    %561 = vector.extract_strided_slice %549 {offsets = [0, 0], sizes = [8, 128], strides = [1, 1]} : vector<8x192xf32> to vector<8x128xf32>
    %562 = vector.extract_strided_slice %560 {offsets = [0, 0], sizes = [8, 128], strides = [1, 1]} : vector<8x192xf32> to vector<8x128xf32>
    %563 = arith.addf %561, %562 : vector<8x128xf32>
    %564 = arith.negf %563 : vector<8x128xf32>
    %565 = math.exp %564 : vector<8x128xf32>
    %cst_238 = arith.constant 1.000000e+00 : f32
    %566 = vector.broadcast %cst_238 : f32 to vector<8x128xf32>
    %567 = arith.addf %566, %565 : vector<8x128xf32>
    %568 = arith.divf %566, %567 : vector<8x128xf32>
    %569 = vector.extract_strided_slice %568 {offsets = [0, 0], sizes = [8, 64], strides = [1, 1]} : vector<8x128xf32> to vector<8x64xf32>
    %570 = vector.extract_strided_slice %568 {offsets = [0, 64], sizes = [8, 64], strides = [1, 1]} : vector<8x128xf32> to vector<8x64xf32>
    %571 = vector.extract_strided_slice %549 {offsets = [0, 128], sizes = [8, 64], strides = [1, 1]} : vector<8x192xf32> to vector<8x64xf32>
    %572 = vector.extract_strided_slice %560 {offsets = [0, 128], sizes = [8, 64], strides = [1, 1]} : vector<8x192xf32> to vector<8x64xf32>
    %573 = arith.mulf %569, %572 : vector<8x64xf32>
    %574 = arith.addf %571, %573 : vector<8x64xf32>
    %575 = math.tanh %574 : vector<8x64xf32>
    %cst_239 = arith.constant 1.000000e+00 : f32
    %576 = vector.broadcast %cst_239 : f32 to vector<8x64xf32>
    %577 = arith.subf %576, %570 : vector<8x64xf32>
    %578 = arith.mulf %577, %575 : vector<8x64xf32>
    %579 = arith.mulf %570, %541 : vector<8x64xf32>
    %580 = arith.addf %578, %579 : vector<8x64xf32>
    %581 = arith.select %553, %580, %541 : vector<8x64xi1>, vector<8x64xf32>
    %cst_240 = arith.constant 0.000000e+00 : f32
    %582 = vector.broadcast %cst_240 : f32 to vector<8x64xf32>
    %583 = arith.select %553, %581, %582 : vector<8x64xi1>, vector<8x64xf32>
    %584 = arith.index_cast %547 : i32 to index
    %c0_241 = arith.constant 0 : index
    %585 = vector.load %arg11[%584, %c0_241] : memref<64x64xf32, #tpu.memory_space<vmem>>, vector<8x64xf32>
    tpu.vector_store %arg11[%584, %c0_241], %583 {strides = array<i32>} : memref<64x64xf32, #tpu.memory_space<vmem>>, vector<8x64xf32>,
    %c6_i32_242 = arith.constant 6 : i32
    %c8_i32_243 = arith.constant 8 : i32
    %586 = arith.muli %c6_i32_242, %c8_i32_243 : i32
    %587 = tpu.assume_multiple %586, 8 : i32
    %588 = arith.index_cast %587 : i32 to index
    %c0_244 = arith.constant 0 : index
    %589 = vector.load %arg10[%588, %c0_244] : memref<64x192xf32, #tpu.memory_space<vmem>>, vector<8x192xf32>
    %590 = arith.index_cast %587 : i32 to index
    %c0_245 = arith.constant 0 : index
    %591 = vector.load %arg1[%590, %c0_245] : memref<64x64xf32, #tpu.memory_space<vmem>>, vector<8x64xf32>
    %cst_246 = arith.constant 0.000000e+00 : f32
    %592 = vector.broadcast %cst_246 : f32 to vector<8x64xf32>
    %593 = arith.cmpf one, %591, %592 : vector<8x64xf32>
    %c1_247 = arith.constant 1 : index
    %c0_248 = arith.constant 0 : index
    %c0_249 = arith.constant 0 : index
    %594 = vector.load %arg4[%c1_247, %c0_248, %c0_249] : memref<2x64x192xf32, #tpu.memory_space<vmem>>, vector<1x64x192xf32>
    %595 = vector.shape_cast %594 : vector<1x64x192xf32> to vector<64x192xf32>
    %cst_250 = arith.constant dense<0.000000e+00> : vector<8x192xf32>
    %596 = tpu.matmul %581, %595, %cst_250 {dimension_numbers = #tpu.dot_dimension_numbers<[1], [0], [0], [1], [0, 0, 1, 1], [], []>} : vector<8x64xf32>, vector<64x192xf32>, vector<8x192xf32> -> vector<8x192xf32>
    %c1_251 = arith.constant 1 : index
    %c0_252 = arith.constant 0 : index
    %c0_253 = arith.constant 0 : index
    %597 = vector.load %arg6[%c1_251, %c0_252, %c0_253] : memref<2x1x192xf32, #tpu.memory_space<vmem>>, vector<1x1x192xf32>
    %598 = vector.shape_cast %597 : vector<1x1x192xf32> to vector<1x192xf32>
    %599 = vector.broadcast %598 : vector<1x192xf32> to vector<8x192xf32>
    %600 = arith.addf %596, %599 : vector<8x192xf32>
    %601 = vector.extract_strided_slice %589 {offsets = [0, 0], sizes = [8, 128], strides = [1, 1]} : vector<8x192xf32> to vector<8x128xf32>
    %602 = vector.extract_strided_slice %600 {offsets = [0, 0], sizes = [8, 128], strides = [1, 1]} : vector<8x192xf32> to vector<8x128xf32>
    %603 = arith.addf %601, %602 : vector<8x128xf32>
    %604 = arith.negf %603 : vector<8x128xf32>
    %605 = math.exp %604 : vector<8x128xf32>
    %cst_254 = arith.constant 1.000000e+00 : f32
    %606 = vector.broadcast %cst_254 : f32 to vector<8x128xf32>
    %607 = arith.addf %606, %605 : vector<8x128xf32>
    %608 = arith.divf %606, %607 : vector<8x128xf32>
    %609 = vector.extract_strided_slice %608 {offsets = [0, 0], sizes = [8, 64], strides = [1, 1]} : vector<8x128xf32> to vector<8x64xf32>
    %610 = vector.extract_strided_slice %608 {offsets = [0, 64], sizes = [8, 64], strides = [1, 1]} : vector<8x128xf32> to vector<8x64xf32>
    %611 = vector.extract_strided_slice %589 {offsets = [0, 128], sizes = [8, 64], strides = [1, 1]} : vector<8x192xf32> to vector<8x64xf32>
    %612 = vector.extract_strided_slice %600 {offsets = [0, 128], sizes = [8, 64], strides = [1, 1]} : vector<8x192xf32> to vector<8x64xf32>
    %613 = arith.mulf %609, %612 : vector<8x64xf32>
    %614 = arith.addf %611, %613 : vector<8x64xf32>
    %615 = math.tanh %614 : vector<8x64xf32>
    %cst_255 = arith.constant 1.000000e+00 : f32
    %616 = vector.broadcast %cst_255 : f32 to vector<8x64xf32>
    %617 = arith.subf %616, %610 : vector<8x64xf32>
    %618 = arith.mulf %617, %615 : vector<8x64xf32>
    %619 = arith.mulf %610, %581 : vector<8x64xf32>
    %620 = arith.addf %618, %619 : vector<8x64xf32>
    %621 = arith.select %593, %620, %581 : vector<8x64xi1>, vector<8x64xf32>
    %cst_256 = arith.constant 0.000000e+00 : f32
    %622 = vector.broadcast %cst_256 : f32 to vector<8x64xf32>
    %623 = arith.select %593, %621, %622 : vector<8x64xi1>, vector<8x64xf32>
    %624 = arith.index_cast %587 : i32 to index
    %c0_257 = arith.constant 0 : index
    %625 = vector.load %arg11[%624, %c0_257] : memref<64x64xf32, #tpu.memory_space<vmem>>, vector<8x64xf32>
    tpu.vector_store %arg11[%624, %c0_257], %623 {strides = array<i32>} : memref<64x64xf32, #tpu.memory_space<vmem>>, vector<8x64xf32>,
    %c7_i32_258 = arith.constant 7 : i32
    %c8_i32_259 = arith.constant 8 : i32
    %626 = arith.muli %c7_i32_258, %c8_i32_259 : i32
    %627 = tpu.assume_multiple %626, 8 : i32
    %628 = arith.index_cast %627 : i32 to index
    %c0_260 = arith.constant 0 : index
    %629 = vector.load %arg10[%628, %c0_260] : memref<64x192xf32, #tpu.memory_space<vmem>>, vector<8x192xf32>
    %630 = arith.index_cast %627 : i32 to index
    %c0_261 = arith.constant 0 : index
    %631 = vector.load %arg1[%630, %c0_261] : memref<64x64xf32, #tpu.memory_space<vmem>>, vector<8x64xf32>
    %cst_262 = arith.constant 0.000000e+00 : f32
    %632 = vector.broadcast %cst_262 : f32 to vector<8x64xf32>
    %633 = arith.cmpf one, %631, %632 : vector<8x64xf32>
    %c1_263 = arith.constant 1 : index
    %c0_264 = arith.constant 0 : index
    %c0_265 = arith.constant 0 : index
    %634 = vector.load %arg4[%c1_263, %c0_264, %c0_265] : memref<2x64x192xf32, #tpu.memory_space<vmem>>, vector<1x64x192xf32>
    %635 = vector.shape_cast %634 : vector<1x64x192xf32> to vector<64x192xf32>
    %cst_266 = arith.constant dense<0.000000e+00> : vector<8x192xf32>
    %636 = tpu.matmul %621, %635, %cst_266 {dimension_numbers = #tpu.dot_dimension_numbers<[1], [0], [0], [1], [0, 0, 1, 1], [], []>} : vector<8x64xf32>, vector<64x192xf32>, vector<8x192xf32> -> vector<8x192xf32>
    %c1_267 = arith.constant 1 : index
    %c0_268 = arith.constant 0 : index
    %c0_269 = arith.constant 0 : index
    %637 = vector.load %arg6[%c1_267, %c0_268, %c0_269] : memref<2x1x192xf32, #tpu.memory_space<vmem>>, vector<1x1x192xf32>
    %638 = vector.shape_cast %637 : vector<1x1x192xf32> to vector<1x192xf32>
    %639 = vector.broadcast %638 : vector<1x192xf32> to vector<8x192xf32>
    %640 = arith.addf %636, %639 : vector<8x192xf32>
    %641 = vector.extract_strided_slice %629 {offsets = [0, 0], sizes = [8, 128], strides = [1, 1]} : vector<8x192xf32> to vector<8x128xf32>
    %642 = vector.extract_strided_slice %640 {offsets = [0, 0], sizes = [8, 128], strides = [1, 1]} : vector<8x192xf32> to vector<8x128xf32>
    %643 = arith.addf %641, %642 : vector<8x128xf32>
    %644 = arith.negf %643 : vector<8x128xf32>
    %645 = math.exp %644 : vector<8x128xf32>
    %cst_270 = arith.constant 1.000000e+00 : f32
    %646 = vector.broadcast %cst_270 : f32 to vector<8x128xf32>
    %647 = arith.addf %646, %645 : vector<8x128xf32>
    %648 = arith.divf %646, %647 : vector<8x128xf32>
    %649 = vector.extract_strided_slice %648 {offsets = [0, 0], sizes = [8, 64], strides = [1, 1]} : vector<8x128xf32> to vector<8x64xf32>
    %650 = vector.extract_strided_slice %648 {offsets = [0, 64], sizes = [8, 64], strides = [1, 1]} : vector<8x128xf32> to vector<8x64xf32>
    %651 = vector.extract_strided_slice %629 {offsets = [0, 128], sizes = [8, 64], strides = [1, 1]} : vector<8x192xf32> to vector<8x64xf32>
    %652 = vector.extract_strided_slice %640 {offsets = [0, 128], sizes = [8, 64], strides = [1, 1]} : vector<8x192xf32> to vector<8x64xf32>
    %653 = arith.mulf %649, %652 : vector<8x64xf32>
    %654 = arith.addf %651, %653 : vector<8x64xf32>
    %655 = math.tanh %654 : vector<8x64xf32>
    %cst_271 = arith.constant 1.000000e+00 : f32
    %656 = vector.broadcast %cst_271 : f32 to vector<8x64xf32>
    %657 = arith.subf %656, %650 : vector<8x64xf32>
    %658 = arith.mulf %657, %655 : vector<8x64xf32>
    %659 = arith.mulf %650, %621 : vector<8x64xf32>
    %660 = arith.addf %658, %659 : vector<8x64xf32>
    %661 = arith.select %633, %660, %621 : vector<8x64xi1>, vector<8x64xf32>
    %cst_272 = arith.constant 0.000000e+00 : f32
    %662 = vector.broadcast %cst_272 : f32 to vector<8x64xf32>
    %663 = arith.select %633, %661, %662 : vector<8x64xi1>, vector<8x64xf32>
    %664 = arith.index_cast %627 : i32 to index
    %c0_273 = arith.constant 0 : index
    %665 = vector.load %arg11[%664, %c0_273] : memref<64x64xf32, #tpu.memory_space<vmem>>, vector<8x64xf32>
    tpu.vector_store %arg11[%664, %c0_273], %663 {strides = array<i32>} : memref<64x64xf32, #tpu.memory_space<vmem>>, vector<8x64xf32>,
    %c8_i32_274 = arith.constant 8 : i32
    %666 = vector.extract_strided_slice %661 {offsets = [0, 0], sizes = [8, 32], strides = [1, 1]} : vector<8x64xf32> to vector<8x32xf32>
    %667 = arith.addf %334, %666 : vector<8x32xf32>
    %668 = vector.extract_strided_slice %661 {offsets = [0, 32], sizes = [8, 32], strides = [1, 1]} : vector<8x64xf32> to vector<8x32xf32>
    %669 = arith.addf %667, %668 : vector<8x32xf32>
    %c0_275 = arith.constant 0 : index
    %c0_276 = arith.constant 0 : index
    %670 = vector.load %arg11[%c0_275, %c0_276] : memref<64x64xf32, #tpu.memory_space<vmem>>, vector<8x64xf32>
    %c56 = arith.constant 56 : index
    %c0_277 = arith.constant 0 : index
    %671 = vector.load %arg11[%c56, %c0_277] : memref<64x64xf32, #tpu.memory_space<vmem>>, vector<8x64xf32>
    %672 = vector.extract_strided_slice %670 {offsets = [0, 0], sizes = [8, 32], strides = [1, 1]} : vector<8x64xf32> to vector<8x32xf32>
    %673 = vector.extract_strided_slice %671 {offsets = [0, 32], sizes = [8, 32], strides = [1, 1]} : vector<8x64xf32> to vector<8x32xf32>
    %c8 = arith.constant 8 : index
    %c0_278 = arith.constant 0 : index
    %674 = vector.load %arg11[%c8, %c0_278] : memref<64x64xf32, #tpu.memory_space<vmem>>, vector<8x64xf32>
    %c48 = arith.constant 48 : index
    %c0_279 = arith.constant 0 : index
    %675 = vector.load %arg11[%c48, %c0_279] : memref<64x64xf32, #tpu.memory_space<vmem>>, vector<8x64xf32>
    %676 = vector.extract_strided_slice %674 {offsets = [0, 0], sizes = [8, 32], strides = [1, 1]} : vector<8x64xf32> to vector<8x32xf32>
    %677 = vector.extract_strided_slice %675 {offsets = [0, 32], sizes = [8, 32], strides = [1, 1]} : vector<8x64xf32> to vector<8x32xf32>
    %c16 = arith.constant 16 : index
    %c0_280 = arith.constant 0 : index
    %678 = vector.load %arg11[%c16, %c0_280] : memref<64x64xf32, #tpu.memory_space<vmem>>, vector<8x64xf32>
    %c40 = arith.constant 40 : index
    %c0_281 = arith.constant 0 : index
    %679 = vector.load %arg11[%c40, %c0_281] : memref<64x64xf32, #tpu.memory_space<vmem>>, vector<8x64xf32>
    %680 = vector.extract_strided_slice %678 {offsets = [0, 0], sizes = [8, 32], strides = [1, 1]} : vector<8x64xf32> to vector<8x32xf32>
    %681 = vector.extract_strided_slice %679 {offsets = [0, 32], sizes = [8, 32], strides = [1, 1]} : vector<8x64xf32> to vector<8x32xf32>
    %c24 = arith.constant 24 : index
    %c0_282 = arith.constant 0 : index
    %682 = vector.load %arg11[%c24, %c0_282] : memref<64x64xf32, #tpu.memory_space<vmem>>, vector<8x64xf32>
    %c32 = arith.constant 32 : index
    %c0_283 = arith.constant 0 : index
    %683 = vector.load %arg11[%c32, %c0_283] : memref<64x64xf32, #tpu.memory_space<vmem>>, vector<8x64xf32>
    %684 = vector.extract_strided_slice %682 {offsets = [0, 0], sizes = [8, 32], strides = [1, 1]} : vector<8x64xf32> to vector<8x32xf32>
    %685 = vector.extract_strided_slice %683 {offsets = [0, 32], sizes = [8, 32], strides = [1, 1]} : vector<8x64xf32> to vector<8x32xf32>
    %c32_284 = arith.constant 32 : index
    %c0_285 = arith.constant 0 : index
    %686 = vector.load %arg11[%c32_284, %c0_285] : memref<64x64xf32, #tpu.memory_space<vmem>>, vector<8x64xf32>
    %c24_286 = arith.constant 24 : index
    %c0_287 = arith.constant 0 : index
    %687 = vector.load %arg11[%c24_286, %c0_287] : memref<64x64xf32, #tpu.memory_space<vmem>>, vector<8x64xf32>
    %688 = vector.extract_strided_slice %686 {offsets = [0, 0], sizes = [8, 32], strides = [1, 1]} : vector<8x64xf32> to vector<8x32xf32>
    %689 = vector.extract_strided_slice %687 {offsets = [0, 32], sizes = [8, 32], strides = [1, 1]} : vector<8x64xf32> to vector<8x32xf32>
    %c40_288 = arith.constant 40 : index
    %c0_289 = arith.constant 0 : index
    %690 = vector.load %arg11[%c40_288, %c0_289] : memref<64x64xf32, #tpu.memory_space<vmem>>, vector<8x64xf32>
    %c16_290 = arith.constant 16 : index
    %c0_291 = arith.constant 0 : index
    %691 = vector.load %arg11[%c16_290, %c0_291] : memref<64x64xf32, #tpu.memory_space<vmem>>, vector<8x64xf32>
    %692 = vector.extract_strided_slice %690 {offsets = [0, 0], sizes = [8, 32], strides = [1, 1]} : vector<8x64xf32> to vector<8x32xf32>
    %693 = vector.extract_strided_slice %691 {offsets = [0, 32], sizes = [8, 32], strides = [1, 1]} : vector<8x64xf32> to vector<8x32xf32>
    %c48_292 = arith.constant 48 : index
    %c0_293 = arith.constant 0 : index
    %694 = vector.load %arg11[%c48_292, %c0_293] : memref<64x64xf32, #tpu.memory_space<vmem>>, vector<8x64xf32>
    %c8_294 = arith.constant 8 : index
    %c0_295 = arith.constant 0 : index
    %695 = vector.load %arg11[%c8_294, %c0_295] : memref<64x64xf32, #tpu.memory_space<vmem>>, vector<8x64xf32>
    %696 = vector.extract_strided_slice %694 {offsets = [0, 0], sizes = [8, 32], strides = [1, 1]} : vector<8x64xf32> to vector<8x32xf32>
    %697 = vector.extract_strided_slice %695 {offsets = [0, 32], sizes = [8, 32], strides = [1, 1]} : vector<8x64xf32> to vector<8x32xf32>
    %c56_296 = arith.constant 56 : index
    %c0_297 = arith.constant 0 : index
    %698 = vector.load %arg11[%c56_296, %c0_297] : memref<64x64xf32, #tpu.memory_space<vmem>>, vector<8x64xf32>
    %c0_298 = arith.constant 0 : index
    %c0_299 = arith.constant 0 : index
    %699 = vector.load %arg11[%c0_298, %c0_299] : memref<64x64xf32, #tpu.memory_space<vmem>>, vector<8x64xf32>
    %700 = vector.extract_strided_slice %698 {offsets = [0, 0], sizes = [8, 32], strides = [1, 1]} : vector<8x64xf32> to vector<8x32xf32>
    %701 = vector.extract_strided_slice %699 {offsets = [0, 32], sizes = [8, 32], strides = [1, 1]} : vector<8x64xf32> to vector<8x32xf32>
    %702 = tpu.concatenate %672, %673, %676, %677, %680, %681, %684, %685, %688, %689, %692, %693, %696, %697, %700, %701 in 1 : vector<8x32xf32>, vector<8x32xf32>, vector<8x32xf32>, vector<8x32xf32>, vector<8x32xf32>, vector<8x32xf32>, vector<8x32xf32>, vector<8x32xf32>, vector<8x32xf32>, vector<8x32xf32>, vector<8x32xf32>, vector<8x32xf32>, vector<8x32xf32>, vector<8x32xf32>, vector<8x32xf32>, vector<8x32xf32> -> vector<8x512xf32>
    %c0_300 = arith.constant 0 : index
    %c0_301 = arith.constant 0 : index
    %703 = vector.load %arg7[%c0_300, %c0_301] : memref<8x512xf32, #tpu.memory_space<vmem>>, vector<8x512xf32>
    tpu.vector_store %arg7[%c0_300, %c0_301], %702 {strides = array<i32>} : memref<8x512xf32, #tpu.memory_space<vmem>>, vector<8x512xf32>,
    %c0_302 = arith.constant 0 : index
    %c0_303 = arith.constant 0 : index
    %704 = vector.load %arg8[%c0_302, %c0_303] : memref<8x32xf32, #tpu.memory_space<vmem>>, vector<8x32xf32>
    tpu.vector_store %arg8[%c0_302, %c0_303], %669 {strides = array<i32>} : memref<8x32xf32, #tpu.memory_space<vmem>>, vector<8x32xf32>,
    return
  }
  func.func @transform_0(%arg0: i32) -> (i32, i32) {
    %c0_i32 = arith.constant 0 : i32
    %c0_i32_0 = arith.constant 0 : i32
    %c0_i32_1 = arith.constant 0 : i32
    return %c0_i32, %c0_i32_0 : i32, i32
  }
  func.func @transform_1(%arg0: i32) -> (i32, i32) {
    %c0_i32 = arith.constant 0 : i32
    %c0_i32_0 = arith.constant 0 : i32
    %c0_i32_1 = arith.constant 0 : i32
    return %c0_i32, %c0_i32_0 : i32, i32
  }
  func.func @transform_2(%arg0: i32) -> (i32, i32, i32) {
    %c0_i32 = arith.constant 0 : i32
    %c0_i32_0 = arith.constant 0 : i32
    %c0_i32_1 = arith.constant 0 : i32
    %c0_i32_2 = arith.constant 0 : i32
    return %c0_i32, %c0_i32_0, %c0_i32_1 : i32, i32, i32
  }
  func.func @transform_3(%arg0: i32) -> (i32, i32, i32) {
    %c0_i32 = arith.constant 0 : i32
    %c0_i32_0 = arith.constant 0 : i32
    %c0_i32_1 = arith.constant 0 : i32
    %c0_i32_2 = arith.constant 0 : i32
    return %c0_i32, %c0_i32_0, %c0_i32_1 : i32, i32, i32
  }
  func.func @transform_4(%arg0: i32) -> (i32, i32, i32) {
    %c0_i32 = arith.constant 0 : i32
    %c0_i32_0 = arith.constant 0 : i32
    %c0_i32_1 = arith.constant 0 : i32
    %c0_i32_2 = arith.constant 0 : i32
    return %c0_i32, %c0_i32_0, %c0_i32_1 : i32, i32, i32
  }
  func.func @transform_5(%arg0: i32) -> (i32, i32, i32) {
    %c0_i32 = arith.constant 0 : i32
    %c0_i32_0 = arith.constant 0 : i32
    %c0_i32_1 = arith.constant 0 : i32
    %c0_i32_2 = arith.constant 0 : i32
    return %c0_i32, %c0_i32_0, %c0_i32_1 : i32, i32, i32
  }
  func.func @transform_6(%arg0: i32) -> (i32, i32) {
    %c0_i32 = arith.constant 0 : i32
    %c0_i32_0 = arith.constant 0 : i32
    %c0_i32_1 = arith.constant 0 : i32
    return %c0_i32, %c0_i32_0 : i32, i32
  }
  func.func @transform_7(%arg0: i32) -> (i32, i32) {
    %c0_i32 = arith.constant 0 : i32
    %c0_i32_0 = arith.constant 0 : i32
    %c0_i32_1 = arith.constant 0 : i32
    return %c0_i32, %c0_i32_0 : i32, i32
  }
}

</mosaic_0001>

<llo_original>
// kernel: tpu_custom_call.1
$region0: #{tpu_custom_call.1}
  #allocation0 [shape = 'u32[]', space=smem, size = 0x4, offset = 0x4, fixed_abs, tag = 'smem constant byte address 0x4 - core index']
  #allocation1 [shape = 'u32[144,128]{1,0:T(1,128)}', space=vmem, size = 0x12000, scoped, tag = 'internal scratch']
  #allocation2 [shape = 'f32[64,128]{1,0:T(8,128)}', space=vmem, size = 0x8000, scoped, tag = 'scratch operand']
  #allocation3 [shape = 'f32[64,192]{1,0:T(8,128)}', space=vmem, size = 0x10000, scoped, tag = 'scratch operand']
  #allocation4 [shape = 'f32[64,64]{1,0:T(8,128)}', space=vmem, size = 0x8000, scoped, tag = 'scratch operand']
  %s0 = inlined_call_operand.vmem [shape: f32[64,64], index: 0, kind: input, shape index: {}]
  %s1 = inlined_call_operand.vmem [shape: f32[64,32], index: 1, kind: input, shape index: {}]
  %s2 = inlined_call_operand.vmem [shape: f32[2,128,192], index: 2, kind: input, shape index: {}]
  %s3 = inlined_call_operand.vmem [shape: f32[2,64,192], index: 3, kind: input, shape index: {}]
  %s4 = inlined_call_operand.vmem [shape: f32[2,1,192], index: 4, kind: input, shape index: {}]
  %s5 = inlined_call_operand.vmem [shape: f32[2,1,192], index: 5, kind: input, shape index: {}]
  %s6 = inlined_call_operand.hbm [shape: f32[8,512], index: 6, kind: output, shape index: {0}]
  %s7 = inlined_call_operand.hbm [shape: f32[8,32], index: 7, kind: output, shape index: {1}]
  %8 = xla_tuple %s6, %s7
  %s9 = sld [smem:[#allocation0]]
  $region49: #{tpu_custom_call.1} parent=0
    _
  %s11 = ssub.s32 1, %s9
  %s12 = scalar_select 0, %s11, %s9
  $region1: #{tpu_custom_call.1} parent=0
    #allocation5 [shape = 'u8[16384]{0}', space=vmem, size = 0x4000, scoped, tag = 'output window, operand 0, single buffered']
    #allocation6 [shape = 's32[1]{0}', space=sflag, size = 0x4, scoped, tag = 'scoped memory for tpu_custom_call.1']
    #allocation7 [shape = 'u8[4096]{0}', space=vmem, size = 0x1000, scoped, tag = 'output window, operand 1, single buffered']
    #allocation8 [shape = 's32[1]{0}', space=sflag, size = 0x4, scoped, tag = 'scoped memory for tpu_custom_call.1']
    %13 = vsyncpa [#allocation6], 0
    %14 = vsyncpa [#allocation8], 0
    // Predicated region
    $region2: #{tpu_custom_call.1} parent=1 // pred_check
      _
    $region3: #{tpu_custom_call.1} parent=1 // pred_check_branch
      %16 = sbr.rel (0) target = $region5
    $region4: #{tpu_custom_call.1} parent=1 // pred_region
      _
    $region5: #{tpu_custom_call.1} parent=1 // pred_fallthru
      _
    // Predicated region
    $region6: #{tpu_custom_call.1} parent=1 // pred_check
      _
    $region7: #{tpu_custom_call.1} parent=1 // pred_check_branch
      %18 = sbr.rel (0) target = $region9
    $region8: #{tpu_custom_call.1} parent=1 // pred_region
      _
    $region9: #{tpu_custom_call.1} parent=1 // pred_fallthru
      _
    // Predicated region
    $region10: #{tpu_custom_call.1} parent=1 // pred_check
      _
    $region11: #{tpu_custom_call.1} parent=1 // pred_check_branch
      %20 = sbr.rel (0) target = $region13
    $region12: #{tpu_custom_call.1} parent=1 // pred_region
      _
    $region13: #{tpu_custom_call.1} parent=1 // pred_fallthru
      _
    // Predicated region
    $region14: #{tpu_custom_call.1} parent=1 // pred_check
      _
    $region15: #{tpu_custom_call.1} parent=1 // pred_check_branch
      %22 = sbr.rel (0) target = $region17
    $region16: #{tpu_custom_call.1} parent=1 // pred_region
      _
    $region17: #{tpu_custom_call.1} parent=1 // pred_fallthru
      _
    // Predicated region
    $region18: #{tpu_custom_call.1} parent=1 // pred_check
      _
    $region19: #{tpu_custom_call.1} parent=1 // pred_check_branch
      %24 = sbr.rel (0) target = $region21
    $region20: #{tpu_custom_call.1} parent=1 // pred_region
      _
    $region21: #{tpu_custom_call.1} parent=1 // pred_fallthru
      _
    // Predicated region
    $region22: #{tpu_custom_call.1} parent=1 // pred_check
      _
    $region23: #{tpu_custom_call.1} parent=1 // pred_check_branch
      %26 = sbr.rel (0) target = $region25
    $region24: #{tpu_custom_call.1} parent=1 // pred_region
      _
    $region25: #{tpu_custom_call.1} parent=1 // pred_fallthru
      _
    %v27 = vld [vmem:[%s1] sm:$0xff]
    %v28 = vld [vmem:[%s1 + $0x8] sm:$0xff]
    %v29 = vld [vmem:[%s1 + $0x10] sm:$0xff]
    %v30 = vld [vmem:[%s1 + $0x18] sm:$0xff]
    %v31 = vld [vmem:[%s1 + $0x20] sm:$0xff]
    %v32 = vld [vmem:[%s1 + $0x28] sm:$0xff]
    %v33 = vld [vmem:[%s1 + $0x30] sm:$0xff]
    %v34 = vld [vmem:[%s1 + $0x38] sm:$0xff]
    %v35 = vld [vmem:[%s2] sm:$0xff]
    %v36 = vld [vmem:[%s2 + $0x8] sm:$0xff]
    %v37 = vld [vmem:[%s2 + $0x10] sm:$0xff]
    %v38 = vld [vmem:[%s2 + $0x18] sm:$0xff]
    %v39 = vld [vmem:[%s2 + $0x20] sm:$0xff]
    %v40 = vld [vmem:[%s2 + $0x28] sm:$0xff]
    %v41 = vld [vmem:[%s2 + $0x30] sm:$0xff]
    %v42 = vld [vmem:[%s2 + $0x38] sm:$0xff]
    %v43 = vld [vmem:[%s4] sm:$0x3]
    %v45 = vlaneseq
    %v46 = vshrl.u32 %v45, 7
    %v47 = vsub.s32 0, %v46
    %v48 = vrot.slane %v43, %v47
    %v49 = vlaneseq
    %v50 = vshrl.u32 %v49, 7
    %v51 = vsub.s32 1, %v50
    %v52 = vrot.slane %v43, %v51
    %vm55 = vcmask 261120
    %v57 = vsel %vm55, %v27, 0
    %v60 = vsel %vm55, %v28, 0
    %v63 = vsel %vm55, %v29, 0
    %v66 = vsel %vm55, %v30, 0
    %v69 = vsel %vm55, %v31, 0
    %v72 = vsel %vm55, %v32, 0
    %v75 = vsel %vm55, %v33, 0
    %v78 = vsel %vm55, %v34, 0
    %80 = vmatprep.subr.mxu0 %v36
    %81 = vmatpush1.msra.mxu0 %v35
    %82 = vmatprep.subr.mxu0 %v38
    %83 = vmatpush1.msra.mxu0 %v37
    %84 = vmatprep.subr.mxu0 %v40
    %85 = vmatpush1.msra.mxu0 %v39
    %86 = vmatprep.subr.mxu0 %v42
    %87 = vmatpush1.msra.mxu0 %v41
    %88 = vmatprep.subr.mxu0 0.0
    %89 = vmatpush1.msra.mxu0 0.0
    %90 = vmatprep.subr.mxu0 0.0
    %91 = vmatpush1.msra.mxu0 0.0
    %92 = vmatprep.subr.mxu0 0.0
    %93 = vmatpush1.msra.mxu0 0.0
    %94 = vmatprep.subr.mxu0 0.0
    %95 = vmatpush1.msra.mxu0 0.0
    %96 = vmatprep.subr.mxu0 0.0
    %97 = vmatpush1.msra.mxu0 0.0
    %98 = vmatprep.subr.mxu0 0.0
    %99 = vmatpush1.msra.mxu0 0.0
    %100 = vmatprep.subr.mxu0 0.0
    %101 = vmatpush1.msra.mxu0 0.0
    %102 = vmatprep.subr.mxu0 0.0
    %103 = vmatpush1.msra.mxu0 0.0
    %104 = vmatprep.subr.mxu0 0.0
    %105 = vmatpush1.msra.mxu0 0.0
    %106 = vmatprep.subr.mxu0 0.0
    %107 = vmatpush1.msra.mxu0 0.0
    %108 = vmatprep.subr.mxu0 0.0
    %109 = vmatpush1.msra.mxu0 0.0
    %110 = vmatprep.subr.mxu0 0.0
    %111 = vmatpush1.msra.mxu0 0.0
    %112 = vmatprep.subr.mxu0 0.0
    %113 = vmatpush1.msra.mxu0 0.0
    %114 = vmatprep.subr.mxu0 0.0
    %115 = vmatpush1.msra.mxu0 0.0
    %116 = vmatprep.subr.mxu0 0.0
    %117 = vmatpush1.msra.mxu0 0.0
    %118 = vmatprep.subr.mxu0 0.0
    %119 = vmatpush1.msra.mxu0 0.0
    %120 = vmatprep.subr.mxu0 0.0
    %121 = vmatpush1.msra.mxu0 0.0
    %122 = vmatprep.subr.mxu0 0.0
    %123 = vmatpush1.msra.mxu0 0.0
    %124 = vmatprep.subr.mxu0 0.0
    %125 = vmatpush1.msra.mxu0 0.0
    %126 = vmatprep.subr.mxu0 0.0
    %127 = vmatpush1.msra.mxu0 0.0
    %128 = vmatprep.subr.mxu0 0.0
    %129 = vmatpush1.msra.mxu0 0.0
    %130 = vmatprep.subr.mxu0 0.0
    %131 = vmatpush1.msra.mxu0 0.0
    %132 = vmatprep.subr.mxu0 0.0
    %133 = vmatpush1.msra.mxu0 0.0
    %134 = vmatprep.subr.mxu0 0.0
    %135 = vmatpush1.msra.mxu0 0.0
    %136 = vmatprep.subr.mxu0 0.0
    %137 = vmatpush1.msra.mxu0 0.0
    %138 = vmatprep.subr.mxu0 0.0
    %139 = vmatpush1.msra.mxu0 0.0
    %140 = vmatprep.subr.mxu0 0.0
    %141 = vmatpush1.msra.mxu0 0.0
    %142 = vmatprep.subr.mxu0 0.0
    %143 = vmatpush1.msra.mxu0 0.0
    %144 = vmatprep.mubr.f32.mxu0 0.0
    %145 = vmatmul.mubr.f32.gmra.mrb[0].mxu0 %v57
    %v146 = vpop.f32.mrb[0].mxu0
    %v147 = vadd.f32 %v48, %v146
    %v148 = vpop.f32.mrb[0].mxu0
    %v149 = vadd.f32 %v52, %v148
    %150 = vmatprep.mubr.f32.mxu0 0.0
    %151 = vmatmul.mubr.f32.gmra.mrb[0].mxu0 %v60
    %v152 = vpop.f32.mrb[0].mxu0
    %v153 = vadd.f32 %v48, %v152
    %v154 = vpop.f32.mrb[0].mxu0
    %v155 = vadd.f32 %v52, %v154
    %156 = vmatprep.mubr.f32.mxu0 0.0
    %157 = vmatmul.mubr.f32.gmra.mrb[0].mxu0 %v63
    %v158 = vpop.f32.mrb[0].mxu0
    %v159 = vadd.f32 %v48, %v158
    %v160 = vpop.f32.mrb[0].mxu0
    %v161 = vadd.f32 %v52, %v160
    %162 = vmatprep.mubr.f32.mxu0 0.0
    %163 = vmatmul.mubr.f32.gmra.mrb[0].mxu0 %v66
    %v164 = vpop.f32.mrb[0].mxu0
    %v165 = vadd.f32 %v48, %v164
    %v166 = vpop.f32.mrb[0].mxu0
    %v167 = vadd.f32 %v52, %v166
    %168 = vmatprep.mubr.f32.mxu0 0.0
    %169 = vmatmul.mubr.f32.gmra.mrb[0].mxu0 %v69
    %v170 = vpop.f32.mrb[0].mxu0
    %v171 = vadd.f32 %v48, %v170
    %v172 = vpop.f32.mrb[0].mxu0
    %v173 = vadd.f32 %v52, %v172
    %174 = vmatprep.mubr.f32.mxu0 0.0
    %175 = vmatmul.mubr.f32.gmra.mrb[0].mxu0 %v72
    %v176 = vpop.f32.mrb[0].mxu0
    %v177 = vadd.f32 %v48, %v176
    %v178 = vpop.f32.mrb[0].mxu0
    %v179 = vadd.f32 %v52, %v178
    %180 = vmatprep.mubr.f32.mxu0 0.0
    %181 = vmatmul.mubr.f32.gmra.mrb[0].mxu0 %v75
    %v182 = vpop.f32.mrb[0].mxu0
    %v183 = vadd.f32 %v48, %v182
    %v184 = vpop.f32.mrb[0].mxu0
    %v185 = vadd.f32 %v52, %v184
    %186 = vmatprep.mubr.f32.mxu0 0.0
    %187 = vmatmul.mubr.f32.gmra.mrb[0].mxu0 %v78
    %v188 = vpop.f32.mrb[0].mxu0
    %v189 = vadd.f32 %v48, %v188
    %v190 = vpop.f32.mrb[0].mxu0
    %v191 = vadd.f32 %v52, %v190
    %192 = vdwg.mxu0
    %193 = vst [vmem:[#allocation3] sm:$0xff] %v147
    %vm194 = vcmask 523264
    %195 = vst.msk [vmem:[#allocation3 + $0x8] sm:$0xff] %vm194, %v149
    %196 = vst [vmem:[#allocation3 + $0x10] sm:$0xff] %v153
    %197 = vst.msk [vmem:[#allocation3 + $0x18] sm:$0xff] %vm194, %v155
    %198 = vst [vmem:[#allocation3 + $0x20] sm:$0xff] %v159
    %199 = vst.msk [vmem:[#allocation3 + $0x28] sm:$0xff] %vm194, %v161
    %200 = vst [vmem:[#allocation3 + $0x30] sm:$0xff] %v165
    %201 = vst.msk [vmem:[#allocation3 + $0x38] sm:$0xff] %vm194, %v167
    %202 = vst [vmem:[#allocation3 + $0x40] sm:$0xff] %v171
    %203 = vst.msk [vmem:[#allocation3 + $0x48] sm:$0xff] %vm194, %v173
    %204 = vst [vmem:[#allocation3 + $0x50] sm:$0xff] %v177
    %205 = vst.msk [vmem:[#allocation3 + $0x58] sm:$0xff] %vm194, %v179
    %206 = vst [vmem:[#allocation3 + $0x60] sm:$0xff] %v183
    %207 = vst.msk [vmem:[#allocation3 + $0x68] sm:$0xff] %vm194, %v185
    %208 = vst [vmem:[#allocation3 + $0x70] sm:$0xff] %v189
    %209 = vst.msk [vmem:[#allocation3 + $0x78] sm:$0xff] %vm194, %v191
    %s210 = smul.u32 0, 2
    %s211 = smul.addr %s210, 8
    %s212 = scalar_lea.vmem [#allocation3], %s211
    %v213 = vld [vmem:[%s212] sm:$0xff]
    %v214 = vld [vmem:[%s212 + $0x8] sm:$0xff]
    %v215 = vld [vmem:[%s0] sm:$0xff]
    %vm216 = vcmp.ne.f32.partialorder %v215, 0.0
    %v217 = vld [vmem:[%s3] sm:$0xff]
    %v218 = vld [vmem:[%s3 + $0x8] sm:$0xff]
    %v219 = vld [vmem:[%s3 + $0x10] sm:$0xff]
    %v220 = vld [vmem:[%s3 + $0x18] sm:$0xff]
    %v221 = vld [vmem:[%s3 + $0x20] sm:$0xff]
    %v222 = vld [vmem:[%s3 + $0x28] sm:$0xff]
    %v223 = vld [vmem:[%s3 + $0x30] sm:$0xff]
    %v224 = vld [vmem:[%s3 + $0x38] sm:$0xff]
    %v225 = vld [vmem:[%s3 + $0x40] sm:$0xff]
    %v226 = vld [vmem:[%s3 + $0x48] sm:$0xff]
    %v227 = vld [vmem:[%s3 + $0x50] sm:$0xff]
    %v228 = vld [vmem:[%s3 + $0x58] sm:$0xff]
    %v229 = vld [vmem:[%s3 + $0x60] sm:$0xff]
    %v230 = vld [vmem:[%s3 + $0x68] sm:$0xff]
    %v231 = vld [vmem:[%s3 + $0x70] sm:$0xff]
    %v232 = vld [vmem:[%s3 + $0x78] sm:$0xff]
    %v233 = vld [vmem:[%s5] sm:$0x3]
    %v235 = vlaneseq
    %v236 = vshrl.u32 %v235, 7
    %v237 = vsub.s32 0, %v236
    %v238 = vrot.slane %v233, %v237
    %v239 = vlaneseq
    %v240 = vshrl.u32 %v239, 7
    %v241 = vsub.s32 1, %v240
    %v242 = vrot.slane %v233, %v241
    %v246 = vsel %vm194, 0.0, 0
    %248 = vmatprep.subr.mxu0 %v218
    %249 = vmatpush1.msra.mxu0 %v217
    %250 = vmatprep.subr.mxu0 %v220
    %251 = vmatpush1.msra.mxu0 %v219
    %252 = vmatprep.subr.mxu0 %v222
    %253 = vmatpush1.msra.mxu0 %v221
    %254 = vmatprep.subr.mxu0 %v224
    %255 = vmatpush1.msra.mxu0 %v223
    %256 = vmatprep.subr.mxu0 %v226
    %257 = vmatpush1.msra.mxu0 %v225
    %258 = vmatprep.subr.mxu0 %v228
    %259 = vmatpush1.msra.mxu0 %v227
    %260 = vmatprep.subr.mxu0 %v230
    %261 = vmatpush1.msra.mxu0 %v229
    %262 = vmatprep.subr.mxu0 %v232
    %263 = vmatpush1.msra.mxu0 %v231
    %264 = vmatprep.subr.mxu0 0.0
    %265 = vmatpush1.msra.mxu0 0.0
    %266 = vmatprep.subr.mxu0 0.0
    %267 = vmatpush1.msra.mxu0 0.0
    %268 = vmatprep.subr.mxu0 0.0
    %269 = vmatpush1.msra.mxu0 0.0
    %270 = vmatprep.subr.mxu0 0.0
    %271 = vmatpush1.msra.mxu0 0.0
    %272 = vmatprep.subr.mxu0 0.0
    %273 = vmatpush1.msra.mxu0 0.0
    %274 = vmatprep.subr.mxu0 0.0
    %275 = vmatpush1.msra.mxu0 0.0
    %276 = vmatprep.subr.mxu0 0.0
    %277 = vmatpush1.msra.mxu0 0.0
    %278 = vmatprep.subr.mxu0 0.0
    %279 = vmatpush1.msra.mxu0 0.0
    %280 = vmatprep.subr.mxu0 0.0
    %281 = vmatpush1.msra.mxu0 0.0
    %282 = vmatprep.subr.mxu0 0.0
    %283 = vmatpush1.msra.mxu0 0.0
    %284 = vmatprep.subr.mxu0 0.0
    %285 = vmatpush1.msra.mxu0 0.0
    %286 = vmatprep.subr.mxu0 0.0
    %287 = vmatpush1.msra.mxu0 0.0
    %288 = vmatprep.subr.mxu0 0.0
    %289 = vmatpush1.msra.mxu0 0.0
    %290 = vmatprep.subr.mxu0 0.0
    %291 = vmatpush1.msra.mxu0 0.0
    %292 = vmatprep.subr.mxu0 0.0
    %293 = vmatpush1.msra.mxu0 0.0
    %294 = vmatprep.subr.mxu0 0.0
    %295 = vmatpush1.msra.mxu0 0.0
    %296 = vmatprep.subr.mxu0 0.0
    %297 = vmatpush1.msra.mxu0 0.0
    %298 = vmatprep.subr.mxu0 0.0
    %299 = vmatpush1.msra.mxu0 0.0
    %300 = vmatprep.subr.mxu0 0.0
    %301 = vmatpush1.msra.mxu0 0.0
    %302 = vmatprep.subr.mxu0 0.0
    %303 = vmatpush1.msra.mxu0 0.0
    %304 = vmatprep.subr.mxu0 0.0
    %305 = vmatpush1.msra.mxu0 0.0
    %306 = vmatprep.subr.mxu0 0.0
    %307 = vmatpush1.msra.mxu0 0.0
    %308 = vmatprep.subr.mxu0 0.0
    %309 = vmatpush1.msra.mxu0 0.0
    %310 = vmatprep.subr.mxu0 0.0
    %311 = vmatpush1.msra.mxu0 0.0
    %312 = vmatprep.mubr.f32.mxu0 0.0
    %313 = vmatmul.mubr.f32.gmra.mrb[0].mxu0 %v246
    %v314 = vpop.f32.mrb[0].mxu0
    %v315 = vadd.f32 %v238, %v314
    %v316 = vpop.f32.mrb[0].mxu0
    %v317 = vadd.f32 %v242, %v316
    %318 = vdwg.mxu0
    %v319 = vadd.f32 %v213, %v315
    %v320 = vxor.u32 %v319, 2147483648
    %v321 = vmul.f32 %v320, 1.442695
    %v322 = vpow.pop %v321
    %v323 = vadd.f32 %v322, 1.0
    %v324 = vrcp.pop %v323
    %v325 = vmul.f32 1.0, %v324
    %v326 = vmul.f32 %v325, %v317
    %v327 = vadd.f32 %v214, %v326
    %v328 = vtanh.pop %v327
    %v329 = vsub.f32 1.0, %v325
    %331 = vrot.lane.b32.xlu0 %v328, 64
    %v332 = vpop.permute.xlu0 %331
    %v334 = vmul.f32 %v329, %v332
    %v335 = vmul.f32 %v325, 0.0
    %v336 = vadd.f32 %v334, %v335
    %338 = vrot.lane.b32.xlu0 %v336, 64
    %v339 = vpop.permute.xlu0 %338
    %v341 = vsel %vm216, %v339, 0.0
    %342 = vst.msk [vmem:[#allocation4] sm:$0xff] %vm194, %v341
    %s343 = smul.u32 1, 2
    %s344 = smul.addr %s343, 8
    %s345 = scalar_lea.vmem [#allocation3], %s344
    %v346 = vld [vmem:[%s345] sm:$0xff]
    %v347 = vld [vmem:[%s345 + $0x8] sm:$0xff]
    %s348 = scalar_lea.vmem %s0, 8
    %v349 = vld [vmem:[%s348] sm:$0xff]
    %vm350 = vcmp.ne.f32.partialorder %v349, 0.0
    %v351 = vld [vmem:[%s3] sm:$0xff]
    %v352 = vld [vmem:[%s3 + $0x8] sm:$0xff]
    %v353 = vld [vmem:[%s3 + $0x10] sm:$0xff]
    %v354 = vld [vmem:[%s3 + $0x18] sm:$0xff]
    %v355 = vld [vmem:[%s3 + $0x20] sm:$0xff]
    %v356 = vld [vmem:[%s3 + $0x28] sm:$0xff]
    %v357 = vld [vmem:[%s3 + $0x30] sm:$0xff]
    %v358 = vld [vmem:[%s3 + $0x38] sm:$0xff]
    %v359 = vld [vmem:[%s3 + $0x40] sm:$0xff]
    %v360 = vld [vmem:[%s3 + $0x48] sm:$0xff]
    %v361 = vld [vmem:[%s3 + $0x50] sm:$0xff]
    %v362 = vld [vmem:[%s3 + $0x58] sm:$0xff]
    %v363 = vld [vmem:[%s3 + $0x60] sm:$0xff]
    %v364 = vld [vmem:[%s3 + $0x68] sm:$0xff]
    %v365 = vld [vmem:[%s3 + $0x70] sm:$0xff]
    %v366 = vld [vmem:[%s3 + $0x78] sm:$0xff]
    %v367 = vld [vmem:[%s5] sm:$0x3]
    %v369 = vlaneseq
    %v370 = vshrl.u32 %v369, 7
    %v371 = vsub.s32 0, %v370
    %v372 = vrot.slane %v367, %v371
    %v373 = vlaneseq
    %v374 = vshrl.u32 %v373, 7
    %v375 = vsub.s32 1, %v374
    %v376 = vrot.slane %v367, %v375
    %v380 = vsel %vm194, %v341, 0
    %382 = vmatprep.subr.mxu0 %v352
    %383 = vmatpush1.msra.mxu0 %v351
    %384 = vmatprep.subr.mxu0 %v354
    %385 = vmatpush1.msra.mxu0 %v353
    %386 = vmatprep.subr.mxu0 %v356
    %387 = vmatpush1.msra.mxu0 %v355
    %388 = vmatprep.subr.mxu0 %v358
    %389 = vmatpush1.msra.mxu0 %v357
    %390 = vmatprep.subr.mxu0 %v360
    %391 = vmatpush1.msra.mxu0 %v359
    %392 = vmatprep.subr.mxu0 %v362
    %393 = vmatpush1.msra.mxu0 %v361
    %394 = vmatprep.subr.mxu0 %v364
    %395 = vmatpush1.msra.mxu0 %v363
    %396 = vmatprep.subr.mxu0 %v366
    %397 = vmatpush1.msra.mxu0 %v365
    %398 = vmatprep.subr.mxu0 0.0
    %399 = vmatpush1.msra.mxu0 0.0
    %400 = vmatprep.subr.mxu0 0.0
    %401 = vmatpush1.msra.mxu0 0.0
    %402 = vmatprep.subr.mxu0 0.0
    %403 = vmatpush1.msra.mxu0 0.0
    %404 = vmatprep.subr.mxu0 0.0
    %405 = vmatpush1.msra.mxu0 0.0
    %406 = vmatprep.subr.mxu0 0.0
    %407 = vmatpush1.msra.mxu0 0.0
    %408 = vmatprep.subr.mxu0 0.0
    %409 = vmatpush1.msra.mxu0 0.0
    %410 = vmatprep.subr.mxu0 0.0
    %411 = vmatpush1.msra.mxu0 0.0
    %412 = vmatprep.subr.mxu0 0.0
    %413 = vmatpush1.msra.mxu0 0.0
    %414 = vmatprep.subr.mxu0 0.0
    %415 = vmatpush1.msra.mxu0 0.0
    %416 = vmatprep.subr.mxu0 0.0
    %417 = vmatpush1.msra.mxu0 0.0
    %418 = vmatprep.subr.mxu0 0.0
    %419 = vmatpush1.msra.mxu0 0.0
    %420 = vmatprep.subr.mxu0 0.0
    %421 = vmatpush1.msra.mxu0 0.0
    %422 = vmatprep.subr.mxu0 0.0
    %423 = vmatpush1.msra.mxu0 0.0
    %424 = vmatprep.subr.mxu0 0.0
    %425 = vmatpush1.msra.mxu0 0.0
    %426 = vmatprep.subr.mxu0 0.0
    %427 = vmatpush1.msra.mxu0 0.0
    %428 = vmatprep.subr.mxu0 0.0
    %429 = vmatpush1.msra.mxu0 0.0
    %430 = vmatprep.subr.mxu0 0.0
    %431 = vmatpush1.msra.mxu0 0.0
    %432 = vmatprep.subr.mxu0 0.0
    %433 = vmatpush1.msra.mxu0 0.0
    %434 = vmatprep.subr.mxu0 0.0
    %435 = vmatpush1.msra.mxu0 0.0
    %436 = vmatprep.subr.mxu0 0.0
    %437 = vmatpush1.msra.mxu0 0.0
    %438 = vmatprep.subr.mxu0 0.0
    %439 = vmatpush1.msra.mxu0 0.0
    %440 = vmatprep.subr.mxu0 0.0
    %441 = vmatpush1.msra.mxu0 0.0
    %442 = vmatprep.subr.mxu0 0.0
    %443 = vmatpush1.msra.mxu0 0.0
    %444 = vmatprep.subr.mxu0 0.0
    %445 = vmatpush1.msra.mxu0 0.0
    %446 = vmatprep.mubr.f32.mxu0 0.0
    %447 = vmatmul.mubr.f32.gmra.mrb[0].mxu0 %v380
    %v448 = vpop.f32.mrb[0].mxu0
    %v449 = vadd.f32 %v372, %v448
    %v450 = vpop.f32.mrb[0].mxu0
    %v451 = vadd.f32 %v376, %v450
    %452 = vdwg.mxu0
    %v453 = vadd.f32 %v346, %v449
    %v454 = vxor.u32 %v453, 2147483648
    %v455 = vmul.f32 %v454, 1.442695
    %v456 = vpow.pop %v455
    %v457 = vadd.f32 %v456, 1.0
    %v458 = vrcp.pop %v457
    %v459 = vmul.f32 1.0, %v458
    %v460 = vmul.f32 %v459, %v451
    %v461 = vadd.f32 %v347, %v460
    %v462 = vtanh.pop %v461
    %v463 = vsub.f32 1.0, %v459
    %465 = vrot.lane.b32.xlu0 %v462, 64
    %v466 = vpop.permute.xlu0 %465
    %v468 = vmul.f32 %v463, %v466
    %469 = vrot.lane.b32.xlu0 %v341, 64
    %v470 = vpop.permute.xlu0 %469
    %v472 = vmul.f32 %v459, %v470
    %v473 = vadd.f32 %v468, %v472
    %475 = vrot.lane.b32.xlu0 %v473, 64
    %v476 = vpop.permute.xlu0 %475
    %v478 = vsel %vm350, %v476, %v341
    %v479 = vsel %vm350, %v476, 0.0
    %s480 = scalar_lea.vmem [#allocation4], 8
    %481 = vst.msk [vmem:[%s480] sm:$0xff] %vm194, %v479
    %s482 = smul.u32 2, 2
    %s483 = smul.addr %s482, 8
    %s484 = scalar_lea.vmem [#allocation3], %s483
    %v485 = vld [vmem:[%s484] sm:$0xff]
    %v486 = vld [vmem:[%s484 + $0x8] sm:$0xff]
    %s487 = scalar_lea.vmem %s0, 16
    %v488 = vld [vmem:[%s487] sm:$0xff]
    %vm489 = vcmp.ne.f32.partialorder %v488, 0.0
    %v490 = vld [vmem:[%s3] sm:$0xff]
    %v491 = vld [vmem:[%s3 + $0x8] sm:$0xff]
    %v492 = vld [vmem:[%s3 + $0x10] sm:$0xff]
    %v493 = vld [vmem:[%s3 + $0x18] sm:$0xff]
    %v494 = vld [vmem:[%s3 + $0x20] sm:$0xff]
    %v495 = vld [vmem:[%s3 + $0x28] sm:$0xff]
    %v496 = vld [vmem:[%s3 + $0x30] sm:$0xff]
    %v497 = vld [vmem:[%s3 + $0x38] sm:$0xff]
    %v498 = vld [vmem:[%s3 + $0x40] sm:$0xff]
    %v499 = vld [vmem:[%s3 + $0x48] sm:$0xff]
    %v500 = vld [vmem:[%s3 + $0x50] sm:$0xff]
    %v501 = vld [vmem:[%s3 + $0x58] sm:$0xff]
    %v502 = vld [vmem:[%s3 + $0x60] sm:$0xff]
    %v503 = vld [vmem:[%s3 + $0x68] sm:$0xff]
    %v504 = vld [vmem:[%s3 + $0x70] sm:$0xff]
    %v505 = vld [vmem:[%s3 + $0x78] sm:$0xff]
    %v506 = vld [vmem:[%s5] sm:$0x3]
    %v508 = vlaneseq
    %v509 = vshrl.u32 %v508, 7
    %v510 = vsub.s32 0, %v509
    %v511 = vrot.slane %v506, %v510
    %v512 = vlaneseq
    %v513 = vshrl.u32 %v512, 7
    %v514 = vsub.s32 1, %v513
    %v515 = vrot.slane %v506, %v514
    %v519 = vsel %vm194, %v478, 0
    %521 = vmatprep.subr.mxu0 %v491
    %522 = vmatpush1.msra.mxu0 %v490
    %523 = vmatprep.subr.mxu0 %v493
    %524 = vmatpush1.msra.mxu0 %v492
    %525 = vmatprep.subr.mxu0 %v495
    %526 = vmatpush1.msra.mxu0 %v494
    %527 = vmatprep.subr.mxu0 %v497
    %528 = vmatpush1.msra.mxu0 %v496
    %529 = vmatprep.subr.mxu0 %v499
    %530 = vmatpush1.msra.mxu0 %v498
    %531 = vmatprep.subr.mxu0 %v501
    %532 = vmatpush1.msra.mxu0 %v500
    %533 = vmatprep.subr.mxu0 %v503
    %534 = vmatpush1.msra.mxu0 %v502
    %535 = vmatprep.subr.mxu0 %v505
    %536 = vmatpush1.msra.mxu0 %v504
    %537 = vmatprep.subr.mxu0 0.0
    %538 = vmatpush1.msra.mxu0 0.0
    %539 = vmatprep.subr.mxu0 0.0
    %540 = vmatpush1.msra.mxu0 0.0
    %541 = vmatprep.subr.mxu0 0.0
    %542 = vmatpush1.msra.mxu0 0.0
    %543 = vmatprep.subr.mxu0 0.0
    %544 = vmatpush1.msra.mxu0 0.0
    %545 = vmatprep.subr.mxu0 0.0
    %546 = vmatpush1.msra.mxu0 0.0
    %547 = vmatprep.subr.mxu0 0.0
    %548 = vmatpush1.msra.mxu0 0.0
    %549 = vmatprep.subr.mxu0 0.0
    %550 = vmatpush1.msra.mxu0 0.0
    %551 = vmatprep.subr.mxu0 0.0
    %552 = vmatpush1.msra.mxu0 0.0
    %553 = vmatprep.subr.mxu0 0.0
    %554 = vmatpush1.msra.mxu0 0.0
    %555 = vmatprep.subr.mxu0 0.0
    %556 = vmatpush1.msra.mxu0 0.0
    %557 = vmatprep.subr.mxu0 0.0
    %558 = vmatpush1.msra.mxu0 0.0
    %559 = vmatprep.subr.mxu0 0.0
    %560 = vmatpush1.msra.mxu0 0.0
    %561 = vmatprep.subr.mxu0 0.0
    %562 = vmatpush1.msra.mxu0 0.0
    %563 = vmatprep.subr.mxu0 0.0
    %564 = vmatpush1.msra.mxu0 0.0
    %565 = vmatprep.subr.mxu0 0.0
    %566 = vmatpush1.msra.mxu0 0.0
    %567 = vmatprep.subr.mxu0 0.0
    %568 = vmatpush1.msra.mxu0 0.0
    %569 = vmatprep.subr.mxu0 0.0
    %570 = vmatpush1.msra.mxu0 0.0
    %571 = vmatprep.subr.mxu0 0.0
    %572 = vmatpush1.msra.mxu0 0.0
    %573 = vmatprep.subr.mxu0 0.0
    %574 = vmatpush1.msra.mxu0 0.0
    %575 = vmatprep.subr.mxu0 0.0
    %576 = vmatpush1.msra.mxu0 0.0
    %577 = vmatprep.subr.mxu0 0.0
    %578 = vmatpush1.msra.mxu0 0.0
    %579 = vmatprep.subr.mxu0 0.0
    %580 = vmatpush1.msra.mxu0 0.0
    %581 = vmatprep.subr.mxu0 0.0
    %582 = vmatpush1.msra.mxu0 0.0
    %583 = vmatprep.subr.mxu0 0.0
    %584 = vmatpush1.msra.mxu0 0.0
    %585 = vmatprep.mubr.f32.mxu0 0.0
    %586 = vmatmul.mubr.f32.gmra.mrb[0].mxu0 %v519
    %v587 = vpop.f32.mrb[0].mxu0
    %v588 = vadd.f32 %v511, %v587
    %v589 = vpop.f32.mrb[0].mxu0
    %v590 = vadd.f32 %v515, %v589
    %591 = vdwg.mxu0
    %v592 = vadd.f32 %v485, %v588
    %v593 = vxor.u32 %v592, 2147483648
    %v594 = vmul.f32 %v593, 1.442695
    %v595 = vpow.pop %v594
    %v596 = vadd.f32 %v595, 1.0
    %v597 = vrcp.pop %v596
    %v598 = vmul.f32 1.0, %v597
    %v599 = vmul.f32 %v598, %v590
    %v600 = vadd.f32 %v486, %v599
    %v601 = vtanh.pop %v600
    %v602 = vsub.f32 1.0, %v598
    %604 = vrot.lane.b32.xlu0 %v601, 64
    %v605 = vpop.permute.xlu0 %604
    %v607 = vmul.f32 %v602, %v605
    %608 = vrot.lane.b32.xlu0 %v478, 64
    %v609 = vpop.permute.xlu0 %608
    %v611 = vmul.f32 %v598, %v609
    %v612 = vadd.f32 %v607, %v611
    %614 = vrot.lane.b32.xlu0 %v612, 64
    %v615 = vpop.permute.xlu0 %614
    %v617 = vsel %vm489, %v615, %v478
    %v618 = vsel %vm489, %v615, 0.0
    %s619 = scalar_lea.vmem [#allocation4], 16
    %620 = vst.msk [vmem:[%s619] sm:$0xff] %vm194, %v618
    %s621 = smul.u32 3, 2
    %s622 = smul.addr %s621, 8
    %s623 = scalar_lea.vmem [#allocation3], %s622
    %v624 = vld [vmem:[%s623] sm:$0xff]
    %v625 = vld [vmem:[%s623 + $0x8] sm:$0xff]
    %s626 = scalar_lea.vmem %s0, 24
    %v627 = vld [vmem:[%s626] sm:$0xff]
    %vm628 = vcmp.ne.f32.partialorder %v627, 0.0
    %v629 = vld [vmem:[%s3] sm:$0xff]
    %v630 = vld [vmem:[%s3 + $0x8] sm:$0xff]
    %v631 = vld [vmem:[%s3 + $0x10] sm:$0xff]
    %v632 = vld [vmem:[%s3 + $0x18] sm:$0xff]
    %v633 = vld [vmem:[%s3 + $0x20] sm:$0xff]
    %v634 = vld [vmem:[%s3 + $0x28] sm:$0xff]
    %v635 = vld [vmem:[%s3 + $0x30] sm:$0xff]
    %v636 = vld [vmem:[%s3 + $0x38] sm:$0xff]
    %v637 = vld [vmem:[%s3 + $0x40] sm:$0xff]
    %v638 = vld [vmem:[%s3 + $0x48] sm:$0xff]
    %v639 = vld [vmem:[%s3 + $0x50] sm:$0xff]
    %v640 = vld [vmem:[%s3 + $0x58] sm:$0xff]
    %v641 = vld [vmem:[%s3 + $0x60] sm:$0xff]
    %v642 = vld [vmem:[%s3 + $0x68] sm:$0xff]
    %v643 = vld [vmem:[%s3 + $0x70] sm:$0xff]
    %v644 = vld [vmem:[%s3 + $0x78] sm:$0xff]
    %v645 = vld [vmem:[%s5] sm:$0x3]
    %v647 = vlaneseq
    %v648 = vshrl.u32 %v647, 7
    %v649 = vsub.s32 0, %v648
    %v650 = vrot.slane %v645, %v649
    %v651 = vlaneseq
    %v652 = vshrl.u32 %v651, 7
    %v653 = vsub.s32 1, %v652
    %v654 = vrot.slane %v645, %v653
    %v658 = vsel %vm194, %v617, 0
    %660 = vmatprep.subr.mxu0 %v630
    %661 = vmatpush1.msra.mxu0 %v629
    %662 = vmatprep.subr.mxu0 %v632
    %663 = vmatpush1.msra.mxu0 %v631
    %664 = vmatprep.subr.mxu0 %v634
    %665 = vmatpush1.msra.mxu0 %v633
    %666 = vmatprep.subr.mxu0 %v636
    %667 = vmatpush1.msra.mxu0 %v635
    %668 = vmatprep.subr.mxu0 %v638
    %669 = vmatpush1.msra.mxu0 %v637
    %670 = vmatprep.subr.mxu0 %v640
    %671 = vmatpush1.msra.mxu0 %v639
    %672 = vmatprep.subr.mxu0 %v642
    %673 = vmatpush1.msra.mxu0 %v641
    %674 = vmatprep.subr.mxu0 %v644
    %675 = vmatpush1.msra.mxu0 %v643
    %676 = vmatprep.subr.mxu0 0.0
    %677 = vmatpush1.msra.mxu0 0.0
    %678 = vmatprep.subr.mxu0 0.0
    %679 = vmatpush1.msra.mxu0 0.0
    %680 = vmatprep.subr.mxu0 0.0
    %681 = vmatpush1.msra.mxu0 0.0
    %682 = vmatprep.subr.mxu0 0.0
    %683 = vmatpush1.msra.mxu0 0.0
    %684 = vmatprep.subr.mxu0 0.0
    %685 = vmatpush1.msra.mxu0 0.0
    %686 = vmatprep.subr.mxu0 0.0
    %687 = vmatpush1.msra.mxu0 0.0
    %688 = vmatprep.subr.mxu0 0.0
    %689 = vmatpush1.msra.mxu0 0.0
    %690 = vmatprep.subr.mxu0 0.0
    %691 = vmatpush1.msra.mxu0 0.0
    %692 = vmatprep.subr.mxu0 0.0
    %693 = vmatpush1.msra.mxu0 0.0
    %694 = vmatprep.subr.mxu0 0.0
    %695 = vmatpush1.msra.mxu0 0.0
    %696 = vmatprep.subr.mxu0 0.0
    %697 = vmatpush1.msra.mxu0 0.0
    %698 = vmatprep.subr.mxu0 0.0
    %699 = vmatpush1.msra.mxu0 0.0
    %700 = vmatprep.subr.mxu0 0.0
    %701 = vmatpush1.msra.mxu0 0.0
    %702 = vmatprep.subr.mxu0 0.0
    %703 = vmatpush1.msra.mxu0 0.0
    %704 = vmatprep.subr.mxu0 0.0
    %705 = vmatpush1.msra.mxu0 0.0
    %706 = vmatprep.subr.mxu0 0.0
    %707 = vmatpush1.msra.mxu0 0.0
    %708 = vmatprep.subr.mxu0 0.0
    %709 = vmatpush1.msra.mxu0 0.0
    %710 = vmatprep.subr.mxu0 0.0
    %711 = vmatpush1.msra.mxu0 0.0
    %712 = vmatprep.subr.mxu0 0.0
    %713 = vmatpush1.msra.mxu0 0.0
    %714 = vmatprep.subr.mxu0 0.0
    %715 = vmatpush1.msra.mxu0 0.0
    %716 = vmatprep.subr.mxu0 0.0
    %717 = vmatpush1.msra.mxu0 0.0
    %718 = vmatprep.subr.mxu0 0.0
    %719 = vmatpush1.msra.mxu0 0.0
    %720 = vmatprep.subr.mxu0 0.0
    %721 = vmatpush1.msra.mxu0 0.0
    %722 = vmatprep.subr.mxu0 0.0
    %723 = vmatpush1.msra.mxu0 0.0
    %724 = vmatprep.mubr.f32.mxu0 0.0
    %725 = vmatmul.mubr.f32.gmra.mrb[0].mxu0 %v658
    %v726 = vpop.f32.mrb[0].mxu0
    %v727 = vadd.f32 %v650, %v726
    %v728 = vpop.f32.mrb[0].mxu0
    %v729 = vadd.f32 %v654, %v728
    %730 = vdwg.mxu0
    %v731 = vadd.f32 %v624, %v727
    %v732 = vxor.u32 %v731, 2147483648
    %v733 = vmul.f32 %v732, 1.442695
    %v734 = vpow.pop %v733
    %v735 = vadd.f32 %v734, 1.0
    %v736 = vrcp.pop %v735
    %v737 = vmul.f32 1.0, %v736
    %v738 = vmul.f32 %v737, %v729
    %v739 = vadd.f32 %v625, %v738
    %v740 = vtanh.pop %v739
    %v741 = vsub.f32 1.0, %v737
    %743 = vrot.lane.b32.xlu0 %v740, 64
    %v744 = vpop.permute.xlu0 %743
    %v746 = vmul.f32 %v741, %v744
    %747 = vrot.lane.b32.xlu0 %v617, 64
    %v748 = vpop.permute.xlu0 %747
    %v750 = vmul.f32 %v737, %v748
    %v751 = vadd.f32 %v746, %v750
    %753 = vrot.lane.b32.xlu0 %v751, 64
    %v754 = vpop.permute.xlu0 %753
    %v756 = vsel %vm628, %v754, %v617
    %v757 = vsel %vm628, %v754, 0.0
    %s758 = scalar_lea.vmem [#allocation4], 24
    %759 = vst.msk [vmem:[%s758] sm:$0xff] %vm194, %v757
    %s760 = smul.u32 4, 2
    %s761 = smul.addr %s760, 8
    %s762 = scalar_lea.vmem [#allocation3], %s761
    %v763 = vld [vmem:[%s762] sm:$0xff]
    %v764 = vld [vmem:[%s762 + $0x8] sm:$0xff]
    %s765 = scalar_lea.vmem %s0, 32
    %v766 = vld [vmem:[%s765] sm:$0xff]
    %vm767 = vcmp.ne.f32.partialorder %v766, 0.0
    %v768 = vld [vmem:[%s3] sm:$0xff]
    %v769 = vld [vmem:[%s3 + $0x8] sm:$0xff]
    %v770 = vld [vmem:[%s3 + $0x10] sm:$0xff]
    %v771 = vld [vmem:[%s3 + $0x18] sm:$0xff]
    %v772 = vld [vmem:[%s3 + $0x20] sm:$0xff]
    %v773 = vld [vmem:[%s3 + $0x28] sm:$0xff]
    %v774 = vld [vmem:[%s3 + $0x30] sm:$0xff]
    %v775 = vld [vmem:[%s3 + $0x38] sm:$0xff]
    %v776 = vld [vmem:[%s3 + $0x40] sm:$0xff]
    %v777 = vld [vmem:[%s3 + $0x48] sm:$0xff]
    %v778 = vld [vmem:[%s3 + $0x50] sm:$0xff]
    %v779 = vld [vmem:[%s3 + $0x58] sm:$0xff]
    %v780 = vld [vmem:[%s3 + $0x60] sm:$0xff]
    %v781 = vld [vmem:[%s3 + $0x68] sm:$0xff]
    %v782 = vld [vmem:[%s3 + $0x70] sm:$0xff]
    %v783 = vld [vmem:[%s3 + $0x78] sm:$0xff]
    %v784 = vld [vmem:[%s5] sm:$0x3]
    %v786 = vlaneseq
    %v787 = vshrl.u32 %v786, 7
    %v788 = vsub.s32 0, %v787
    %v789 = vrot.slane %v784, %v788
    %v790 = vlaneseq
    %v791 = vshrl.u32 %v790, 7
    %v792 = vsub.s32 1, %v791
    %v793 = vrot.slane %v784, %v792
    %v797 = vsel %vm194, %v756, 0
    %799 = vmatprep.subr.mxu0 %v769
    %800 = vmatpush1.msra.mxu0 %v768
    %801 = vmatprep.subr.mxu0 %v771
    %802 = vmatpush1.msra.mxu0 %v770
    %803 = vmatprep.subr.mxu0 %v773
    %804 = vmatpush1.msra.mxu0 %v772
    %805 = vmatprep.subr.mxu0 %v775
    %806 = vmatpush1.msra.mxu0 %v774
    %807 = vmatprep.subr.mxu0 %v777
    %808 = vmatpush1.msra.mxu0 %v776
    %809 = vmatprep.subr.mxu0 %v779
    %810 = vmatpush1.msra.mxu0 %v778
    %811 = vmatprep.subr.mxu0 %v781
    %812 = vmatpush1.msra.mxu0 %v780
    %813 = vmatprep.subr.mxu0 %v783
    %814 = vmatpush1.msra.mxu0 %v782
    %815 = vmatprep.subr.mxu0 0.0
    %816 = vmatpush1.msra.mxu0 0.0
    %817 = vmatprep.subr.mxu0 0.0
    %818 = vmatpush1.msra.mxu0 0.0
    %819 = vmatprep.subr.mxu0 0.0
    %820 = vmatpush1.msra.mxu0 0.0
    %821 = vmatprep.subr.mxu0 0.0
    %822 = vmatpush1.msra.mxu0 0.0
    %823 = vmatprep.subr.mxu0 0.0
    %824 = vmatpush1.msra.mxu0 0.0
    %825 = vmatprep.subr.mxu0 0.0
    %826 = vmatpush1.msra.mxu0 0.0
    %827 = vmatprep.subr.mxu0 0.0
    %828 = vmatpush1.msra.mxu0 0.0
    %829 = vmatprep.subr.mxu0 0.0
    %830 = vmatpush1.msra.mxu0 0.0
    %831 = vmatprep.subr.mxu0 0.0
    %832 = vmatpush1.msra.mxu0 0.0
    %833 = vmatprep.subr.mxu0 0.0
    %834 = vmatpush1.msra.mxu0 0.0
    %835 = vmatprep.subr.mxu0 0.0
    %836 = vmatpush1.msra.mxu0 0.0
    %837 = vmatprep.subr.mxu0 0.0
    %838 = vmatpush1.msra.mxu0 0.0
    %839 = vmatprep.subr.mxu0 0.0
    %840 = vmatpush1.msra.mxu0 0.0
    %841 = vmatprep.subr.mxu0 0.0
    %842 = vmatpush1.msra.mxu0 0.0
    %843 = vmatprep.subr.mxu0 0.0
    %844 = vmatpush1.msra.mxu0 0.0
    %845 = vmatprep.subr.mxu0 0.0
    %846 = vmatpush1.msra.mxu0 0.0
    %847 = vmatprep.subr.mxu0 0.0
    %848 = vmatpush1.msra.mxu0 0.0
    %849 = vmatprep.subr.mxu0 0.0
    %850 = vmatpush1.msra.mxu0 0.0
    %851 = vmatprep.subr.mxu0 0.0
    %852 = vmatpush1.msra.mxu0 0.0
    %853 = vmatprep.subr.mxu0 0.0
    %854 = vmatpush1.msra.mxu0 0.0
    %855 = vmatprep.subr.mxu0 0.0
    %856 = vmatpush1.msra.mxu0 0.0
    %857 = vmatprep.subr.mxu0 0.0
    %858 = vmatpush1.msra.mxu0 0.0
    %859 = vmatprep.subr.mxu0 0.0
    %860 = vmatpush1.msra.mxu0 0.0
    %861 = vmatprep.subr.mxu0 0.0
    %862 = vmatpush1.msra.mxu0 0.0
    %863 = vmatprep.mubr.f32.mxu0 0.0
    %864 = vmatmul.mubr.f32.gmra.mrb[0].mxu0 %v797
    %v865 = vpop.f32.mrb[0].mxu0
    %v866 = vadd.f32 %v789, %v865
    %v867 = vpop.f32.mrb[0].mxu0
    %v868 = vadd.f32 %v793, %v867
    %869 = vdwg.mxu0
    %v870 = vadd.f32 %v763, %v866
    %v871 = vxor.u32 %v870, 2147483648
    %v872 = vmul.f32 %v871, 1.442695
    %v873 = vpow.pop %v872
    %v874 = vadd.f32 %v873, 1.0
    %v875 = vrcp.pop %v874
    %v876 = vmul.f32 1.0, %v875
    %v877 = vmul.f32 %v876, %v868
    %v878 = vadd.f32 %v764, %v877
    %v879 = vtanh.pop %v878
    %v880 = vsub.f32 1.0, %v876
    %882 = vrot.lane.b32.xlu0 %v879, 64
    %v883 = vpop.permute.xlu0 %882
    %v885 = vmul.f32 %v880, %v883
    %886 = vrot.lane.b32.xlu0 %v756, 64
    %v887 = vpop.permute.xlu0 %886
    %v889 = vmul.f32 %v876, %v887
    %v890 = vadd.f32 %v885, %v889
    %892 = vrot.lane.b32.xlu0 %v890, 64
    %v893 = vpop.permute.xlu0 %892
    %v895 = vsel %vm767, %v893, %v756
    %v896 = vsel %vm767, %v893, 0.0
    %s897 = scalar_lea.vmem [#allocation4], 32
    %898 = vst.msk [vmem:[%s897] sm:$0xff] %vm194, %v896
    %s899 = smul.u32 5, 2
    %s900 = smul.addr %s899, 8
    %s901 = scalar_lea.vmem [#allocation3], %s900
    %v902 = vld [vmem:[%s901] sm:$0xff]
    %v903 = vld [vmem:[%s901 + $0x8] sm:$0xff]
    %s904 = scalar_lea.vmem %s0, 40
    %v905 = vld [vmem:[%s904] sm:$0xff]
    %vm906 = vcmp.ne.f32.partialorder %v905, 0.0
    %v907 = vld [vmem:[%s3] sm:$0xff]
    %v908 = vld [vmem:[%s3 + $0x8] sm:$0xff]
    %v909 = vld [vmem:[%s3 + $0x10] sm:$0xff]
    %v910 = vld [vmem:[%s3 + $0x18] sm:$0xff]
    %v911 = vld [vmem:[%s3 + $0x20] sm:$0xff]
    %v912 = vld [vmem:[%s3 + $0x28] sm:$0xff]
    %v913 = vld [vmem:[%s3 + $0x30] sm:$0xff]
    %v914 = vld [vmem:[%s3 + $0x38] sm:$0xff]
    %v915 = vld [vmem:[%s3 + $0x40] sm:$0xff]
    %v916 = vld [vmem:[%s3 + $0x48] sm:$0xff]
    %v917 = vld [vmem:[%s3 + $0x50] sm:$0xff]
    %v918 = vld [vmem:[%s3 + $0x58] sm:$0xff]
    %v919 = vld [vmem:[%s3 + $0x60] sm:$0xff]
    %v920 = vld [vmem:[%s3 + $0x68] sm:$0xff]
    %v921 = vld [vmem:[%s3 + $0x70] sm:$0xff]
    %v922 = vld [vmem:[%s3 + $0x78] sm:$0xff]
    %v923 = vld [vmem:[%s5] sm:$0x3]
    %v925 = vlaneseq
    %v926 = vshrl.u32 %v925, 7
    %v927 = vsub.s32 0, %v926
    %v928 = vrot.slane %v923, %v927
    %v929 = vlaneseq
    %v930 = vshrl.u32 %v929, 7
    %v931 = vsub.s32 1, %v930
    %v932 = vrot.slane %v923, %v931
    %v936 = vsel %vm194, %v895, 0
    %938 = vmatprep.subr.mxu0 %v908
    %939 = vmatpush1.msra.mxu0 %v907
    %940 = vmatprep.subr.mxu0 %v910
    %941 = vmatpush1.msra.mxu0 %v909
    %942 = vmatprep.subr.mxu0 %v912
    %943 = vmatpush1.msra.mxu0 %v911
    %944 = vmatprep.subr.mxu0 %v914
    %945 = vmatpush1.msra.mxu0 %v913
    %946 = vmatprep.subr.mxu0 %v916
    %947 = vmatpush1.msra.mxu0 %v915
    %948 = vmatprep.subr.mxu0 %v918
    %949 = vmatpush1.msra.mxu0 %v917
    %950 = vmatprep.subr.mxu0 %v920
    %951 = vmatpush1.msra.mxu0 %v919
    %952 = vmatprep.subr.mxu0 %v922
    %953 = vmatpush1.msra.mxu0 %v921
    %954 = vmatprep.subr.mxu0 0.0
    %955 = vmatpush1.msra.mxu0 0.0
    %956 = vmatprep.subr.mxu0 0.0
    %957 = vmatpush1.msra.mxu0 0.0
    %958 = vmatprep.subr.mxu0 0.0
    %959 = vmatpush1.msra.mxu0 0.0
    %960 = vmatprep.subr.mxu0 0.0
    %961 = vmatpush1.msra.mxu0 0.0
    %962 = vmatprep.subr.mxu0 0.0
    %963 = vmatpush1.msra.mxu0 0.0
    %964 = vmatprep.subr.mxu0 0.0
    %965 = vmatpush1.msra.mxu0 0.0
    %966 = vmatprep.subr.mxu0 0.0
    %967 = vmatpush1.msra.mxu0 0.0
    %968 = vmatprep.subr.mxu0 0.0
    %969 = vmatpush1.msra.mxu0 0.0
    %970 = vmatprep.subr.mxu0 0.0
    %971 = vmatpush1.msra.mxu0 0.0
    %972 = vmatprep.subr.mxu0 0.0
    %973 = vmatpush1.msra.mxu0 0.0
    %974 = vmatprep.subr.mxu0 0.0
    %975 = vmatpush1.msra.mxu0 0.0
    %976 = vmatprep.subr.mxu0 0.0
    %977 = vmatpush1.msra.mxu0 0.0
    %978 = vmatprep.subr.mxu0 0.0
    %979 = vmatpush1.msra.mxu0 0.0
    %980 = vmatprep.subr.mxu0 0.0
    %981 = vmatpush1.msra.mxu0 0.0
    %982 = vmatprep.subr.mxu0 0.0
    %983 = vmatpush1.msra.mxu0 0.0
    %984 = vmatprep.subr.mxu0 0.0
    %985 = vmatpush1.msra.mxu0 0.0
    %986 = vmatprep.subr.mxu0 0.0
    %987 = vmatpush1.msra.mxu0 0.0
    %988 = vmatprep.subr.mxu0 0.0
    %989 = vmatpush1.msra.mxu0 0.0
    %990 = vmatprep.subr.mxu0 0.0
    %991 = vmatpush1.msra.mxu0 0.0
    %992 = vmatprep.subr.mxu0 0.0
    %993 = vmatpush1.msra.mxu0 0.0
    %994 = vmatprep.subr.mxu0 0.0
    %995 = vmatpush1.msra.mxu0 0.0
    %996 = vmatprep.subr.mxu0 0.0
    %997 = vmatpush1.msra.mxu0 0.0
    %998 = vmatprep.subr.mxu0 0.0
    %999 = vmatpush1.msra.mxu0 0.0
    %1000 = vmatprep.subr.mxu0 0.0
    %1001 = vmatpush1.msra.mxu0 0.0
    %1002 = vmatprep.mubr.f32.mxu0 0.0
    %1003 = vmatmul.mubr.f32.gmra.mrb[0].mxu0 %v936
    %v1004 = vpop.f32.mrb[0].mxu0
    %v1005 = vadd.f32 %v928, %v1004
    %v1006 = vpop.f32.mrb[0].mxu0
    %v1007 = vadd.f32 %v932, %v1006
    %1008 = vdwg.mxu0
    %v1009 = vadd.f32 %v902, %v1005
    %v1010 = vxor.u32 %v1009, 2147483648
    %v1011 = vmul.f32 %v1010, 1.442695
    %v1012 = vpow.pop %v1011
    %v1013 = vadd.f32 %v1012, 1.0
    %v1014 = vrcp.pop %v1013
    %v1015 = vmul.f32 1.0, %v1014
    %v1016 = vmul.f32 %v1015, %v1007
    %v1017 = vadd.f32 %v903, %v1016
    %v1018 = vtanh.pop %v1017
    %v1019 = vsub.f32 1.0, %v1015
    %1021 = vrot.lane.b32.xlu0 %v1018, 64
    %v1022 = vpop.permute.xlu0 %1021
    %v1024 = vmul.f32 %v1019, %v1022
    %1025 = vrot.lane.b32.xlu0 %v895, 64
    %v1026 = vpop.permute.xlu0 %1025
    %v1028 = vmul.f32 %v1015, %v1026
    %v1029 = vadd.f32 %v1024, %v1028
    %1031 = vrot.lane.b32.xlu0 %v1029, 64
    %v1032 = vpop.permute.xlu0 %1031
    %v1034 = vsel %vm906, %v1032, %v895
    %v1035 = vsel %vm906, %v1032, 0.0
    %s1036 = scalar_lea.vmem [#allocation4], 40
    %1037 = vst.msk [vmem:[%s1036] sm:$0xff] %vm194, %v1035
    %s1038 = smul.u32 6, 2
    %s1039 = smul.addr %s1038, 8
    %s1040 = scalar_lea.vmem [#allocation3], %s1039
    %v1041 = vld [vmem:[%s1040] sm:$0xff]
    %v1042 = vld [vmem:[%s1040 + $0x8] sm:$0xff]
    %s1043 = scalar_lea.vmem %s0, 48
    %v1044 = vld [vmem:[%s1043] sm:$0xff]
    %vm1045 = vcmp.ne.f32.partialorder %v1044, 0.0
    %v1046 = vld [vmem:[%s3] sm:$0xff]
    %v1047 = vld [vmem:[%s3 + $0x8] sm:$0xff]
    %v1048 = vld [vmem:[%s3 + $0x10] sm:$0xff]
    %v1049 = vld [vmem:[%s3 + $0x18] sm:$0xff]
    %v1050 = vld [vmem:[%s3 + $0x20] sm:$0xff]
    %v1051 = vld [vmem:[%s3 + $0x28] sm:$0xff]
    %v1052 = vld [vmem:[%s3 + $0x30] sm:$0xff]
    %v1053 = vld [vmem:[%s3 + $0x38] sm:$0xff]
    %v1054 = vld [vmem:[%s3 + $0x40] sm:$0xff]
    %v1055 = vld [vmem:[%s3 + $0x48] sm:$0xff]
    %v1056 = vld [vmem:[%s3 + $0x50] sm:$0xff]
    %v1057 = vld [vmem:[%s3 + $0x58] sm:$0xff]
    %v1058 = vld [vmem:[%s3 + $0x60] sm:$0xff]
    %v1059 = vld [vmem:[%s3 + $0x68] sm:$0xff]
    %v1060 = vld [vmem:[%s3 + $0x70] sm:$0xff]
    %v1061 = vld [vmem:[%s3 + $0x78] sm:$0xff]
    %v1062 = vld [vmem:[%s5] sm:$0x3]
    %v1064 = vlaneseq
    %v1065 = vshrl.u32 %v1064, 7
    %v1066 = vsub.s32 0, %v1065
    %v1067 = vrot.slane %v1062, %v1066
    %v1068 = vlaneseq
    %v1069 = vshrl.u32 %v1068, 7
    %v1070 = vsub.s32 1, %v1069
    %v1071 = vrot.slane %v1062, %v1070
    %v1075 = vsel %vm194, %v1034, 0
    %1077 = vmatprep.subr.mxu0 %v1047
    %1078 = vmatpush1.msra.mxu0 %v1046
    %1079 = vmatprep.subr.mxu0 %v1049
    %1080 = vmatpush1.msra.mxu0 %v1048
    %1081 = vmatprep.subr.mxu0 %v1051
    %1082 = vmatpush1.msra.mxu0 %v1050
    %1083 = vmatprep.subr.mxu0 %v1053
    %1084 = vmatpush1.msra.mxu0 %v1052
    %1085 = vmatprep.subr.mxu0 %v1055
    %1086 = vmatpush1.msra.mxu0 %v1054
    %1087 = vmatprep.subr.mxu0 %v1057
    %1088 = vmatpush1.msra.mxu0 %v1056
    %1089 = vmatprep.subr.mxu0 %v1059
    %1090 = vmatpush1.msra.mxu0 %v1058
    %1091 = vmatprep.subr.mxu0 %v1061
    %1092 = vmatpush1.msra.mxu0 %v1060
    %1093 = vmatprep.subr.mxu0 0.0
    %1094 = vmatpush1.msra.mxu0 0.0
    %1095 = vmatprep.subr.mxu0 0.0
    %1096 = vmatpush1.msra.mxu0 0.0
    %1097 = vmatprep.subr.mxu0 0.0
    %1098 = vmatpush1.msra.mxu0 0.0
    %1099 = vmatprep.subr.mxu0 0.0
    %1100 = vmatpush1.msra.mxu0 0.0
    %1101 = vmatprep.subr.mxu0 0.0
    %1102 = vmatpush1.msra.mxu0 0.0
    %1103 = vmatprep.subr.mxu0 0.0
    %1104 = vmatpush1.msra.mxu0 0.0
    %1105 = vmatprep.subr.mxu0 0.0
    %1106 = vmatpush1.msra.mxu0 0.0
    %1107 = vmatprep.subr.mxu0 0.0
    %1108 = vmatpush1.msra.mxu0 0.0
    %1109 = vmatprep.subr.mxu0 0.0
    %1110 = vmatpush1.msra.mxu0 0.0
    %1111 = vmatprep.subr.mxu0 0.0
    %1112 = vmatpush1.msra.mxu0 0.0
    %1113 = vmatprep.subr.mxu0 0.0
    %1114 = vmatpush1.msra.mxu0 0.0
    %1115 = vmatprep.subr.mxu0 0.0
    %1116 = vmatpush1.msra.mxu0 0.0
    %1117 = vmatprep.subr.mxu0 0.0
    %1118 = vmatpush1.msra.mxu0 0.0
    %1119 = vmatprep.subr.mxu0 0.0
    %1120 = vmatpush1.msra.mxu0 0.0
    %1121 = vmatprep.subr.mxu0 0.0
    %1122 = vmatpush1.msra.mxu0 0.0
    %1123 = vmatprep.subr.mxu0 0.0
    %1124 = vmatpush1.msra.mxu0 0.0
    %1125 = vmatprep.subr.mxu0 0.0
    %1126 = vmatpush1.msra.mxu0 0.0
    %1127 = vmatprep.subr.mxu0 0.0
    %1128 = vmatpush1.msra.mxu0 0.0
    %1129 = vmatprep.subr.mxu0 0.0
    %1130 = vmatpush1.msra.mxu0 0.0
    %1131 = vmatprep.subr.mxu0 0.0
    %1132 = vmatpush1.msra.mxu0 0.0
    %1133 = vmatprep.subr.mxu0 0.0
    %1134 = vmatpush1.msra.mxu0 0.0
    %1135 = vmatprep.subr.mxu0 0.0
    %1136 = vmatpush1.msra.mxu0 0.0
    %1137 = vmatprep.subr.mxu0 0.0
    %1138 = vmatpush1.msra.mxu0 0.0
    %1139 = vmatprep.subr.mxu0 0.0
    %1140 = vmatpush1.msra.mxu0 0.0
    %1141 = vmatprep.mubr.f32.mxu0 0.0
    %1142 = vmatmul.mubr.f32.gmra.mrb[0].mxu0 %v1075
    %v1143 = vpop.f32.mrb[0].mxu0
    %v1144 = vadd.f32 %v1067, %v1143
    %v1145 = vpop.f32.mrb[0].mxu0
    %v1146 = vadd.f32 %v1071, %v1145
    %1147 = vdwg.mxu0
    %v1148 = vadd.f32 %v1041, %v1144
    %v1149 = vxor.u32 %v1148, 2147483648
    %v1150 = vmul.f32 %v1149, 1.442695
    %v1151 = vpow.pop %v1150
    %v1152 = vadd.f32 %v1151, 1.0
    %v1153 = vrcp.pop %v1152
    %v1154 = vmul.f32 1.0, %v1153
    %v1155 = vmul.f32 %v1154, %v1146
    %v1156 = vadd.f32 %v1042, %v1155
    %v1157 = vtanh.pop %v1156
    %v1158 = vsub.f32 1.0, %v1154
    %1160 = vrot.lane.b32.xlu0 %v1157, 64
    %v1161 = vpop.permute.xlu0 %1160
    %v1163 = vmul.f32 %v1158, %v1161
    %1164 = vrot.lane.b32.xlu0 %v1034, 64
    %v1165 = vpop.permute.xlu0 %1164
    %v1167 = vmul.f32 %v1154, %v1165
    %v1168 = vadd.f32 %v1163, %v1167
    %1170 = vrot.lane.b32.xlu0 %v1168, 64
    %v1171 = vpop.permute.xlu0 %1170
    %v1173 = vsel %vm1045, %v1171, %v1034
    %v1174 = vsel %vm1045, %v1171, 0.0
    %s1175 = scalar_lea.vmem [#allocation4], 48
    %1176 = vst.msk [vmem:[%s1175] sm:$0xff] %vm194, %v1174
    %s1177 = smul.u32 7, 2
    %s1178 = smul.addr %s1177, 8
    %s1179 = scalar_lea.vmem [#allocation3], %s1178
    %v1180 = vld [vmem:[%s1179] sm:$0xff]
    %v1181 = vld [vmem:[%s1179 + $0x8] sm:$0xff]
    %s1182 = scalar_lea.vmem %s0, 56
    %v1183 = vld [vmem:[%s1182] sm:$0xff]
    %vm1184 = vcmp.ne.f32.partialorder %v1183, 0.0
    %v1185 = vld [vmem:[%s3] sm:$0xff]
    %v1186 = vld [vmem:[%s3 + $0x8] sm:$0xff]
    %v1187 = vld [vmem:[%s3 + $0x10] sm:$0xff]
    %v1188 = vld [vmem:[%s3 + $0x18] sm:$0xff]
    %v1189 = vld [vmem:[%s3 + $0x20] sm:$0xff]
    %v1190 = vld [vmem:[%s3 + $0x28] sm:$0xff]
    %v1191 = vld [vmem:[%s3 + $0x30] sm:$0xff]
    %v1192 = vld [vmem:[%s3 + $0x38] sm:$0xff]
    %v1193 = vld [vmem:[%s3 + $0x40] sm:$0xff]
    %v1194 = vld [vmem:[%s3 + $0x48] sm:$0xff]
    %v1195 = vld [vmem:[%s3 + $0x50] sm:$0xff]
    %v1196 = vld [vmem:[%s3 + $0x58] sm:$0xff]
    %v1197 = vld [vmem:[%s3 + $0x60] sm:$0xff]
    %v1198 = vld [vmem:[%s3 + $0x68] sm:$0xff]
    %v1199 = vld [vmem:[%s3 + $0x70] sm:$0xff]
    %v1200 = vld [vmem:[%s3 + $0x78] sm:$0xff]
    %v1201 = vld [vmem:[%s5] sm:$0x3]
    %v1203 = vlaneseq
    %v1204 = vshrl.u32 %v1203, 7
    %v1205 = vsub.s32 0, %v1204
    %v1206 = vrot.slane %v1201, %v1205
    %v1207 = vlaneseq
    %v1208 = vshrl.u32 %v1207, 7
    %v1209 = vsub.s32 1, %v1208
    %v1210 = vrot.slane %v1201, %v1209
    %v1214 = vsel %vm194, %v1173, 0
    %1216 = vmatprep.subr.mxu0 %v1186
    %1217 = vmatpush1.msra.mxu0 %v1185
    %1218 = vmatprep.subr.mxu0 %v1188
    %1219 = vmatpush1.msra.mxu0 %v1187
    %1220 = vmatprep.subr.mxu0 %v1190
    %1221 = vmatpush1.msra.mxu0 %v1189
    %1222 = vmatprep.subr.mxu0 %v1192
    %1223 = vmatpush1.msra.mxu0 %v1191
    %1224 = vmatprep.subr.mxu0 %v1194
    %1225 = vmatpush1.msra.mxu0 %v1193
    %1226 = vmatprep.subr.mxu0 %v1196
    %1227 = vmatpush1.msra.mxu0 %v1195
    %1228 = vmatprep.subr.mxu0 %v1198
    %1229 = vmatpush1.msra.mxu0 %v1197
    %1230 = vmatprep.subr.mxu0 %v1200
    %1231 = vmatpush1.msra.mxu0 %v1199
    %1232 = vmatprep.subr.mxu0 0.0
    %1233 = vmatpush1.msra.mxu0 0.0
    %1234 = vmatprep.subr.mxu0 0.0
    %1235 = vmatpush1.msra.mxu0 0.0
    %1236 = vmatprep.subr.mxu0 0.0
    %1237 = vmatpush1.msra.mxu0 0.0
    %1238 = vmatprep.subr.mxu0 0.0
    %1239 = vmatpush1.msra.mxu0 0.0
    %1240 = vmatprep.subr.mxu0 0.0
    %1241 = vmatpush1.msra.mxu0 0.0
    %1242 = vmatprep.subr.mxu0 0.0
    %1243 = vmatpush1.msra.mxu0 0.0
    %1244 = vmatprep.subr.mxu0 0.0
    %1245 = vmatpush1.msra.mxu0 0.0
    %1246 = vmatprep.subr.mxu0 0.0
    %1247 = vmatpush1.msra.mxu0 0.0
    %1248 = vmatprep.subr.mxu0 0.0
    %1249 = vmatpush1.msra.mxu0 0.0
    %1250 = vmatprep.subr.mxu0 0.0
    %1251 = vmatpush1.msra.mxu0 0.0
    %1252 = vmatprep.subr.mxu0 0.0
    %1253 = vmatpush1.msra.mxu0 0.0
    %1254 = vmatprep.subr.mxu0 0.0
    %1255 = vmatpush1.msra.mxu0 0.0
    %1256 = vmatprep.subr.mxu0 0.0
    %1257 = vmatpush1.msra.mxu0 0.0
    %1258 = vmatprep.subr.mxu0 0.0
    %1259 = vmatpush1.msra.mxu0 0.0
    %1260 = vmatprep.subr.mxu0 0.0
    %1261 = vmatpush1.msra.mxu0 0.0
    %1262 = vmatprep.subr.mxu0 0.0
    %1263 = vmatpush1.msra.mxu0 0.0
    %1264 = vmatprep.subr.mxu0 0.0
    %1265 = vmatpush1.msra.mxu0 0.0
    %1266 = vmatprep.subr.mxu0 0.0
    %1267 = vmatpush1.msra.mxu0 0.0
    %1268 = vmatprep.subr.mxu0 0.0
    %1269 = vmatpush1.msra.mxu0 0.0
    %1270 = vmatprep.subr.mxu0 0.0
    %1271 = vmatpush1.msra.mxu0 0.0
    %1272 = vmatprep.subr.mxu0 0.0
    %1273 = vmatpush1.msra.mxu0 0.0
    %1274 = vmatprep.subr.mxu0 0.0
    %1275 = vmatpush1.msra.mxu0 0.0
    %1276 = vmatprep.subr.mxu0 0.0
    %1277 = vmatpush1.msra.mxu0 0.0
    %1278 = vmatprep.subr.mxu0 0.0
    %1279 = vmatpush1.msra.mxu0 0.0
    %1280 = vmatprep.mubr.f32.mxu0 0.0
    %1281 = vmatmul.mubr.f32.gmra.mrb[0].mxu0 %v1214
    %v1282 = vpop.f32.mrb[0].mxu0
    %v1283 = vadd.f32 %v1206, %v1282
    %v1284 = vpop.f32.mrb[0].mxu0
    %v1285 = vadd.f32 %v1210, %v1284
    %1286 = vdwg.mxu0
    %v1287 = vadd.f32 %v1180, %v1283
    %v1288 = vxor.u32 %v1287, 2147483648
    %v1289 = vmul.f32 %v1288, 1.442695
    %v1290 = vpow.pop %v1289
    %v1291 = vadd.f32 %v1290, 1.0
    %v1292 = vrcp.pop %v1291
    %v1293 = vmul.f32 1.0, %v1292
    %v1294 = vmul.f32 %v1293, %v1285
    %v1295 = vadd.f32 %v1181, %v1294
    %v1296 = vtanh.pop %v1295
    %v1297 = vsub.f32 1.0, %v1293
    %1299 = vrot.lane.b32.xlu0 %v1296, 64
    %v1300 = vpop.permute.xlu0 %1299
    %v1302 = vmul.f32 %v1297, %v1300
    %1303 = vrot.lane.b32.xlu0 %v1173, 64
    %v1304 = vpop.permute.xlu0 %1303
    %v1306 = vmul.f32 %v1293, %v1304
    %v1307 = vadd.f32 %v1302, %v1306
    %1309 = vrot.lane.b32.xlu0 %v1307, 64
    %v1310 = vpop.permute.xlu0 %1309
    %v1312 = vsel %vm1184, %v1310, %v1173
    %v1313 = vsel %vm1184, %v1310, 0.0
    %s1314 = scalar_lea.vmem [#allocation4], 56
    %1315 = vst.msk [vmem:[%s1314] sm:$0xff] %vm194, %v1313
    %v1316 = vadd.f32 %v1312, 0.0
    %1318 = vrot.lane.b32.xlu0 %v1312, 96
    %v1319 = vpop.permute.xlu0 %1318
    %v1321 = vadd.f32 %v1316, %v1319
    loop: start=0, step=1, limit=8
    $region26: #{tpu_custom_call.1} parent=1 // loop_pre_header
      _
    $region27: #{tpu_custom_call.1} parent=1 // loop_header
      %s1323 = sphi 0, %s1327
      %p1324 = scmp.ge.s32.totalorder %s1323, 8
    $region28: #{tpu_custom_call.1} parent=1 // loop_header_branch
      %1326 = sbr.rel (%p1324) target = $region32
    $region29: #{tpu_custom_call.1} parent=1 // loop_body
      %s1328 = smul.u32 %s1323, 8
      %s1329 = ssub.s32 7, %s1323
      %s1330 = smul.u32 %s1329, 8
      %s1331 = scalar_lea.vmem [#allocation4], %s1328
      %v1332 = vld [vmem:[%s1331] sm:$0xff]
      %s1333 = scalar_lea.vmem [#allocation4], %s1330
      %v1334 = vld [vmem:[%s1333] sm:$0xff]
      %1336 = vrot.lane.b32.xlu0 %v1334, 64
      %v1337 = vpop.permute.xlu0 %1336
      %v1339 = vsel %vm194, %v1332, %v1337
      %s1340 = scalar_lea.vmem [#allocation2], %s1328
      %1341 = vst [vmem:[%s1340] sm:$0xff] %v1339
    $region30: #{tpu_custom_call.1} parent=1 // loop_footer
      %s1327 = sadd.s32 1, %s1323
    $region31: #{tpu_custom_call.1} parent=1 // loop_footer_branch
      %1322 = sbr.rel target = $region27
    $region32: #{tpu_custom_call.1} parent=1 // loop_exit
      _
    %v1342 = vld [vmem:[#allocation2] sm:$0xff]
    %v1343 = vld [vmem:[#allocation2 + $0x8] sm:$0xff]
    %v1344 = vld [vmem:[#allocation2 + $0x10] sm:$0xff]
    %v1345 = vld [vmem:[#allocation2 + $0x18] sm:$0xff]
    %v1346 = vld [vmem:[#allocation2 + $0x20] sm:$0xff]
    %v1347 = vld [vmem:[#allocation2 + $0x28] sm:$0xff]
    %v1348 = vld [vmem:[#allocation2 + $0x30] sm:$0xff]
    %v1349 = vld [vmem:[#allocation2 + $0x38] sm:$0xff]
    %s1350 = scalar_lea.vmem %s2, 256
    %v1351 = vld [vmem:[%s1350] sm:$0xff]
    %v1352 = vld [vmem:[%s1350 + $0x8] sm:$0xff]
    %v1353 = vld [vmem:[%s1350 + $0x10] sm:$0xff]
    %v1354 = vld [vmem:[%s1350 + $0x18] sm:$0xff]
    %v1355 = vld [vmem:[%s1350 + $0x20] sm:$0xff]
    %v1356 = vld [vmem:[%s1350 + $0x28] sm:$0xff]
    %v1357 = vld [vmem:[%s1350 + $0x30] sm:$0xff]
    %v1358 = vld [vmem:[%s1350 + $0x38] sm:$0xff]
    %v1359 = vld [vmem:[%s1350 + $0x40] sm:$0xff]
    %v1360 = vld [vmem:[%s1350 + $0x48] sm:$0xff]
    %v1361 = vld [vmem:[%s1350 + $0x50] sm:$0xff]
    %v1362 = vld [vmem:[%s1350 + $0x58] sm:$0xff]
    %v1363 = vld [vmem:[%s1350 + $0x60] sm:$0xff]
    %v1364 = vld [vmem:[%s1350 + $0x68] sm:$0xff]
    %v1365 = vld [vmem:[%s1350 + $0x70] sm:$0xff]
    %v1366 = vld [vmem:[%s1350 + $0x78] sm:$0xff]
    %v1367 = vld [vmem:[%s1350 + $0x80] sm:$0xff]
    %v1368 = vld [vmem:[%s1350 + $0x88] sm:$0xff]
    %v1369 = vld [vmem:[%s1350 + $0x90] sm:$0xff]
    %v1370 = vld [vmem:[%s1350 + $0x98] sm:$0xff]
    %v1371 = vld [vmem:[%s1350 + $0xa0] sm:$0xff]
    %v1372 = vld [vmem:[%s1350 + $0xa8] sm:$0xff]
    %v1373 = vld [vmem:[%s1350 + $0xb0] sm:$0xff]
    %v1374 = vld [vmem:[%s1350 + $0xb8] sm:$0xff]
    %v1375 = vld [vmem:[%s1350 + $0xc0] sm:$0xff]
    %v1376 = vld [vmem:[%s1350 + $0xc8] sm:$0xff]
    %v1377 = vld [vmem:[%s1350 + $0xd0] sm:$0xff]
    %v1378 = vld [vmem:[%s1350 + $0xd8] sm:$0xff]
    %v1379 = vld [vmem:[%s1350 + $0xe0] sm:$0xff]
    %v1380 = vld [vmem:[%s1350 + $0xe8] sm:$0xff]
    %v1381 = vld [vmem:[%s1350 + $0xf0] sm:$0xff]
    %v1382 = vld [vmem:[%s1350 + $0xf8] sm:$0xff]
    %s1383 = scalar_lea.vmem %s4, 2
    %v1384 = vld [vmem:[%s1383] sm:$0x3]
    %v1386 = vlaneseq
    %v1387 = vshrl.u32 %v1386, 7
    %v1388 = vsub.s32 0, %v1387
    %v1389 = vrot.slane %v1384, %v1388
    %v1390 = vlaneseq
    %v1391 = vshrl.u32 %v1390, 7
    %v1392 = vsub.s32 1, %v1391
    %v1393 = vrot.slane %v1384, %v1392
    %1396 = vmatprep.subr.mxu0 %v1352
    %1397 = vmatpush1.msra.mxu0 %v1351
    %1398 = vmatprep.subr.mxu0 %v1354
    %1399 = vmatpush1.msra.mxu0 %v1353
    %1400 = vmatprep.subr.mxu0 %v1356
    %1401 = vmatpush1.msra.mxu0 %v1355
    %1402 = vmatprep.subr.mxu0 %v1358
    %1403 = vmatpush1.msra.mxu0 %v1357
    %1404 = vmatprep.subr.mxu0 %v1360
    %1405 = vmatpush1.msra.mxu0 %v1359
    %1406 = vmatprep.subr.mxu0 %v1362
    %1407 = vmatpush1.msra.mxu0 %v1361
    %1408 = vmatprep.subr.mxu0 %v1364
    %1409 = vmatpush1.msra.mxu0 %v1363
    %1410 = vmatprep.subr.mxu0 %v1366
    %1411 = vmatpush1.msra.mxu0 %v1365
    %1412 = vmatprep.subr.mxu0 %v1368
    %1413 = vmatpush1.msra.mxu0 %v1367
    %1414 = vmatprep.subr.mxu0 %v1370
    %1415 = vmatpush1.msra.mxu0 %v1369
    %1416 = vmatprep.subr.mxu0 %v1372
    %1417 = vmatpush1.msra.mxu0 %v1371
    %1418 = vmatprep.subr.mxu0 %v1374
    %1419 = vmatpush1.msra.mxu0 %v1373
    %1420 = vmatprep.subr.mxu0 %v1376
    %1421 = vmatpush1.msra.mxu0 %v1375
    %1422 = vmatprep.subr.mxu0 %v1378
    %1423 = vmatpush1.msra.mxu0 %v1377
    %1424 = vmatprep.subr.mxu0 %v1380
    %1425 = vmatpush1.msra.mxu0 %v1379
    %1426 = vmatprep.subr.mxu0 %v1382
    %1427 = vmatpush1.msra.mxu0 %v1381
    %1428 = vmatprep.subr.mxu0 0.0
    %1429 = vmatpush1.msra.mxu0 0.0
    %1430 = vmatprep.subr.mxu0 0.0
    %1431 = vmatpush1.msra.mxu0 0.0
    %1432 = vmatprep.subr.mxu0 0.0
    %1433 = vmatpush1.msra.mxu0 0.0
    %1434 = vmatprep.subr.mxu0 0.0
    %1435 = vmatpush1.msra.mxu0 0.0
    %1436 = vmatprep.subr.mxu0 0.0
    %1437 = vmatpush1.msra.mxu0 0.0
    %1438 = vmatprep.subr.mxu0 0.0
    %1439 = vmatpush1.msra.mxu0 0.0
    %1440 = vmatprep.subr.mxu0 0.0
    %1441 = vmatpush1.msra.mxu0 0.0
    %1442 = vmatprep.subr.mxu0 0.0
    %1443 = vmatpush1.msra.mxu0 0.0
    %1444 = vmatprep.subr.mxu0 0.0
    %1445 = vmatpush1.msra.mxu0 0.0
    %1446 = vmatprep.subr.mxu0 0.0
    %1447 = vmatpush1.msra.mxu0 0.0
    %1448 = vmatprep.subr.mxu0 0.0
    %1449 = vmatpush1.msra.mxu0 0.0
    %1450 = vmatprep.subr.mxu0 0.0
    %1451 = vmatpush1.msra.mxu0 0.0
    %1452 = vmatprep.subr.mxu0 0.0
    %1453 = vmatpush1.msra.mxu0 0.0
    %1454 = vmatprep.subr.mxu0 0.0
    %1455 = vmatpush1.msra.mxu0 0.0
    %1456 = vmatprep.subr.mxu0 0.0
    %1457 = vmatpush1.msra.mxu0 0.0
    %1458 = vmatprep.subr.mxu0 0.0
    %1459 = vmatpush1.msra.mxu0 0.0
    %1460 = vmatprep.mubr.f32.mxu0 0.0
    %1461 = vmatmul.mubr.f32.gmra.mrb[0].mxu0 %v1342
    %v1462 = vpop.f32.mrb[0].mxu0
    %v1463 = vadd.f32 %v1389, %v1462
    %v1464 = vpop.f32.mrb[0].mxu0
    %v1465 = vadd.f32 %v1393, %v1464
    %1466 = vmatprep.mubr.f32.mxu0 0.0
    %1467 = vmatmul.mubr.f32.gmra.mrb[0].mxu0 %v1343
    %v1468 = vpop.f32.mrb[0].mxu0
    %v1469 = vadd.f32 %v1389, %v1468
    %v1470 = vpop.f32.mrb[0].mxu0
    %v1471 = vadd.f32 %v1393, %v1470
    %1472 = vmatprep.mubr.f32.mxu0 0.0
    %1473 = vmatmul.mubr.f32.gmra.mrb[0].mxu0 %v1344
    %v1474 = vpop.f32.mrb[0].mxu0
    %v1475 = vadd.f32 %v1389, %v1474
    %v1476 = vpop.f32.mrb[0].mxu0
    %v1477 = vadd.f32 %v1393, %v1476
    %1478 = vmatprep.mubr.f32.mxu0 0.0
    %1479 = vmatmul.mubr.f32.gmra.mrb[0].mxu0 %v1345
    %v1480 = vpop.f32.mrb[0].mxu0
    %v1481 = vadd.f32 %v1389, %v1480
    %v1482 = vpop.f32.mrb[0].mxu0
    %v1483 = vadd.f32 %v1393, %v1482
    %1484 = vmatprep.mubr.f32.mxu0 0.0
    %1485 = vmatmul.mubr.f32.gmra.mrb[0].mxu0 %v1346
    %v1486 = vpop.f32.mrb[0].mxu0
    %v1487 = vadd.f32 %v1389, %v1486
    %v1488 = vpop.f32.mrb[0].mxu0
    %v1489 = vadd.f32 %v1393, %v1488
    %1490 = vmatprep.mubr.f32.mxu0 0.0
    %1491 = vmatmul.mubr.f32.gmra.mrb[0].mxu0 %v1347
    %v1492 = vpop.f32.mrb[0].mxu0
    %v1493 = vadd.f32 %v1389, %v1492
    %v1494 = vpop.f32.mrb[0].mxu0
    %v1495 = vadd.f32 %v1393, %v1494
    %1496 = vmatprep.mubr.f32.mxu0 0.0
    %1497 = vmatmul.mubr.f32.gmra.mrb[0].mxu0 %v1348
    %v1498 = vpop.f32.mrb[0].mxu0
    %v1499 = vadd.f32 %v1389, %v1498
    %v1500 = vpop.f32.mrb[0].mxu0
    %v1501 = vadd.f32 %v1393, %v1500
    %1502 = vmatprep.mubr.f32.mxu0 0.0
    %1503 = vmatmul.mubr.f32.gmra.mrb[0].mxu0 %v1349
    %v1504 = vpop.f32.mrb[0].mxu0
    %v1505 = vadd.f32 %v1389, %v1504
    %v1506 = vpop.f32.mrb[0].mxu0
    %v1507 = vadd.f32 %v1393, %v1506
    %1508 = vdwg.mxu0
    %1509 = vst [vmem:[#allocation3] sm:$0xff] %v1463
    %1510 = vst.msk [vmem:[#allocation3 + $0x8] sm:$0xff] %vm194, %v1465
    %1511 = vst [vmem:[#allocation3 + $0x10] sm:$0xff] %v1469
    %1512 = vst.msk [vmem:[#allocation3 + $0x18] sm:$0xff] %vm194, %v1471
    %1513 = vst [vmem:[#allocation3 + $0x20] sm:$0xff] %v1475
    %1514 = vst.msk [vmem:[#allocation3 + $0x28] sm:$0xff] %vm194, %v1477
    %1515 = vst [vmem:[#allocation3 + $0x30] sm:$0xff] %v1481
    %1516 = vst.msk [vmem:[#allocation3 + $0x38] sm:$0xff] %vm194, %v1483
    %1517 = vst [vmem:[#allocation3 + $0x40] sm:$0xff] %v1487
    %1518 = vst.msk [vmem:[#allocation3 + $0x48] sm:$0xff] %vm194, %v1489
    %1519 = vst [vmem:[#allocation3 + $0x50] sm:$0xff] %v1493
    %1520 = vst.msk [vmem:[#allocation3 + $0x58] sm:$0xff] %vm194, %v1495
    %1521 = vst [vmem:[#allocation3 + $0x60] sm:$0xff] %v1499
    %1522 = vst.msk [vmem:[#allocation3 + $0x68] sm:$0xff] %vm194, %v1501
    %1523 = vst [vmem:[#allocation3 + $0x70] sm:$0xff] %v1505
    %1524 = vst.msk [vmem:[#allocation3 + $0x78] sm:$0xff] %vm194, %v1507
    %v1525 = vld [vmem:[%s212] sm:$0xff]
    %v1526 = vld [vmem:[%s212 + $0x8] sm:$0xff]
    %v1527 = vld [vmem:[%s0] sm:$0xff]
    %vm1528 = vcmp.ne.f32.partialorder %v1527, 0.0
    %s1529 = scalar_lea.vmem %s3, 128
    %v1530 = vld [vmem:[%s1529] sm:$0xff]
    %v1531 = vld [vmem:[%s1529 + $0x8] sm:$0xff]
    %v1532 = vld [vmem:[%s1529 + $0x10] sm:$0xff]
    %v1533 = vld [vmem:[%s1529 + $0x18] sm:$0xff]
    %v1534 = vld [vmem:[%s1529 + $0x20] sm:$0xff]
    %v1535 = vld [vmem:[%s1529 + $0x28] sm:$0xff]
    %v1536 = vld [vmem:[%s1529 + $0x30] sm:$0xff]
    %v1537 = vld [vmem:[%s1529 + $0x38] sm:$0xff]
    %v1538 = vld [vmem:[%s1529 + $0x40] sm:$0xff]
    %v1539 = vld [vmem:[%s1529 + $0x48] sm:$0xff]
    %v1540 = vld [vmem:[%s1529 + $0x50] sm:$0xff]
    %v1541 = vld [vmem:[%s1529 + $0x58] sm:$0xff]
    %v1542 = vld [vmem:[%s1529 + $0x60] sm:$0xff]
    %v1543 = vld [vmem:[%s1529 + $0x68] sm:$0xff]
    %v1544 = vld [vmem:[%s1529 + $0x70] sm:$0xff]
    %v1545 = vld [vmem:[%s1529 + $0x78] sm:$0xff]
    %s1546 = scalar_lea.vmem %s5, 2
    %v1547 = vld [vmem:[%s1546] sm:$0x3]
    %v1549 = vlaneseq
    %v1550 = vshrl.u32 %v1549, 7
    %v1551 = vsub.s32 0, %v1550
    %v1552 = vrot.slane %v1547, %v1551
    %v1553 = vlaneseq
    %v1554 = vshrl.u32 %v1553, 7
    %v1555 = vsub.s32 1, %v1554
    %v1556 = vrot.slane %v1547, %v1555
    %1559 = vmatprep.subr.mxu0 %v1531
    %1560 = vmatpush1.msra.mxu0 %v1530
    %1561 = vmatprep.subr.mxu0 %v1533
    %1562 = vmatpush1.msra.mxu0 %v1532
    %1563 = vmatprep.subr.mxu0 %v1535
    %1564 = vmatpush1.msra.mxu0 %v1534
    %1565 = vmatprep.subr.mxu0 %v1537
    %1566 = vmatpush1.msra.mxu0 %v1536
    %1567 = vmatprep.subr.mxu0 %v1539
    %1568 = vmatpush1.msra.mxu0 %v1538
    %1569 = vmatprep.subr.mxu0 %v1541
    %1570 = vmatpush1.msra.mxu0 %v1540
    %1571 = vmatprep.subr.mxu0 %v1543
    %1572 = vmatpush1.msra.mxu0 %v1542
    %1573 = vmatprep.subr.mxu0 %v1545
    %1574 = vmatpush1.msra.mxu0 %v1544
    %1575 = vmatprep.subr.mxu0 0.0
    %1576 = vmatpush1.msra.mxu0 0.0
    %1577 = vmatprep.subr.mxu0 0.0
    %1578 = vmatpush1.msra.mxu0 0.0
    %1579 = vmatprep.subr.mxu0 0.0
    %1580 = vmatpush1.msra.mxu0 0.0
    %1581 = vmatprep.subr.mxu0 0.0
    %1582 = vmatpush1.msra.mxu0 0.0
    %1583 = vmatprep.subr.mxu0 0.0
    %1584 = vmatpush1.msra.mxu0 0.0
    %1585 = vmatprep.subr.mxu0 0.0
    %1586 = vmatpush1.msra.mxu0 0.0
    %1587 = vmatprep.subr.mxu0 0.0
    %1588 = vmatpush1.msra.mxu0 0.0
    %1589 = vmatprep.subr.mxu0 0.0
    %1590 = vmatpush1.msra.mxu0 0.0
    %1591 = vmatprep.subr.mxu0 0.0
    %1592 = vmatpush1.msra.mxu0 0.0
    %1593 = vmatprep.subr.mxu0 0.0
    %1594 = vmatpush1.msra.mxu0 0.0
    %1595 = vmatprep.subr.mxu0 0.0
    %1596 = vmatpush1.msra.mxu0 0.0
    %1597 = vmatprep.subr.mxu0 0.0
    %1598 = vmatpush1.msra.mxu0 0.0
    %1599 = vmatprep.subr.mxu0 0.0
    %1600 = vmatpush1.msra.mxu0 0.0
    %1601 = vmatprep.subr.mxu0 0.0
    %1602 = vmatpush1.msra.mxu0 0.0
    %1603 = vmatprep.subr.mxu0 0.0
    %1604 = vmatpush1.msra.mxu0 0.0
    %1605 = vmatprep.subr.mxu0 0.0
    %1606 = vmatpush1.msra.mxu0 0.0
    %1607 = vmatprep.subr.mxu0 0.0
    %1608 = vmatpush1.msra.mxu0 0.0
    %1609 = vmatprep.subr.mxu0 0.0
    %1610 = vmatpush1.msra.mxu0 0.0
    %1611 = vmatprep.subr.mxu0 0.0
    %1612 = vmatpush1.msra.mxu0 0.0
    %1613 = vmatprep.subr.mxu0 0.0
    %1614 = vmatpush1.msra.mxu0 0.0
    %1615 = vmatprep.subr.mxu0 0.0
    %1616 = vmatpush1.msra.mxu0 0.0
    %1617 = vmatprep.subr.mxu0 0.0
    %1618 = vmatpush1.msra.mxu0 0.0
    %1619 = vmatprep.subr.mxu0 0.0
    %1620 = vmatpush1.msra.mxu0 0.0
    %1621 = vmatprep.subr.mxu0 0.0
    %1622 = vmatpush1.msra.mxu0 0.0
    %1623 = vmatprep.mubr.f32.mxu0 0.0
    %1624 = vmatmul.mubr.f32.gmra.mrb[0].mxu0 %v246
    %v1625 = vpop.f32.mrb[0].mxu0
    %v1626 = vadd.f32 %v1552, %v1625
    %v1627 = vpop.f32.mrb[0].mxu0
    %v1628 = vadd.f32 %v1556, %v1627
    %1629 = vdwg.mxu0
    %v1630 = vadd.f32 %v1525, %v1626
    %v1631 = vxor.u32 %v1630, 2147483648
    %v1632 = vmul.f32 %v1631, 1.442695
    %v1633 = vpow.pop %v1632
    %v1634 = vadd.f32 %v1633, 1.0
    %v1635 = vrcp.pop %v1634
    %v1636 = vmul.f32 1.0, %v1635
    %v1637 = vmul.f32 %v1636, %v1628
    %v1638 = vadd.f32 %v1526, %v1637
    %v1639 = vtanh.pop %v1638
    %v1640 = vsub.f32 1.0, %v1636
    %1642 = vrot.lane.b32.xlu0 %v1639, 64
    %v1643 = vpop.permute.xlu0 %1642
    %v1645 = vmul.f32 %v1640, %v1643
    %v1646 = vmul.f32 %v1636, 0.0
    %v1647 = vadd.f32 %v1645, %v1646
    %1649 = vrot.lane.b32.xlu0 %v1647, 64
    %v1650 = vpop.permute.xlu0 %1649
    %v1652 = vsel %vm1528, %v1650, 0.0
    %1653 = vst.msk [vmem:[#allocation4] sm:$0xff] %vm194, %v1652
    %v1654 = vld [vmem:[%s345] sm:$0xff]
    %v1655 = vld [vmem:[%s345 + $0x8] sm:$0xff]
    %v1656 = vld [vmem:[%s348] sm:$0xff]
    %vm1657 = vcmp.ne.f32.partialorder %v1656, 0.0
    %v1658 = vld [vmem:[%s1529] sm:$0xff]
    %v1659 = vld [vmem:[%s1529 + $0x8] sm:$0xff]
    %v1660 = vld [vmem:[%s1529 + $0x10] sm:$0xff]
    %v1661 = vld [vmem:[%s1529 + $0x18] sm:$0xff]
    %v1662 = vld [vmem:[%s1529 + $0x20] sm:$0xff]
    %v1663 = vld [vmem:[%s1529 + $0x28] sm:$0xff]
    %v1664 = vld [vmem:[%s1529 + $0x30] sm:$0xff]
    %v1665 = vld [vmem:[%s1529 + $0x38] sm:$0xff]
    %v1666 = vld [vmem:[%s1529 + $0x40] sm:$0xff]
    %v1667 = vld [vmem:[%s1529 + $0x48] sm:$0xff]
    %v1668 = vld [vmem:[%s1529 + $0x50] sm:$0xff]
    %v1669 = vld [vmem:[%s1529 + $0x58] sm:$0xff]
    %v1670 = vld [vmem:[%s1529 + $0x60] sm:$0xff]
    %v1671 = vld [vmem:[%s1529 + $0x68] sm:$0xff]
    %v1672 = vld [vmem:[%s1529 + $0x70] sm:$0xff]
    %v1673 = vld [vmem:[%s1529 + $0x78] sm:$0xff]
    %v1674 = vld [vmem:[%s1546] sm:$0x3]
    %v1676 = vlaneseq
    %v1677 = vshrl.u32 %v1676, 7
    %v1678 = vsub.s32 0, %v1677
    %v1679 = vrot.slane %v1674, %v1678
    %v1680 = vlaneseq
    %v1681 = vshrl.u32 %v1680, 7
    %v1682 = vsub.s32 1, %v1681
    %v1683 = vrot.slane %v1674, %v1682
    %v1687 = vsel %vm194, %v1652, 0
    %1689 = vmatprep.subr.mxu0 %v1659
    %1690 = vmatpush1.msra.mxu0 %v1658
    %1691 = vmatprep.subr.mxu0 %v1661
    %1692 = vmatpush1.msra.mxu0 %v1660
    %1693 = vmatprep.subr.mxu0 %v1663
    %1694 = vmatpush1.msra.mxu0 %v1662
    %1695 = vmatprep.subr.mxu0 %v1665
    %1696 = vmatpush1.msra.mxu0 %v1664
    %1697 = vmatprep.subr.mxu0 %v1667
    %1698 = vmatpush1.msra.mxu0 %v1666
    %1699 = vmatprep.subr.mxu0 %v1669
    %1700 = vmatpush1.msra.mxu0 %v1668
    %1701 = vmatprep.subr.mxu0 %v1671
    %1702 = vmatpush1.msra.mxu0 %v1670
    %1703 = vmatprep.subr.mxu0 %v1673
    %1704 = vmatpush1.msra.mxu0 %v1672
    %1705 = vmatprep.subr.mxu0 0.0
    %1706 = vmatpush1.msra.mxu0 0.0
    %1707 = vmatprep.subr.mxu0 0.0
    %1708 = vmatpush1.msra.mxu0 0.0
    %1709 = vmatprep.subr.mxu0 0.0
    %1710 = vmatpush1.msra.mxu0 0.0
    %1711 = vmatprep.subr.mxu0 0.0
    %1712 = vmatpush1.msra.mxu0 0.0
    %1713 = vmatprep.subr.mxu0 0.0
    %1714 = vmatpush1.msra.mxu0 0.0
    %1715 = vmatprep.subr.mxu0 0.0
    %1716 = vmatpush1.msra.mxu0 0.0
    %1717 = vmatprep.subr.mxu0 0.0
    %1718 = vmatpush1.msra.mxu0 0.0
    %1719 = vmatprep.subr.mxu0 0.0
    %1720 = vmatpush1.msra.mxu0 0.0
    %1721 = vmatprep.subr.mxu0 0.0
    %1722 = vmatpush1.msra.mxu0 0.0
    %1723 = vmatprep.subr.mxu0 0.0
    %1724 = vmatpush1.msra.mxu0 0.0
    %1725 = vmatprep.subr.mxu0 0.0
    %1726 = vmatpush1.msra.mxu0 0.0
    %1727 = vmatprep.subr.mxu0 0.0
    %1728 = vmatpush1.msra.mxu0 0.0
    %1729 = vmatprep.subr.mxu0 0.0
    %1730 = vmatpush1.msra.mxu0 0.0
    %1731 = vmatprep.subr.mxu0 0.0
    %1732 = vmatpush1.msra.mxu0 0.0
    %1733 = vmatprep.subr.mxu0 0.0
    %1734 = vmatpush1.msra.mxu0 0.0
    %1735 = vmatprep.subr.mxu0 0.0
    %1736 = vmatpush1.msra.mxu0 0.0
    %1737 = vmatprep.subr.mxu0 0.0
    %1738 = vmatpush1.msra.mxu0 0.0
    %1739 = vmatprep.subr.mxu0 0.0
    %1740 = vmatpush1.msra.mxu0 0.0
    %1741 = vmatprep.subr.mxu0 0.0
    %1742 = vmatpush1.msra.mxu0 0.0
    %1743 = vmatprep.subr.mxu0 0.0
    %1744 = vmatpush1.msra.mxu0 0.0
    %1745 = vmatprep.subr.mxu0 0.0
    %1746 = vmatpush1.msra.mxu0 0.0
    %1747 = vmatprep.subr.mxu0 0.0
    %1748 = vmatpush1.msra.mxu0 0.0
    %1749 = vmatprep.subr.mxu0 0.0
    %1750 = vmatpush1.msra.mxu0 0.0
    %1751 = vmatprep.subr.mxu0 0.0
    %1752 = vmatpush1.msra.mxu0 0.0
    %1753 = vmatprep.mubr.f32.mxu0 0.0
    %1754 = vmatmul.mubr.f32.gmra.mrb[0].mxu0 %v1687
    %v1755 = vpop.f32.mrb[0].mxu0
    %v1756 = vadd.f32 %v1679, %v1755
    %v1757 = vpop.f32.mrb[0].mxu0
    %v1758 = vadd.f32 %v1683, %v1757
    %1759 = vdwg.mxu0
    %v1760 = vadd.f32 %v1654, %v1756
    %v1761 = vxor.u32 %v1760, 2147483648
    %v1762 = vmul.f32 %v1761, 1.442695
    %v1763 = vpow.pop %v1762
    %v1764 = vadd.f32 %v1763, 1.0
    %v1765 = vrcp.pop %v1764
    %v1766 = vmul.f32 1.0, %v1765
    %v1767 = vmul.f32 %v1766, %v1758
    %v1768 = vadd.f32 %v1655, %v1767
    %v1769 = vtanh.pop %v1768
    %v1770 = vsub.f32 1.0, %v1766
    %1772 = vrot.lane.b32.xlu0 %v1769, 64
    %v1773 = vpop.permute.xlu0 %1772
    %v1775 = vmul.f32 %v1770, %v1773
    %1776 = vrot.lane.b32.xlu0 %v1652, 64
    %v1777 = vpop.permute.xlu0 %1776
    %v1779 = vmul.f32 %v1766, %v1777
    %v1780 = vadd.f32 %v1775, %v1779
    %1782 = vrot.lane.b32.xlu0 %v1780, 64
    %v1783 = vpop.permute.xlu0 %1782
    %v1785 = vsel %vm1657, %v1783, %v1652
    %v1786 = vsel %vm1657, %v1783, 0.0
    %1787 = vst.msk [vmem:[%s480] sm:$0xff] %vm194, %v1786
    %v1788 = vld [vmem:[%s484] sm:$0xff]
    %v1789 = vld [vmem:[%s484 + $0x8] sm:$0xff]
    %v1790 = vld [vmem:[%s487] sm:$0xff]
    %vm1791 = vcmp.ne.f32.partialorder %v1790, 0.0
    %v1792 = vld [vmem:[%s1529] sm:$0xff]
    %v1793 = vld [vmem:[%s1529 + $0x8] sm:$0xff]
    %v1794 = vld [vmem:[%s1529 + $0x10] sm:$0xff]
    %v1795 = vld [vmem:[%s1529 + $0x18] sm:$0xff]
    %v1796 = vld [vmem:[%s1529 + $0x20] sm:$0xff]
    %v1797 = vld [vmem:[%s1529 + $0x28] sm:$0xff]
    %v1798 = vld [vmem:[%s1529 + $0x30] sm:$0xff]
    %v1799 = vld [vmem:[%s1529 + $0x38] sm:$0xff]
    %v1800 = vld [vmem:[%s1529 + $0x40] sm:$0xff]
    %v1801 = vld [vmem:[%s1529 + $0x48] sm:$0xff]
    %v1802 = vld [vmem:[%s1529 + $0x50] sm:$0xff]
    %v1803 = vld [vmem:[%s1529 + $0x58] sm:$0xff]
    %v1804 = vld [vmem:[%s1529 + $0x60] sm:$0xff]
    %v1805 = vld [vmem:[%s1529 + $0x68] sm:$0xff]
    %v1806 = vld [vmem:[%s1529 + $0x70] sm:$0xff]
    %v1807 = vld [vmem:[%s1529 + $0x78] sm:$0xff]
    %v1808 = vld [vmem:[%s1546] sm:$0x3]
    %v1810 = vlaneseq
    %v1811 = vshrl.u32 %v1810, 7
    %v1812 = vsub.s32 0, %v1811
    %v1813 = vrot.slane %v1808, %v1812
    %v1814 = vlaneseq
    %v1815 = vshrl.u32 %v1814, 7
    %v1816 = vsub.s32 1, %v1815
    %v1817 = vrot.slane %v1808, %v1816
    %v1821 = vsel %vm194, %v1785, 0
    %1823 = vmatprep.subr.mxu0 %v1793
    %1824 = vmatpush1.msra.mxu0 %v1792
    %1825 = vmatprep.subr.mxu0 %v1795
    %1826 = vmatpush1.msra.mxu0 %v1794
    %1827 = vmatprep.subr.mxu0 %v1797
    %1828 = vmatpush1.msra.mxu0 %v1796
    %1829 = vmatprep.subr.mxu0 %v1799
    %1830 = vmatpush1.msra.mxu0 %v1798
    %1831 = vmatprep.subr.mxu0 %v1801
    %1832 = vmatpush1.msra.mxu0 %v1800
    %1833 = vmatprep.subr.mxu0 %v1803
    %1834 = vmatpush1.msra.mxu0 %v1802
    %1835 = vmatprep.subr.mxu0 %v1805
    %1836 = vmatpush1.msra.mxu0 %v1804
    %1837 = vmatprep.subr.mxu0 %v1807
    %1838 = vmatpush1.msra.mxu0 %v1806
    %1839 = vmatprep.subr.mxu0 0.0
    %1840 = vmatpush1.msra.mxu0 0.0
    %1841 = vmatprep.subr.mxu0 0.0
    %1842 = vmatpush1.msra.mxu0 0.0
    %1843 = vmatprep.subr.mxu0 0.0
    %1844 = vmatpush1.msra.mxu0 0.0
    %1845 = vmatprep.subr.mxu0 0.0
    %1846 = vmatpush1.msra.mxu0 0.0
    %1847 = vmatprep.subr.mxu0 0.0
    %1848 = vmatpush1.msra.mxu0 0.0
    %1849 = vmatprep.subr.mxu0 0.0
    %1850 = vmatpush1.msra.mxu0 0.0
    %1851 = vmatprep.subr.mxu0 0.0
    %1852 = vmatpush1.msra.mxu0 0.0
    %1853 = vmatprep.subr.mxu0 0.0
    %1854 = vmatpush1.msra.mxu0 0.0
    %1855 = vmatprep.subr.mxu0 0.0
    %1856 = vmatpush1.msra.mxu0 0.0
    %1857 = vmatprep.subr.mxu0 0.0
    %1858 = vmatpush1.msra.mxu0 0.0
    %1859 = vmatprep.subr.mxu0 0.0
    %1860 = vmatpush1.msra.mxu0 0.0
    %1861 = vmatprep.subr.mxu0 0.0
    %1862 = vmatpush1.msra.mxu0 0.0
    %1863 = vmatprep.subr.mxu0 0.0
    %1864 = vmatpush1.msra.mxu0 0.0
    %1865 = vmatprep.subr.mxu0 0.0
    %1866 = vmatpush1.msra.mxu0 0.0
    %1867 = vmatprep.subr.mxu0 0.0
    %1868 = vmatpush1.msra.mxu0 0.0
    %1869 = vmatprep.subr.mxu0 0.0
    %1870 = vmatpush1.msra.mxu0 0.0
    %1871 = vmatprep.subr.mxu0 0.0
    %1872 = vmatpush1.msra.mxu0 0.0
    %1873 = vmatprep.subr.mxu0 0.0
    %1874 = vmatpush1.msra.mxu0 0.0
    %1875 = vmatprep.subr.mxu0 0.0
    %1876 = vmatpush1.msra.mxu0 0.0
    %1877 = vmatprep.subr.mxu0 0.0
    %1878 = vmatpush1.msra.mxu0 0.0
    %1879 = vmatprep.subr.mxu0 0.0
    %1880 = vmatpush1.msra.mxu0 0.0
    %1881 = vmatprep.subr.mxu0 0.0
    %1882 = vmatpush1.msra.mxu0 0.0
    %1883 = vmatprep.subr.mxu0 0.0
    %1884 = vmatpush1.msra.mxu0 0.0
    %1885 = vmatprep.subr.mxu0 0.0
    %1886 = vmatpush1.msra.mxu0 0.0
    %1887 = vmatprep.mubr.f32.mxu0 0.0
    %1888 = vmatmul.mubr.f32.gmra.mrb[0].mxu0 %v1821
    %v1889 = vpop.f32.mrb[0].mxu0
    %v1890 = vadd.f32 %v1813, %v1889
    %v1891 = vpop.f32.mrb[0].mxu0
    %v1892 = vadd.f32 %v1817, %v1891
    %1893 = vdwg.mxu0
    %v1894 = vadd.f32 %v1788, %v1890
    %v1895 = vxor.u32 %v1894, 2147483648
    %v1896 = vmul.f32 %v1895, 1.442695
    %v1897 = vpow.pop %v1896
    %v1898 = vadd.f32 %v1897, 1.0
    %v1899 = vrcp.pop %v1898
    %v1900 = vmul.f32 1.0, %v1899
    %v1901 = vmul.f32 %v1900, %v1892
    %v1902 = vadd.f32 %v1789, %v1901
    %v1903 = vtanh.pop %v1902
    %v1904 = vsub.f32 1.0, %v1900
    %1906 = vrot.lane.b32.xlu0 %v1903, 64
    %v1907 = vpop.permute.xlu0 %1906
    %v1909 = vmul.f32 %v1904, %v1907
    %1910 = vrot.lane.b32.xlu0 %v1785, 64
    %v1911 = vpop.permute.xlu0 %1910
    %v1913 = vmul.f32 %v1900, %v1911
    %v1914 = vadd.f32 %v1909, %v1913
    %1916 = vrot.lane.b32.xlu0 %v1914, 64
    %v1917 = vpop.permute.xlu0 %1916
    %v1919 = vsel %vm1791, %v1917, %v1785
    %v1920 = vsel %vm1791, %v1917, 0.0
    %1921 = vst.msk [vmem:[%s619] sm:$0xff] %vm194, %v1920
    %v1922 = vld [vmem:[%s623] sm:$0xff]
    %v1923 = vld [vmem:[%s623 + $0x8] sm:$0xff]
    %v1924 = vld [vmem:[%s626] sm:$0xff]
    %vm1925 = vcmp.ne.f32.partialorder %v1924, 0.0
    %v1926 = vld [vmem:[%s1529] sm:$0xff]
    %v1927 = vld [vmem:[%s1529 + $0x8] sm:$0xff]
    %v1928 = vld [vmem:[%s1529 + $0x10] sm:$0xff]
    %v1929 = vld [vmem:[%s1529 + $0x18] sm:$0xff]
    %v1930 = vld [vmem:[%s1529 + $0x20] sm:$0xff]
    %v1931 = vld [vmem:[%s1529 + $0x28] sm:$0xff]
    %v1932 = vld [vmem:[%s1529 + $0x30] sm:$0xff]
    %v1933 = vld [vmem:[%s1529 + $0x38] sm:$0xff]
    %v1934 = vld [vmem:[%s1529 + $0x40] sm:$0xff]
    %v1935 = vld [vmem:[%s1529 + $0x48] sm:$0xff]
    %v1936 = vld [vmem:[%s1529 + $0x50] sm:$0xff]
    %v1937 = vld [vmem:[%s1529 + $0x58] sm:$0xff]
    %v1938 = vld [vmem:[%s1529 + $0x60] sm:$0xff]
    %v1939 = vld [vmem:[%s1529 + $0x68] sm:$0xff]
    %v1940 = vld [vmem:[%s1529 + $0x70] sm:$0xff]
    %v1941 = vld [vmem:[%s1529 + $0x78] sm:$0xff]
    %v1942 = vld [vmem:[%s1546] sm:$0x3]
    %v1944 = vlaneseq
    %v1945 = vshrl.u32 %v1944, 7
    %v1946 = vsub.s32 0, %v1945
    %v1947 = vrot.slane %v1942, %v1946
    %v1948 = vlaneseq
    %v1949 = vshrl.u32 %v1948, 7
    %v1950 = vsub.s32 1, %v1949
    %v1951 = vrot.slane %v1942, %v1950
    %v1955 = vsel %vm194, %v1919, 0
    %1957 = vmatprep.subr.mxu0 %v1927
    %1958 = vmatpush1.msra.mxu0 %v1926
    %1959 = vmatprep.subr.mxu0 %v1929
    %1960 = vmatpush1.msra.mxu0 %v1928
    %1961 = vmatprep.subr.mxu0 %v1931
    %1962 = vmatpush1.msra.mxu0 %v1930
    %1963 = vmatprep.subr.mxu0 %v1933
    %1964 = vmatpush1.msra.mxu0 %v1932
    %1965 = vmatprep.subr.mxu0 %v1935
    %1966 = vmatpush1.msra.mxu0 %v1934
    %1967 = vmatprep.subr.mxu0 %v1937
    %1968 = vmatpush1.msra.mxu0 %v1936
    %1969 = vmatprep.subr.mxu0 %v1939
    %1970 = vmatpush1.msra.mxu0 %v1938
    %1971 = vmatprep.subr.mxu0 %v1941
    %1972 = vmatpush1.msra.mxu0 %v1940
    %1973 = vmatprep.subr.mxu0 0.0
    %1974 = vmatpush1.msra.mxu0 0.0
    %1975 = vmatprep.subr.mxu0 0.0
    %1976 = vmatpush1.msra.mxu0 0.0
    %1977 = vmatprep.subr.mxu0 0.0
    %1978 = vmatpush1.msra.mxu0 0.0
    %1979 = vmatprep.subr.mxu0 0.0
    %1980 = vmatpush1.msra.mxu0 0.0
    %1981 = vmatprep.subr.mxu0 0.0
    %1982 = vmatpush1.msra.mxu0 0.0
    %1983 = vmatprep.subr.mxu0 0.0
    %1984 = vmatpush1.msra.mxu0 0.0
    %1985 = vmatprep.subr.mxu0 0.0
    %1986 = vmatpush1.msra.mxu0 0.0
    %1987 = vmatprep.subr.mxu0 0.0
    %1988 = vmatpush1.msra.mxu0 0.0
    %1989 = vmatprep.subr.mxu0 0.0
    %1990 = vmatpush1.msra.mxu0 0.0
    %1991 = vmatprep.subr.mxu0 0.0
    %1992 = vmatpush1.msra.mxu0 0.0
    %1993 = vmatprep.subr.mxu0 0.0
    %1994 = vmatpush1.msra.mxu0 0.0
    %1995 = vmatprep.subr.mxu0 0.0
    %1996 = vmatpush1.msra.mxu0 0.0
    %1997 = vmatprep.subr.mxu0 0.0
    %1998 = vmatpush1.msra.mxu0 0.0
    %1999 = vmatprep.subr.mxu0 0.0
    %2000 = vmatpush1.msra.mxu0 0.0
    %2001 = vmatprep.subr.mxu0 0.0
    %2002 = vmatpush1.msra.mxu0 0.0
    %2003 = vmatprep.subr.mxu0 0.0
    %2004 = vmatpush1.msra.mxu0 0.0
    %2005 = vmatprep.subr.mxu0 0.0
    %2006 = vmatpush1.msra.mxu0 0.0
    %2007 = vmatprep.subr.mxu0 0.0
    %2008 = vmatpush1.msra.mxu0 0.0
    %2009 = vmatprep.subr.mxu0 0.0
    %2010 = vmatpush1.msra.mxu0 0.0
    %2011 = vmatprep.subr.mxu0 0.0
    %2012 = vmatpush1.msra.mxu0 0.0
    %2013 = vmatprep.subr.mxu0 0.0
    %2014 = vmatpush1.msra.mxu0 0.0
    %2015 = vmatprep.subr.mxu0 0.0
    %2016 = vmatpush1.msra.mxu0 0.0
    %2017 = vmatprep.subr.mxu0 0.0
    %2018 = vmatpush1.msra.mxu0 0.0
    %2019 = vmatprep.subr.mxu0 0.0
    %2020 = vmatpush1.msra.mxu0 0.0
    %2021 = vmatprep.mubr.f32.mxu0 0.0
    %2022 = vmatmul.mubr.f32.gmra.mrb[0].mxu0 %v1955
    %v2023 = vpop.f32.mrb[0].mxu0
    %v2024 = vadd.f32 %v1947, %v2023
    %v2025 = vpop.f32.mrb[0].mxu0
    %v2026 = vadd.f32 %v1951, %v2025
    %2027 = vdwg.mxu0
    %v2028 = vadd.f32 %v1922, %v2024
    %v2029 = vxor.u32 %v2028, 2147483648
    %v2030 = vmul.f32 %v2029, 1.442695
    %v2031 = vpow.pop %v2030
    %v2032 = vadd.f32 %v2031, 1.0
    %v2033 = vrcp.pop %v2032
    %v2034 = vmul.f32 1.0, %v2033
    %v2035 = vmul.f32 %v2034, %v2026
    %v2036 = vadd.f32 %v1923, %v2035
    %v2037 = vtanh.pop %v2036
    %v2038 = vsub.f32 1.0, %v2034
    %2040 = vrot.lane.b32.xlu0 %v2037, 64
    %v2041 = vpop.permute.xlu0 %2040
    %v2043 = vmul.f32 %v2038, %v2041
    %2044 = vrot.lane.b32.xlu0 %v1919, 64
    %v2045 = vpop.permute.xlu0 %2044
    %v2047 = vmul.f32 %v2034, %v2045
    %v2048 = vadd.f32 %v2043, %v2047
    %2050 = vrot.lane.b32.xlu0 %v2048, 64
    %v2051 = vpop.permute.xlu0 %2050
    %v2053 = vsel %vm1925, %v2051, %v1919
    %v2054 = vsel %vm1925, %v2051, 0.0
    %2055 = vst.msk [vmem:[%s758] sm:$0xff] %vm194, %v2054
    %v2056 = vld [vmem:[%s762] sm:$0xff]
    %v2057 = vld [vmem:[%s762 + $0x8] sm:$0xff]
    %v2058 = vld [vmem:[%s765] sm:$0xff]
    %vm2059 = vcmp.ne.f32.partialorder %v2058, 0.0
    %v2060 = vld [vmem:[%s1529] sm:$0xff]
    %v2061 = vld [vmem:[%s1529 + $0x8] sm:$0xff]
    %v2062 = vld [vmem:[%s1529 + $0x10] sm:$0xff]
    %v2063 = vld [vmem:[%s1529 + $0x18] sm:$0xff]
    %v2064 = vld [vmem:[%s1529 + $0x20] sm:$0xff]
    %v2065 = vld [vmem:[%s1529 + $0x28] sm:$0xff]
    %v2066 = vld [vmem:[%s1529 + $0x30] sm:$0xff]
    %v2067 = vld [vmem:[%s1529 + $0x38] sm:$0xff]
    %v2068 = vld [vmem:[%s1529 + $0x40] sm:$0xff]
    %v2069 = vld [vmem:[%s1529 + $0x48] sm:$0xff]
    %v2070 = vld [vmem:[%s1529 + $0x50] sm:$0xff]
    %v2071 = vld [vmem:[%s1529 + $0x58] sm:$0xff]
    %v2072 = vld [vmem:[%s1529 + $0x60] sm:$0xff]
    %v2073 = vld [vmem:[%s1529 + $0x68] sm:$0xff]
    %v2074 = vld [vmem:[%s1529 + $0x70] sm:$0xff]
    %v2075 = vld [vmem:[%s1529 + $0x78] sm:$0xff]
    %v2076 = vld [vmem:[%s1546] sm:$0x3]
    %v2078 = vlaneseq
    %v2079 = vshrl.u32 %v2078, 7
    %v2080 = vsub.s32 0, %v2079
    %v2081 = vrot.slane %v2076, %v2080
    %v2082 = vlaneseq
    %v2083 = vshrl.u32 %v2082, 7
    %v2084 = vsub.s32 1, %v2083
    %v2085 = vrot.slane %v2076, %v2084
    %v2089 = vsel %vm194, %v2053, 0
    %2091 = vmatprep.subr.mxu0 %v2061
    %2092 = vmatpush1.msra.mxu0 %v2060
    %2093 = vmatprep.subr.mxu0 %v2063
    %2094 = vmatpush1.msra.mxu0 %v2062
    %2095 = vmatprep.subr.mxu0 %v2065
    %2096 = vmatpush1.msra.mxu0 %v2064
    %2097 = vmatprep.subr.mxu0 %v2067
    %2098 = vmatpush1.msra.mxu0 %v2066
    %2099 = vmatprep.subr.mxu0 %v2069
    %2100 = vmatpush1.msra.mxu0 %v2068
    %2101 = vmatprep.subr.mxu0 %v2071
    %2102 = vmatpush1.msra.mxu0 %v2070
    %2103 = vmatprep.subr.mxu0 %v2073
    %2104 = vmatpush1.msra.mxu0 %v2072
    %2105 = vmatprep.subr.mxu0 %v2075
    %2106 = vmatpush1.msra.mxu0 %v2074
    %2107 = vmatprep.subr.mxu0 0.0
    %2108 = vmatpush1.msra.mxu0 0.0
    %2109 = vmatprep.subr.mxu0 0.0
    %2110 = vmatpush1.msra.mxu0 0.0
    %2111 = vmatprep.subr.mxu0 0.0
    %2112 = vmatpush1.msra.mxu0 0.0
    %2113 = vmatprep.subr.mxu0 0.0
    %2114 = vmatpush1.msra.mxu0 0.0
    %2115 = vmatprep.subr.mxu0 0.0
    %2116 = vmatpush1.msra.mxu0 0.0
    %2117 = vmatprep.subr.mxu0 0.0
    %2118 = vmatpush1.msra.mxu0 0.0
    %2119 = vmatprep.subr.mxu0 0.0
    %2120 = vmatpush1.msra.mxu0 0.0
    %2121 = vmatprep.subr.mxu0 0.0
    %2122 = vmatpush1.msra.mxu0 0.0
    %2123 = vmatprep.subr.mxu0 0.0
    %2124 = vmatpush1.msra.mxu0 0.0
    %2125 = vmatprep.subr.mxu0 0.0
    %2126 = vmatpush1.msra.mxu0 0.0
    %2127 = vmatprep.subr.mxu0 0.0
    %2128 = vmatpush1.msra.mxu0 0.0
    %2129 = vmatprep.subr.mxu0 0.0
    %2130 = vmatpush1.msra.mxu0 0.0
    %2131 = vmatprep.subr.mxu0 0.0
    %2132 = vmatpush1.msra.mxu0 0.0
    %2133 = vmatprep.subr.mxu0 0.0
    %2134 = vmatpush1.msra.mxu0 0.0
    %2135 = vmatprep.subr.mxu0 0.0
    %2136 = vmatpush1.msra.mxu0 0.0
    %2137 = vmatprep.subr.mxu0 0.0
    %2138 = vmatpush1.msra.mxu0 0.0
    %2139 = vmatprep.subr.mxu0 0.0
    %2140 = vmatpush1.msra.mxu0 0.0
    %2141 = vmatprep.subr.mxu0 0.0
    %2142 = vmatpush1.msra.mxu0 0.0
    %2143 = vmatprep.subr.mxu0 0.0
    %2144 = vmatpush1.msra.mxu0 0.0
    %2145 = vmatprep.subr.mxu0 0.0
    %2146 = vmatpush1.msra.mxu0 0.0
    %2147 = vmatprep.subr.mxu0 0.0
    %2148 = vmatpush1.msra.mxu0 0.0
    %2149 = vmatprep.subr.mxu0 0.0
    %2150 = vmatpush1.msra.mxu0 0.0
    %2151 = vmatprep.subr.mxu0 0.0
    %2152 = vmatpush1.msra.mxu0 0.0
    %2153 = vmatprep.subr.mxu0 0.0
    %2154 = vmatpush1.msra.mxu0 0.0
    %2155 = vmatprep.mubr.f32.mxu0 0.0
    %2156 = vmatmul.mubr.f32.gmra.mrb[0].mxu0 %v2089
    %v2157 = vpop.f32.mrb[0].mxu0
    %v2158 = vadd.f32 %v2081, %v2157
    %v2159 = vpop.f32.mrb[0].mxu0
    %v2160 = vadd.f32 %v2085, %v2159
    %2161 = vdwg.mxu0
    %v2162 = vadd.f32 %v2056, %v2158
    %v2163 = vxor.u32 %v2162, 2147483648
    %v2164 = vmul.f32 %v2163, 1.442695
    %v2165 = vpow.pop %v2164
    %v2166 = vadd.f32 %v2165, 1.0
    %v2167 = vrcp.pop %v2166
    %v2168 = vmul.f32 1.0, %v2167
    %v2169 = vmul.f32 %v2168, %v2160
    %v2170 = vadd.f32 %v2057, %v2169
    %v2171 = vtanh.pop %v2170
    %v2172 = vsub.f32 1.0, %v2168
    %2174 = vrot.lane.b32.xlu0 %v2171, 64
    %v2175 = vpop.permute.xlu0 %2174
    %v2177 = vmul.f32 %v2172, %v2175
    %2178 = vrot.lane.b32.xlu0 %v2053, 64
    %v2179 = vpop.permute.xlu0 %2178
    %v2181 = vmul.f32 %v2168, %v2179
    %v2182 = vadd.f32 %v2177, %v2181
    %2184 = vrot.lane.b32.xlu0 %v2182, 64
    %v2185 = vpop.permute.xlu0 %2184
    %v2187 = vsel %vm2059, %v2185, %v2053
    %v2188 = vsel %vm2059, %v2185, 0.0
    %2189 = vst.msk [vmem:[%s897] sm:$0xff] %vm194, %v2188
    %v2190 = vld [vmem:[%s901] sm:$0xff]
    %v2191 = vld [vmem:[%s901 + $0x8] sm:$0xff]
    %v2192 = vld [vmem:[%s904] sm:$0xff]
    %vm2193 = vcmp.ne.f32.partialorder %v2192, 0.0
    %v2194 = vld [vmem:[%s1529] sm:$0xff]
    %v2195 = vld [vmem:[%s1529 + $0x8] sm:$0xff]
    %v2196 = vld [vmem:[%s1529 + $0x10] sm:$0xff]
    %v2197 = vld [vmem:[%s1529 + $0x18] sm:$0xff]
    %v2198 = vld [vmem:[%s1529 + $0x20] sm:$0xff]
    %v2199 = vld [vmem:[%s1529 + $0x28] sm:$0xff]
    %v2200 = vld [vmem:[%s1529 + $0x30] sm:$0xff]
    %v2201 = vld [vmem:[%s1529 + $0x38] sm:$0xff]
    %v2202 = vld [vmem:[%s1529 + $0x40] sm:$0xff]
    %v2203 = vld [vmem:[%s1529 + $0x48] sm:$0xff]
    %v2204 = vld [vmem:[%s1529 + $0x50] sm:$0xff]
    %v2205 = vld [vmem:[%s1529 + $0x58] sm:$0xff]
    %v2206 = vld [vmem:[%s1529 + $0x60] sm:$0xff]
    %v2207 = vld [vmem:[%s1529 + $0x68] sm:$0xff]
    %v2208 = vld [vmem:[%s1529 + $0x70] sm:$0xff]
    %v2209 = vld [vmem:[%s1529 + $0x78] sm:$0xff]
    %v2210 = vld [vmem:[%s1546] sm:$0x3]
    %v2212 = vlaneseq
    %v2213 = vshrl.u32 %v2212, 7
    %v2214 = vsub.s32 0, %v2213
    %v2215 = vrot.slane %v2210, %v2214
    %v2216 = vlaneseq
    %v2217 = vshrl.u32 %v2216, 7
    %v2218 = vsub.s32 1, %v2217
    %v2219 = vrot.slane %v2210, %v2218
    %v2223 = vsel %vm194, %v2187, 0
    %2225 = vmatprep.subr.mxu0 %v2195
    %2226 = vmatpush1.msra.mxu0 %v2194
    %2227 = vmatprep.subr.mxu0 %v2197
    %2228 = vmatpush1.msra.mxu0 %v2196
    %2229 = vmatprep.subr.mxu0 %v2199
    %2230 = vmatpush1.msra.mxu0 %v2198
    %2231 = vmatprep.subr.mxu0 %v2201
    %2232 = vmatpush1.msra.mxu0 %v2200
    %2233 = vmatprep.subr.mxu0 %v2203
    %2234 = vmatpush1.msra.mxu0 %v2202
    %2235 = vmatprep.subr.mxu0 %v2205
    %2236 = vmatpush1.msra.mxu0 %v2204
    %2237 = vmatprep.subr.mxu0 %v2207
    %2238 = vmatpush1.msra.mxu0 %v2206
    %2239 = vmatprep.subr.mxu0 %v2209
    %2240 = vmatpush1.msra.mxu0 %v2208
    %2241 = vmatprep.subr.mxu0 0.0
    %2242 = vmatpush1.msra.mxu0 0.0
    %2243 = vmatprep.subr.mxu0 0.0
    %2244 = vmatpush1.msra.mxu0 0.0
    %2245 = vmatprep.subr.mxu0 0.0
    %2246 = vmatpush1.msra.mxu0 0.0
    %2247 = vmatprep.subr.mxu0 0.0
    %2248 = vmatpush1.msra.mxu0 0.0
    %2249 = vmatprep.subr.mxu0 0.0
    %2250 = vmatpush1.msra.mxu0 0.0
    %2251 = vmatprep.subr.mxu0 0.0
    %2252 = vmatpush1.msra.mxu0 0.0
    %2253 = vmatprep.subr.mxu0 0.0
    %2254 = vmatpush1.msra.mxu0 0.0
    %2255 = vmatprep.subr.mxu0 0.0
    %2256 = vmatpush1.msra.mxu0 0.0
    %2257 = vmatprep.subr.mxu0 0.0
    %2258 = vmatpush1.msra.mxu0 0.0
    %2259 = vmatprep.subr.mxu0 0.0
    %2260 = vmatpush1.msra.mxu0 0.0
    %2261 = vmatprep.subr.mxu0 0.0
    %2262 = vmatpush1.msra.mxu0 0.0
    %2263 = vmatprep.subr.mxu0 0.0
    %2264 = vmatpush1.msra.mxu0 0.0
    %2265 = vmatprep.subr.mxu0 0.0
    %2266 = vmatpush1.msra.mxu0 0.0
    %2267 = vmatprep.subr.mxu0 0.0
    %2268 = vmatpush1.msra.mxu0 0.0
    %2269 = vmatprep.subr.mxu0 0.0
    %2270 = vmatpush1.msra.mxu0 0.0
    %2271 = vmatprep.subr.mxu0 0.0
    %2272 = vmatpush1.msra.mxu0 0.0
    %2273 = vmatprep.subr.mxu0 0.0
    %2274 = vmatpush1.msra.mxu0 0.0
    %2275 = vmatprep.subr.mxu0 0.0
    %2276 = vmatpush1.msra.mxu0 0.0
    %2277 = vmatprep.subr.mxu0 0.0
    %2278 = vmatpush1.msra.mxu0 0.0
    %2279 = vmatprep.subr.mxu0 0.0
    %2280 = vmatpush1.msra.mxu0 0.0
    %2281 = vmatprep.subr.mxu0 0.0
    %2282 = vmatpush1.msra.mxu0 0.0
    %2283 = vmatprep.subr.mxu0 0.0
    %2284 = vmatpush1.msra.mxu0 0.0
    %2285 = vmatprep.subr.mxu0 0.0
    %2286 = vmatpush1.msra.mxu0 0.0
    %2287 = vmatprep.subr.mxu0 0.0
    %2288 = vmatpush1.msra.mxu0 0.0
    %2289 = vmatprep.mubr.f32.mxu0 0.0
    %2290 = vmatmul.mubr.f32.gmra.mrb[0].mxu0 %v2223
    %v2291 = vpop.f32.mrb[0].mxu0
    %v2292 = vadd.f32 %v2215, %v2291
    %v2293 = vpop.f32.mrb[0].mxu0
    %v2294 = vadd.f32 %v2219, %v2293
    %2295 = vdwg.mxu0
    %v2296 = vadd.f32 %v2190, %v2292
    %v2297 = vxor.u32 %v2296, 2147483648
    %v2298 = vmul.f32 %v2297, 1.442695
    %v2299 = vpow.pop %v2298
    %v2300 = vadd.f32 %v2299, 1.0
    %v2301 = vrcp.pop %v2300
    %v2302 = vmul.f32 1.0, %v2301
    %v2303 = vmul.f32 %v2302, %v2294
    %v2304 = vadd.f32 %v2191, %v2303
    %v2305 = vtanh.pop %v2304
    %v2306 = vsub.f32 1.0, %v2302
    %2308 = vrot.lane.b32.xlu0 %v2305, 64
    %v2309 = vpop.permute.xlu0 %2308
    %v2311 = vmul.f32 %v2306, %v2309
    %2312 = vrot.lane.b32.xlu0 %v2187, 64
    %v2313 = vpop.permute.xlu0 %2312
    %v2315 = vmul.f32 %v2302, %v2313
    %v2316 = vadd.f32 %v2311, %v2315
    %2318 = vrot.lane.b32.xlu0 %v2316, 64
    %v2319 = vpop.permute.xlu0 %2318
    %v2321 = vsel %vm2193, %v2319, %v2187
    %v2322 = vsel %vm2193, %v2319, 0.0
    %2323 = vst.msk [vmem:[%s1036] sm:$0xff] %vm194, %v2322
    %v2324 = vld [vmem:[%s1040] sm:$0xff]
    %v2325 = vld [vmem:[%s1040 + $0x8] sm:$0xff]
    %v2326 = vld [vmem:[%s1043] sm:$0xff]
    %vm2327 = vcmp.ne.f32.partialorder %v2326, 0.0
    %v2328 = vld [vmem:[%s1529] sm:$0xff]
    %v2329 = vld [vmem:[%s1529 + $0x8] sm:$0xff]
    %v2330 = vld [vmem:[%s1529 + $0x10] sm:$0xff]
    %v2331 = vld [vmem:[%s1529 + $0x18] sm:$0xff]
    %v2332 = vld [vmem:[%s1529 + $0x20] sm:$0xff]
    %v2333 = vld [vmem:[%s1529 + $0x28] sm:$0xff]
    %v2334 = vld [vmem:[%s1529 + $0x30] sm:$0xff]
    %v2335 = vld [vmem:[%s1529 + $0x38] sm:$0xff]
    %v2336 = vld [vmem:[%s1529 + $0x40] sm:$0xff]
    %v2337 = vld [vmem:[%s1529 + $0x48] sm:$0xff]
    %v2338 = vld [vmem:[%s1529 + $0x50] sm:$0xff]
    %v2339 = vld [vmem:[%s1529 + $0x58] sm:$0xff]
    %v2340 = vld [vmem:[%s1529 + $0x60] sm:$0xff]
    %v2341 = vld [vmem:[%s1529 + $0x68] sm:$0xff]
    %v2342 = vld [vmem:[%s1529 + $0x70] sm:$0xff]
    %v2343 = vld [vmem:[%s1529 + $0x78] sm:$0xff]
    %v2344 = vld [vmem:[%s1546] sm:$0x3]
    %v2346 = vlaneseq
    %v2347 = vshrl.u32 %v2346, 7
    %v2348 = vsub.s32 0, %v2347
    %v2349 = vrot.slane %v2344, %v2348
    %v2350 = vlaneseq
    %v2351 = vshrl.u32 %v2350, 7
    %v2352 = vsub.s32 1, %v2351
    %v2353 = vrot.slane %v2344, %v2352
    %v2357 = vsel %vm194, %v2321, 0
    %2359 = vmatprep.subr.mxu0 %v2329
    %2360 = vmatpush1.msra.mxu0 %v2328
    %2361 = vmatprep.subr.mxu0 %v2331
    %2362 = vmatpush1.msra.mxu0 %v2330
    %2363 = vmatprep.subr.mxu0 %v2333
    %2364 = vmatpush1.msra.mxu0 %v2332
    %2365 = vmatprep.subr.mxu0 %v2335
    %2366 = vmatpush1.msra.mxu0 %v2334
    %2367 = vmatprep.subr.mxu0 %v2337
    %2368 = vmatpush1.msra.mxu0 %v2336
    %2369 = vmatprep.subr.mxu0 %v2339
    %2370 = vmatpush1.msra.mxu0 %v2338
    %2371 = vmatprep.subr.mxu0 %v2341
    %2372 = vmatpush1.msra.mxu0 %v2340
    %2373 = vmatprep.subr.mxu0 %v2343
    %2374 = vmatpush1.msra.mxu0 %v2342
    %2375 = vmatprep.subr.mxu0 0.0
    %2376 = vmatpush1.msra.mxu0 0.0
    %2377 = vmatprep.subr.mxu0 0.0
    %2378 = vmatpush1.msra.mxu0 0.0
    %2379 = vmatprep.subr.mxu0 0.0
    %2380 = vmatpush1.msra.mxu0 0.0
    %2381 = vmatprep.subr.mxu0 0.0
    %2382 = vmatpush1.msra.mxu0 0.0
    %2383 = vmatprep.subr.mxu0 0.0
    %2384 = vmatpush1.msra.mxu0 0.0
    %2385 = vmatprep.subr.mxu0 0.0
    %2386 = vmatpush1.msra.mxu0 0.0
    %2387 = vmatprep.subr.mxu0 0.0
    %2388 = vmatpush1.msra.mxu0 0.0
    %2389 = vmatprep.subr.mxu0 0.0
    %2390 = vmatpush1.msra.mxu0 0.0
    %2391 = vmatprep.subr.mxu0 0.0
    %2392 = vmatpush1.msra.mxu0 0.0
    %2393 = vmatprep.subr.mxu0 0.0
    %2394 = vmatpush1.msra.mxu0 0.0
    %2395 = vmatprep.subr.mxu0 0.0
    %2396 = vmatpush1.msra.mxu0 0.0
    %2397 = vmatprep.subr.mxu0 0.0
    %2398 = vmatpush1.msra.mxu0 0.0
    %2399 = vmatprep.subr.mxu0 0.0
    %2400 = vmatpush1.msra.mxu0 0.0
    %2401 = vmatprep.subr.mxu0 0.0
    %2402 = vmatpush1.msra.mxu0 0.0
    %2403 = vmatprep.subr.mxu0 0.0
    %2404 = vmatpush1.msra.mxu0 0.0
    %2405 = vmatprep.subr.mxu0 0.0
    %2406 = vmatpush1.msra.mxu0 0.0
    %2407 = vmatprep.subr.mxu0 0.0
    %2408 = vmatpush1.msra.mxu0 0.0
    %2409 = vmatprep.subr.mxu0 0.0
    %2410 = vmatpush1.msra.mxu0 0.0
    %2411 = vmatprep.subr.mxu0 0.0
    %2412 = vmatpush1.msra.mxu0 0.0
    %2413 = vmatprep.subr.mxu0 0.0
    %2414 = vmatpush1.msra.mxu0 0.0
    %2415 = vmatprep.subr.mxu0 0.0
    %2416 = vmatpush1.msra.mxu0 0.0
    %2417 = vmatprep.subr.mxu0 0.0
    %2418 = vmatpush1.msra.mxu0 0.0
    %2419 = vmatprep.subr.mxu0 0.0
    %2420 = vmatpush1.msra.mxu0 0.0
    %2421 = vmatprep.subr.mxu0 0.0
    %2422 = vmatpush1.msra.mxu0 0.0
    %2423 = vmatprep.mubr.f32.mxu0 0.0
    %2424 = vmatmul.mubr.f32.gmra.mrb[0].mxu0 %v2357
    %v2425 = vpop.f32.mrb[0].mxu0
    %v2426 = vadd.f32 %v2349, %v2425
    %v2427 = vpop.f32.mrb[0].mxu0
    %v2428 = vadd.f32 %v2353, %v2427
    %2429 = vdwg.mxu0
    %v2430 = vadd.f32 %v2324, %v2426
    %v2431 = vxor.u32 %v2430, 2147483648
    %v2432 = vmul.f32 %v2431, 1.442695
    %v2433 = vpow.pop %v2432
    %v2434 = vadd.f32 %v2433, 1.0
    %v2435 = vrcp.pop %v2434
    %v2436 = vmul.f32 1.0, %v2435
    %v2437 = vmul.f32 %v2436, %v2428
    %v2438 = vadd.f32 %v2325, %v2437
    %v2439 = vtanh.pop %v2438
    %v2440 = vsub.f32 1.0, %v2436
    %2442 = vrot.lane.b32.xlu0 %v2439, 64
    %v2443 = vpop.permute.xlu0 %2442
    %v2445 = vmul.f32 %v2440, %v2443
    %2446 = vrot.lane.b32.xlu0 %v2321, 64
    %v2447 = vpop.permute.xlu0 %2446
    %v2449 = vmul.f32 %v2436, %v2447
    %v2450 = vadd.f32 %v2445, %v2449
    %2452 = vrot.lane.b32.xlu0 %v2450, 64
    %v2453 = vpop.permute.xlu0 %2452
    %v2455 = vsel %vm2327, %v2453, %v2321
    %v2456 = vsel %vm2327, %v2453, 0.0
    %2457 = vst.msk [vmem:[%s1175] sm:$0xff] %vm194, %v2456
    %v2458 = vld [vmem:[%s1179] sm:$0xff]
    %v2459 = vld [vmem:[%s1179 + $0x8] sm:$0xff]
    %v2460 = vld [vmem:[%s1182] sm:$0xff]
    %vm2461 = vcmp.ne.f32.partialorder %v2460, 0.0
    %v2462 = vld [vmem:[%s1529] sm:$0xff]
    %v2463 = vld [vmem:[%s1529 + $0x8] sm:$0xff]
    %v2464 = vld [vmem:[%s1529 + $0x10] sm:$0xff]
    %v2465 = vld [vmem:[%s1529 + $0x18] sm:$0xff]
    %v2466 = vld [vmem:[%s1529 + $0x20] sm:$0xff]
    %v2467 = vld [vmem:[%s1529 + $0x28] sm:$0xff]
    %v2468 = vld [vmem:[%s1529 + $0x30] sm:$0xff]
    %v2469 = vld [vmem:[%s1529 + $0x38] sm:$0xff]
    %v2470 = vld [vmem:[%s1529 + $0x40] sm:$0xff]
    %v2471 = vld [vmem:[%s1529 + $0x48] sm:$0xff]
    %v2472 = vld [vmem:[%s1529 + $0x50] sm:$0xff]
    %v2473 = vld [vmem:[%s1529 + $0x58] sm:$0xff]
    %v2474 = vld [vmem:[%s1529 + $0x60] sm:$0xff]
    %v2475 = vld [vmem:[%s1529 + $0x68] sm:$0xff]
    %v2476 = vld [vmem:[%s1529 + $0x70] sm:$0xff]
    %v2477 = vld [vmem:[%s1529 + $0x78] sm:$0xff]
    %v2478 = vld [vmem:[%s1546] sm:$0x3]
    %v2480 = vlaneseq
    %v2481 = vshrl.u32 %v2480, 7
    %v2482 = vsub.s32 0, %v2481
    %v2483 = vrot.slane %v2478, %v2482
    %v2484 = vlaneseq
    %v2485 = vshrl.u32 %v2484, 7
    %v2486 = vsub.s32 1, %v2485
    %v2487 = vrot.slane %v2478, %v2486
    %v2491 = vsel %vm194, %v2455, 0
    %2493 = vmatprep.subr.mxu0 %v2463
    %2494 = vmatpush1.msra.mxu0 %v2462
    %2495 = vmatprep.subr.mxu0 %v2465
    %2496 = vmatpush1.msra.mxu0 %v2464
    %2497 = vmatprep.subr.mxu0 %v2467
    %2498 = vmatpush1.msra.mxu0 %v2466
    %2499 = vmatprep.subr.mxu0 %v2469
    %2500 = vmatpush1.msra.mxu0 %v2468
    %2501 = vmatprep.subr.mxu0 %v2471
    %2502 = vmatpush1.msra.mxu0 %v2470
    %2503 = vmatprep.subr.mxu0 %v2473
    %2504 = vmatpush1.msra.mxu0 %v2472
    %2505 = vmatprep.subr.mxu0 %v2475
    %2506 = vmatpush1.msra.mxu0 %v2474
    %2507 = vmatprep.subr.mxu0 %v2477
    %2508 = vmatpush1.msra.mxu0 %v2476
    %2509 = vmatprep.subr.mxu0 0.0
    %2510 = vmatpush1.msra.mxu0 0.0
    %2511 = vmatprep.subr.mxu0 0.0
    %2512 = vmatpush1.msra.mxu0 0.0
    %2513 = vmatprep.subr.mxu0 0.0
    %2514 = vmatpush1.msra.mxu0 0.0
    %2515 = vmatprep.subr.mxu0 0.0
    %2516 = vmatpush1.msra.mxu0 0.0
    %2517 = vmatprep.subr.mxu0 0.0
    %2518 = vmatpush1.msra.mxu0 0.0
    %2519 = vmatprep.subr.mxu0 0.0
    %2520 = vmatpush1.msra.mxu0 0.0
    %2521 = vmatprep.subr.mxu0 0.0
    %2522 = vmatpush1.msra.mxu0 0.0
    %2523 = vmatprep.subr.mxu0 0.0
    %2524 = vmatpush1.msra.mxu0 0.0
    %2525 = vmatprep.subr.mxu0 0.0
    %2526 = vmatpush1.msra.mxu0 0.0
    %2527 = vmatprep.subr.mxu0 0.0
    %2528 = vmatpush1.msra.mxu0 0.0
    %2529 = vmatprep.subr.mxu0 0.0
    %2530 = vmatpush1.msra.mxu0 0.0
    %2531 = vmatprep.subr.mxu0 0.0
    %2532 = vmatpush1.msra.mxu0 0.0
    %2533 = vmatprep.subr.mxu0 0.0
    %2534 = vmatpush1.msra.mxu0 0.0
    %2535 = vmatprep.subr.mxu0 0.0
    %2536 = vmatpush1.msra.mxu0 0.0
    %2537 = vmatprep.subr.mxu0 0.0
    %2538 = vmatpush1.msra.mxu0 0.0
    %2539 = vmatprep.subr.mxu0 0.0
    %2540 = vmatpush1.msra.mxu0 0.0
    %2541 = vmatprep.subr.mxu0 0.0
    %2542 = vmatpush1.msra.mxu0 0.0
    %2543 = vmatprep.subr.mxu0 0.0
    %2544 = vmatpush1.msra.mxu0 0.0
    %2545 = vmatprep.subr.mxu0 0.0
    %2546 = vmatpush1.msra.mxu0 0.0
    %2547 = vmatprep.subr.mxu0 0.0
    %2548 = vmatpush1.msra.mxu0 0.0
    %2549 = vmatprep.subr.mxu0 0.0
    %2550 = vmatpush1.msra.mxu0 0.0
    %2551 = vmatprep.subr.mxu0 0.0
    %2552 = vmatpush1.msra.mxu0 0.0
    %2553 = vmatprep.subr.mxu0 0.0
    %2554 = vmatpush1.msra.mxu0 0.0
    %2555 = vmatprep.subr.mxu0 0.0
    %2556 = vmatpush1.msra.mxu0 0.0
    %2557 = vmatprep.mubr.f32.mxu0 0.0
    %2558 = vmatmul.mubr.f32.gmra.mrb[0].mxu0 %v2491
    %v2559 = vpop.f32.mrb[0].mxu0
    %v2560 = vadd.f32 %v2483, %v2559
    %v2561 = vpop.f32.mrb[0].mxu0
    %v2562 = vadd.f32 %v2487, %v2561
    %2563 = vdwg.mxu0
    %v2564 = vadd.f32 %v2458, %v2560
    %v2565 = vxor.u32 %v2564, 2147483648
    %v2566 = vmul.f32 %v2565, 1.442695
    %v2567 = vpow.pop %v2566
    %v2568 = vadd.f32 %v2567, 1.0
    %v2569 = vrcp.pop %v2568
    %v2570 = vmul.f32 1.0, %v2569
    %v2571 = vmul.f32 %v2570, %v2562
    %v2572 = vadd.f32 %v2459, %v2571
    %v2573 = vtanh.pop %v2572
    %v2574 = vsub.f32 1.0, %v2570
    %2576 = vrot.lane.b32.xlu0 %v2573, 64
    %v2577 = vpop.permute.xlu0 %2576
    %v2579 = vmul.f32 %v2574, %v2577
    %2580 = vrot.lane.b32.xlu0 %v2455, 64
    %v2581 = vpop.permute.xlu0 %2580
    %v2583 = vmul.f32 %v2570, %v2581
    %v2584 = vadd.f32 %v2579, %v2583
    %2586 = vrot.lane.b32.xlu0 %v2584, 64
    %v2587 = vpop.permute.xlu0 %2586
    %v2589 = vsel %vm2461, %v2587, %v2455
    %v2590 = vsel %vm2461, %v2587, 0.0
    %2591 = vst.msk [vmem:[%s1314] sm:$0xff] %vm194, %v2590
    %v2592 = vadd.f32 %v1321, %v2589
    %2594 = vrot.lane.b32.xlu0 %v2589, 96
    %v2595 = vpop.permute.xlu0 %2594
    %v2597 = vadd.f32 %v2592, %v2595
    %v2598 = vld [vmem:[#allocation4] sm:$0xff]
    %v2599 = vld [vmem:[#allocation4 + $0x38] sm:$0xff]
    %v2600 = vld [vmem:[#allocation4 + $0x8] sm:$0xff]
    %v2601 = vld [vmem:[#allocation4 + $0x30] sm:$0xff]
    %v2602 = vld [vmem:[#allocation4 + $0x10] sm:$0xff]
    %v2603 = vld [vmem:[#allocation4 + $0x28] sm:$0xff]
    %v2604 = vld [vmem:[#allocation4 + $0x18] sm:$0xff]
    %v2605 = vld [vmem:[#allocation4 + $0x20] sm:$0xff]
    %2607 = vrot.lane.b32.xlu0 %v2600, 64
    %v2608 = vpop.permute.xlu0 %2607
    %2611 = vrot.lane.b32.xlu0 %v2601, 64
    %v2612 = vpop.permute.xlu0 %2611
    %2615 = vrot.lane.b32.xlu0 %v2604, 64
    %v2616 = vpop.permute.xlu0 %2615
    %2619 = vrot.lane.b32.xlu0 %v2605, 64
    %v2620 = vpop.permute.xlu0 %2619
    %2623 = vrot.lane.b32.xlu0 %v2603, 64
    %v2624 = vpop.permute.xlu0 %2623
    %2627 = vrot.lane.b32.xlu0 %v2602, 64
    %v2628 = vpop.permute.xlu0 %2627
    %2631 = vrot.lane.b32.xlu0 %v2599, 64
    %v2632 = vpop.permute.xlu0 %2631
    %2635 = vrot.lane.b32.xlu0 %v2598, 64
    %v2636 = vpop.permute.xlu0 %2635
    %v2638 = vsel %vm55, %v2598, %v2599
    %v2639 = vsel %vm194, %v2638, %v2608
    %vm2640 = vcmask 785408
    %v2641 = vsel %vm2640, %v2639, %v2612
    %v2642 = vsel %vm55, %v2602, %v2603
    %v2643 = vsel %vm194, %v2642, %v2616
    %v2644 = vsel %vm2640, %v2643, %v2620
    %v2645 = vsel %vm55, %v2605, %v2604
    %v2646 = vsel %vm194, %v2645, %v2624
    %v2647 = vsel %vm2640, %v2646, %v2628
    %v2648 = vsel %vm55, %v2601, %v2600
    %v2649 = vsel %vm194, %v2648, %v2632
    %v2650 = vsel %vm2640, %v2649, %v2636
    %2651 = vst [vmem:[#allocation5] sm:$0xff] %v2641
    %2652 = vst [vmem:[#allocation5 + $0x8] sm:$0xff] %v2644
    %2653 = vst [vmem:[#allocation5 + $0x10] sm:$0xff] %v2647
    %2654 = vst [vmem:[#allocation5 + $0x18] sm:$0xff] %v2650
    %2655 = vst.msk [vmem:[#allocation7] sm:$0xff] %vm55, %v2597
    // Predicated region
    $region33: #{tpu_custom_call.1} parent=1 // pred_check
      _
    $region34: #{tpu_custom_call.1} parent=1 // pred_check_branch
      %2657 = sbr.rel (0) target = $region36
    $region35: #{tpu_custom_call.1} parent=1 // pred_region
      %s2659 = ssub.s32 512, 512
      %2660 = vsyncadd [#allocation6], %s2659
      %s2662 = sshll.u32 [#allocation5], 4
      %s2663 = int_to_ptr.vmem [resolvable:$true] %s2662
      %2665 = dma.vmem_to_hbm [thread:$0]  %s2663, 512, %s6, [#allocation6]
    $region36: #{tpu_custom_call.1} parent=1 // pred_fallthru
      _
    // Predicated region
    $region37: #{tpu_custom_call.1} parent=1 // pred_check
      _
    $region38: #{tpu_custom_call.1} parent=1 // pred_check_branch
      %2667 = sbr.rel (0) target = $region40
    $region39: #{tpu_custom_call.1} parent=1 // pred_region
      %s2669 = ssub.s32 128, 128
      %2670 = vsyncadd [#allocation8], %s2669
      %s2672 = sshll.u32 [#allocation7], 4
      %s2673 = int_to_ptr.vmem [resolvable:$true] %s2672
      %2675 = dma.vmem_to_hbm [thread:$0]  %s2673, 128, %s7, [#allocation8]
    $region40: #{tpu_custom_call.1} parent=1 // pred_fallthru
      _
    // Predicated region
    $region41: #{tpu_custom_call.1} parent=1 // pred_check
      _
    $region42: #{tpu_custom_call.1} parent=1 // pred_check_branch
      %2677 = sbr.rel (0) target = $region44
    $region43: #{tpu_custom_call.1} parent=1 // pred_region
      %2678 = dma.done [#allocation6], 512
    $region44: #{tpu_custom_call.1} parent=1 // pred_fallthru
      _
    // Predicated region
    $region45: #{tpu_custom_call.1} parent=1 // pred_check
      _
    $region46: #{tpu_custom_call.1} parent=1 // pred_check_branch
      %2680 = sbr.rel (0) target = $region48
    $region47: #{tpu_custom_call.1} parent=1 // pred_region
      %2681 = dma.done [#allocation8], 128
    $region48: #{tpu_custom_call.1} parent=1 // pred_fallthru
      _
    %2682 = vsyncpa [#allocation6], 1
    %2683 = vsyncpa [#allocation8], 1

</llo_original>
